<compile_context>
chip_gen: v7x
topology: tpu7x:2x2x1
jax: 0.10.0
libtpu: 0.0.40
codegen_flags: <defaults>
</compile_context>

<pallas_src>
import functools

import jax
import jax.numpy as jnp
import numpy as np
from jax import lax
from jax.experimental import pallas as pl
from jax.experimental.pallas import tpu as pltpu


def _round_up(v, m):
    return (v + m - 1) // m * m


def _vmem_budget_bytes():
    """~75% of physical per-core VMEM; conservative 48 MiB if unknown."""
    cap = None
    try:
        cap = getattr(pltpu.get_tpu_info(), "vmem_capacity_bytes", None)
    except Exception:
        cap = None
    if not cap:
        cap = 64 * 1024 * 1024  # v7x per-TC physical VMEM (smallest generation)
    return max(int(cap) * 3 // 4, 32 * 1024 * 1024)


def _pick_row_block(m_rows, va_p, vi_p, vo_p, hp, ftot, vmem_budget):
    """Row-block size: multiple of 8, sized from the VMEM budget, and (when
    there are enough rows) split so the grid has >= 2 steps (v7x megacore)."""
    kp = va_p + vi_p + vo_p
    table_bytes = kp * hp * 4                 # fused table (assume 2x to be safe)
    per_row = (kp * 4                         # f32 one-hot / counts matmul operand
               + va_p * 4                     # int32 atom-count accumulator
               + 2 * hp * 4                   # double-buffered output block
               + 2 * ftot * 4)                # double-buffered index block
    avail = max(vmem_budget - 2 * table_bytes, 4 * 1024 * 1024)
    mb = int(avail // per_row)
    mb = max(8, min(2048, mb))
    mb = (mb // 8) * 8

    m_pad8 = _round_up(m_rows, 8)
    if m_pad8 <= mb:
        # Everything fits in one block; prefer two blocks so both v7x cores work.
        mb = _round_up(pl.cdiv(m_pad8, 2), 8) if m_pad8 > 8 else 8
    return mb


def _graph_node_feature_kernel(idx_ref, table_ref, o_ref, *,
                               n_atom_feats, va_p, vi_p, vo_p):
    # idx_ref  : (Mb, F+2) int32   segment-local indices for this row block
    # table_ref: (Kp, Hp)  float32 fused table, 128-aligned segments, pad rows 0
    # o_ref    : (Mb, Hp)  float32 node features for this row block
    f32 = jnp.float32
    hi = lax.Precision.HIGHEST
    idx = idx_ref[...]
    mb = idx.shape[0]

    # ---- atom features: multi-hot counts restricted to the atom segment ----
    # Non-materialized (1, va_p) iota; int32 accumulation; one f32 convert.
    iota_a = lax.broadcasted_iota(jnp.int32, (1, va_p), 1)
    counts = (idx[:, 0:1] == iota_a).astype(jnp.int32)
    for f in range(1, n_atom_feats):                     # short static loop
        counts = counts + (idx[:, f:f + 1] == iota_a).astype(jnp.int32)
    acc = jnp.dot(counts.astype(f32), table_ref[0:va_p, :],
                  preferred_element_type=f32, precision=hi)

    # ---- in-degree: one-hot only over its own 128-aligned segment ----------
    iota_i = lax.broadcasted_iota(jnp.int32, (1, vi_p), 1)
    oh_in = (idx[:, n_atom_feats:n_atom_feats + 1] == iota_i).astype(f32)
    acc = acc + jnp.dot(oh_in, table_ref[va_p:va_p + vi_p, :],
                        preferred_element_type=f32, precision=hi)

    # ---- out-degree ---------------------------------------------------------
    iota_o = lax.broadcasted_iota(jnp.int32, (1, vo_p), 1)
    oh_out = (idx[:, n_atom_feats + 1:n_atom_feats + 2] == iota_o).astype(f32)
    acc = acc + jnp.dot(oh_out, table_ref[va_p + vi_p:va_p + vi_p + vo_p, :],
                        preferred_element_type=f32, precision=hi)

    o_ref[...] = acc.astype(o_ref.dtype)


def graph_node_feature(x, in_degree, out_degree, atom_w, in_w, out_w, graph_tok):
    G, N, F = x.shape
    V_atom, H = atom_w.shape
    V_in = in_w.shape[0]
    V_out = out_w.shape[0]

    # ---- wrapper-side fusion / padding (cheap XLA ops) ----------------------
    Va_p = _round_up(V_atom, 128)
    Vi_p = _round_up(V_in, 128)
    Vo_p = _round_up(V_out, 128)
    Kp = Va_p + Vi_p + Vo_p
    Hp = _round_up(H, 128)      # real Graphormer H (e.g. 768) needs no padding

    # Fused table: each sub-vocab zero-padded to its own 128-aligned segment.
    table = jnp.zeros((Kp, Hp), jnp.float32)
    table = lax.dynamic_update_slice(table, atom_w.astype(jnp.float32), (0, 0))
    table = lax.dynamic_update_slice(table, in_w.astype(jnp.float32), (Va_p, 0))
    table = lax.dynamic_update_slice(table, out_w.astype(jnp.float32),
                                     (Va_p + Vi_p, 0))

    # Segment-local indices; clamp so out-of-range behaves like jnp.take.
    x_i = jnp.clip(x.astype(jnp.int32), 0, V_atom - 1)
    in_i = jnp.clip(in_degree.astype(jnp.int32), 0, V_in - 1)
    out_i = jnp.clip(out_degree.astype(jnp.int32), 0, V_out - 1)
    idx = jnp.concatenate([x_i, in_i[..., None], out_i[..., None]], axis=-1)
    Ftot = F + 2
    M = G * N
    idx2 = idx.reshape(M, Ftot)

    # ---- blocking -----------------------------------------------------------
    vmem_budget = _vmem_budget_bytes()
    Mb = _pick_row_block(M, Va_p, Vi_p, Vo_p, Hp, Ftot, vmem_budget)
    grid0 = pl.cdiv(M, Mb)
    Mp = grid0 * Mb
    if Mp != M:
        # Padded rows are sliced off after the kernel; their values are unused.
        idx2 = jnp.pad(idx2, ((0, Mp - M), (0, 0)))

    kern = functools.partial(_graph_node_feature_kernel,
                             n_atom_feats=F, va_p=Va_p, vi_p=Vi_p, vo_p=Vo_p)

    def _call(table_spec):
        return pl.pallas_call(
            kern,
            out_shape=jax.ShapeDtypeStruct((Mp, Hp), jnp.float32),
            grid_spec=pltpu.PrefetchScalarGridSpec(
                num_scalar_prefetch=0,
                grid=(grid0,),
                in_specs=[
                    pl.BlockSpec((Mb, Ftot), lambda i: (i, 0)),   # indices
                    table_spec,                                    # fused table
                ],
                out_specs=pl.BlockSpec((Mb, Hp), lambda i: (i, 0)),
            ),
            compiler_params=pltpu.CompilerParams(
                dimension_semantics=("parallel",),
                vmem_limit_bytes=vmem_budget,
            ),
        )(idx2, table)

    # Table block index is constant across the grid -> single-buffer it to
    # halve table VMEM (matters for real Graphormer vocabs inside v7x's 64 MiB).
    try:
        node = _call(pl.BlockSpec((Kp, Hp), lambda i: (0, 0),
                                  pipeline_mode=pl.Buffered(1)))
    except Exception:
        # Fallback: default (double-buffered) pipelining of the constant block.
        node = _call(pl.BlockSpec((Kp, Hp), lambda i: (0, 0)))

    node = node[:M, :H].reshape(G, N, H)

    # Graph-token concat kept outside the kernel (misaligned offset-1 write;
    # keeps kernel stores lane-dense and sublane-aligned).
    gtok = jnp.broadcast_to(graph_tok[None, :, :], (G, 1, H)).astype(node.dtype)
    return jnp.concatenate([gtok, node], axis=1)


def reference(x, in_degree, out_degree, atom_w, in_w, out_w, graph_tok):
    node_feature = jnp.take(atom_w, x, axis=0).sum(axis=-2)          # [G, N, H]
    node_feature = (node_feature
                    + jnp.take(in_w, in_degree, axis=0)
                    + jnp.take(out_w, out_degree, axis=0))
    G = x.shape[0]
    gtok = jnp.broadcast_to(graph_tok[None, :, :], (G, 1, graph_tok.shape[-1]))
    return jnp.concatenate([gtok, node_feature], axis=1)


if __name__ == "__main__":
    # module hyperparameters (num_heads is unused in forward)
    num_heads = 4
    num_atoms = 64
    num_in_degree = 16
    num_out_degree = 16
    hidden_dim = 32

    # data shapes
    G, N, F = 2, 8, 4

    key = jax.random.PRNGKey(0)
    k_x, k_in, k_out, k_aw, k_iw, k_ow, k_gt = jax.random.split(key, 7)

    x = jax.random.randint(k_x, (G, N, F), 0, num_atoms, dtype=jnp.int32)
    in_degree = jax.random.randint(k_in, (G, N), 0, num_in_degree, dtype=jnp.int32)
    out_degree = jax.random.randint(k_out, (G, N), 0, num_out_degree, dtype=jnp.int32)

    # nn.Embedding default init N(0,1); padding_idx=0 rows zeroed
    atom_w = jax.random.normal(k_aw, (num_atoms, hidden_dim), jnp.float32)
    atom_w = atom_w.at[0].set(0.0)
    in_w = jax.random.normal(k_iw, (num_in_degree, hidden_dim), jnp.float32)
    in_w = in_w.at[0].set(0.0)
    out_w = jax.random.normal(k_ow, (num_out_degree, hidden_dim), jnp.float32)
    out_w = out_w.at[0].set(0.0)
    graph_tok = jax.random.normal(k_gt, (1, hidden_dim), jnp.float32)

    out = graph_node_feature(x, in_degree, out_degree,
                             atom_w, in_w, out_w, graph_tok)
    out = jax.block_until_ready(out)

    ref = reference(x, in_degree, out_degree, atom_w, in_w, out_w, graph_tok)
    np.testing.assert_allclose(np.asarray(out), np.asarray(ref),
                               rtol=1e-5, atol=1e-5)

    print("KERNEL_OK")
</pallas_src>

<mosaic_0001>
module attributes {stable_mosaic.version = 11 : i64} {
  func.func @_graph_node_feature_kernel(%arg0: i32, %arg1: memref<8x6xi32, #tpu.memory_space<vmem>>, %arg2: memref<384x128xf32, #tpu.memory_space<vmem>>, %arg3: memref<8x128xf32, #tpu.memory_space<vmem>>) attributes {dimension_semantics = [#tpu.dimension_semantics<parallel>], iteration_bounds = array<i64: 2>, scalar_prefetch = 0 : i64, scratch_operands = 0 : i64, tpu.core_type = #tpu.core_type<tc>, window_params = [{transform_indices = @transform_0, window_bounds = array<i64: 8, 6>}, {pipeline_mode = #tpu.pipeline_mode<synchronous>, transform_indices = @transform_1, window_bounds = array<i64: 384, 128>}, {transform_indices = @transform_2, window_bounds = array<i64: 8, 128>}]} {
    %c0 = arith.constant 0 : index
    %c0_0 = arith.constant 0 : index
    %0 = vector.load %arg1[%c0, %c0_0] : memref<8x6xi32, #tpu.memory_space<vmem>>, vector<8x6xi32>
    %1 = tpu.iota {dimensions = array<i32: 1>} : vector<1x128xi32>
    %2 = vector.extract_strided_slice %0 {offsets = [0, 0], sizes = [8, 1], strides = [1, 1]} : vector<8x6xi32> to vector<8x1xi32>
    %3 = vector.broadcast %2 : vector<8x1xi32> to vector<8x128xi32>
    %4 = vector.broadcast %1 : vector<1x128xi32> to vector<8x128xi32>
    %5 = arith.cmpi eq, %3, %4 : vector<8x128xi32>
    %6 = arith.extui %5 : vector<8x128xi1> to vector<8x128xi32>
    %7 = vector.extract_strided_slice %0 {offsets = [0, 1], sizes = [8, 1], strides = [1, 1]} : vector<8x6xi32> to vector<8x1xi32>
    %8 = vector.broadcast %7 : vector<8x1xi32> to vector<8x128xi32>
    %9 = vector.broadcast %1 : vector<1x128xi32> to vector<8x128xi32>
    %10 = arith.cmpi eq, %8, %9 : vector<8x128xi32>
    %11 = arith.extui %10 : vector<8x128xi1> to vector<8x128xi32>
    %12 = arith.addi %6, %11 : vector<8x128xi32>
    %13 = vector.extract_strided_slice %0 {offsets = [0, 2], sizes = [8, 1], strides = [1, 1]} : vector<8x6xi32> to vector<8x1xi32>
    %14 = vector.broadcast %13 : vector<8x1xi32> to vector<8x128xi32>
    %15 = vector.broadcast %1 : vector<1x128xi32> to vector<8x128xi32>
    %16 = arith.cmpi eq, %14, %15 : vector<8x128xi32>
    %17 = arith.extui %16 : vector<8x128xi1> to vector<8x128xi32>
    %18 = arith.addi %12, %17 : vector<8x128xi32>
    %19 = vector.extract_strided_slice %0 {offsets = [0, 3], sizes = [8, 1], strides = [1, 1]} : vector<8x6xi32> to vector<8x1xi32>
    %20 = vector.broadcast %19 : vector<8x1xi32> to vector<8x128xi32>
    %21 = vector.broadcast %1 : vector<1x128xi32> to vector<8x128xi32>
    %22 = arith.cmpi eq, %20, %21 : vector<8x128xi32>
    %23 = arith.extui %22 : vector<8x128xi1> to vector<8x128xi32>
    %24 = arith.addi %18, %23 : vector<8x128xi32>
    %25 = arith.sitofp %24 : vector<8x128xi32> to vector<8x128xf32>
    %c0_1 = arith.constant 0 : index
    %c0_2 = arith.constant 0 : index
    %26 = vector.load %arg2[%c0_1, %c0_2] : memref<384x128xf32, #tpu.memory_space<vmem>>, vector<128x128xf32>
    %cst = arith.constant dense<0.000000e+00> : vector<8x128xf32>
    %27 = tpu.matmul %25, %26, %cst {dimension_numbers = #tpu.dot_dimension_numbers<[1], [0], [0], [1], [0, 0, 1, 1], [], []>, precision = #tpu.contract_precision<fp32>} : vector<8x128xf32>, vector<128x128xf32>, vector<8x128xf32> -> vector<8x128xf32>
    %28 = tpu.iota {dimensions = array<i32: 1>} : vector<1x128xi32>
    %29 = vector.extract_strided_slice %0 {offsets = [0, 4], sizes = [8, 1], strides = [1, 1]} : vector<8x6xi32> to vector<8x1xi32>
    %30 = vector.broadcast %29 : vector<8x1xi32> to vector<8x128xi32>
    %31 = vector.broadcast %28 : vector<1x128xi32> to vector<8x128xi32>
    %32 = arith.cmpi eq, %30, %31 : vector<8x128xi32>
    %33 = arith.extui %32 : vector<8x128xi1> to vector<8x128xi32>
    %34 = arith.sitofp %33 : vector<8x128xi32> to vector<8x128xf32>
    %c128 = arith.constant 128 : index
    %c0_3 = arith.constant 0 : index
    %35 = vector.load %arg2[%c128, %c0_3] : memref<384x128xf32, #tpu.memory_space<vmem>>, vector<128x128xf32>
    %cst_4 = arith.constant dense<0.000000e+00> : vector<8x128xf32>
    %36 = tpu.matmul %34, %35, %cst_4 {dimension_numbers = #tpu.dot_dimension_numbers<[1], [0], [0], [1], [0, 0, 1, 1], [], []>, precision = #tpu.contract_precision<fp32>} : vector<8x128xf32>, vector<128x128xf32>, vector<8x128xf32> -> vector<8x128xf32>
    %37 = arith.addf %27, %36 : vector<8x128xf32>
    %38 = tpu.iota {dimensions = array<i32: 1>} : vector<1x128xi32>
    %39 = vector.extract_strided_slice %0 {offsets = [0, 5], sizes = [8, 1], strides = [1, 1]} : vector<8x6xi32> to vector<8x1xi32>
    %40 = vector.broadcast %39 : vector<8x1xi32> to vector<8x128xi32>
    %41 = vector.broadcast %38 : vector<1x128xi32> to vector<8x128xi32>
    %42 = arith.cmpi eq, %40, %41 : vector<8x128xi32>
    %43 = arith.extui %42 : vector<8x128xi1> to vector<8x128xi32>
    %44 = arith.sitofp %43 : vector<8x128xi32> to vector<8x128xf32>
    %c256 = arith.constant 256 : index
    %c0_5 = arith.constant 0 : index
    %45 = vector.load %arg2[%c256, %c0_5] : memref<384x128xf32, #tpu.memory_space<vmem>>, vector<128x128xf32>
    %cst_6 = arith.constant dense<0.000000e+00> : vector<8x128xf32>
    %46 = tpu.matmul %44, %45, %cst_6 {dimension_numbers = #tpu.dot_dimension_numbers<[1], [0], [0], [1], [0, 0, 1, 1], [], []>, precision = #tpu.contract_precision<fp32>} : vector<8x128xf32>, vector<128x128xf32>, vector<8x128xf32> -> vector<8x128xf32>
    %47 = arith.addf %37, %46 : vector<8x128xf32>
    %c0_7 = arith.constant 0 : index
    %c0_8 = arith.constant 0 : index
    %48 = vector.load %arg3[%c0_7, %c0_8] : memref<8x128xf32, #tpu.memory_space<vmem>>, vector<8x128xf32>
    tpu.vector_store %arg3[%c0_7, %c0_8], %47 {strides = array<i32>} : memref<8x128xf32, #tpu.memory_space<vmem>>, vector<8x128xf32>,
    return
  }
  func.func @transform_0(%arg0: i32) -> (i32, i32) {
    %c0_i32 = arith.constant 0 : i32
    %c0_i32_0 = arith.constant 0 : i32
    return %arg0, %c0_i32 : i32, i32
  }
  func.func @transform_1(%arg0: i32) -> (i32, i32) {
    %c0_i32 = arith.constant 0 : i32
    %c0_i32_0 = arith.constant 0 : i32
    %c0_i32_1 = arith.constant 0 : i32
    return %c0_i32, %c0_i32_0 : i32, i32
  }
  func.func @transform_2(%arg0: i32) -> (i32, i32) {
    %c0_i32 = arith.constant 0 : i32
    %c0_i32_0 = arith.constant 0 : i32
    return %arg0, %c0_i32 : i32, i32
  }
}

module attributes {stable_mosaic.version = 11 : i64} {
  func.func @_graph_node_feature_kernel(%arg0: i32, %arg1: memref<8x6xi32, #tpu.memory_space<vmem>>, %arg2: memref<384x128xf32, #tpu.memory_space<vmem>>, %arg3: memref<8x128xf32, #tpu.memory_space<vmem>>) attributes {dimension_semantics = [#tpu.dimension_semantics<parallel>], iteration_bounds = array<i64: 2>, scalar_prefetch = 0 : i64, scratch_operands = 0 : i64, tpu.core_type = #tpu.core_type<tc>, window_params = [{transform_indices = @transform_0, window_bounds = array<i64: 8, 6>}, {pipeline_mode = #tpu.pipeline_mode<synchronous>, transform_indices = @transform_1, window_bounds = array<i64: 384, 128>}, {transform_indices = @transform_2, window_bounds = array<i64: 8, 128>}]} {
    %c0 = arith.constant 0 : index
    %c0_0 = arith.constant 0 : index
    %0 = vector.load %arg1[%c0, %c0_0] : memref<8x6xi32, #tpu.memory_space<vmem>>, vector<8x6xi32>
    %1 = tpu.iota {dimensions = array<i32: 1>} : vector<1x128xi32>
    %2 = vector.extract_strided_slice %0 {offsets = [0, 0], sizes = [8, 1], strides = [1, 1]} : vector<8x6xi32> to vector<8x1xi32>
    %3 = vector.broadcast %2 : vector<8x1xi32> to vector<8x128xi32>
    %4 = vector.broadcast %1 : vector<1x128xi32> to vector<8x128xi32>
    %5 = arith.cmpi eq, %3, %4 : vector<8x128xi32>
    %6 = arith.extui %5 : vector<8x128xi1> to vector<8x128xi32>
    %7 = vector.extract_strided_slice %0 {offsets = [0, 1], sizes = [8, 1], strides = [1, 1]} : vector<8x6xi32> to vector<8x1xi32>
    %8 = vector.broadcast %7 : vector<8x1xi32> to vector<8x128xi32>
    %9 = vector.broadcast %1 : vector<1x128xi32> to vector<8x128xi32>
    %10 = arith.cmpi eq, %8, %9 : vector<8x128xi32>
    %11 = arith.extui %10 : vector<8x128xi1> to vector<8x128xi32>
    %12 = arith.addi %6, %11 : vector<8x128xi32>
    %13 = vector.extract_strided_slice %0 {offsets = [0, 2], sizes = [8, 1], strides = [1, 1]} : vector<8x6xi32> to vector<8x1xi32>
    %14 = vector.broadcast %13 : vector<8x1xi32> to vector<8x128xi32>
    %15 = vector.broadcast %1 : vector<1x128xi32> to vector<8x128xi32>
    %16 = arith.cmpi eq, %14, %15 : vector<8x128xi32>
    %17 = arith.extui %16 : vector<8x128xi1> to vector<8x128xi32>
    %18 = arith.addi %12, %17 : vector<8x128xi32>
    %19 = vector.extract_strided_slice %0 {offsets = [0, 3], sizes = [8, 1], strides = [1, 1]} : vector<8x6xi32> to vector<8x1xi32>
    %20 = vector.broadcast %19 : vector<8x1xi32> to vector<8x128xi32>
    %21 = vector.broadcast %1 : vector<1x128xi32> to vector<8x128xi32>
    %22 = arith.cmpi eq, %20, %21 : vector<8x128xi32>
    %23 = arith.extui %22 : vector<8x128xi1> to vector<8x128xi32>
    %24 = arith.addi %18, %23 : vector<8x128xi32>
    %25 = arith.sitofp %24 : vector<8x128xi32> to vector<8x128xf32>
    %c0_1 = arith.constant 0 : index
    %c0_2 = arith.constant 0 : index
    %26 = vector.load %arg2[%c0_1, %c0_2] : memref<384x128xf32, #tpu.memory_space<vmem>>, vector<128x128xf32>
    %cst = arith.constant dense<0.000000e+00> : vector<8x128xf32>
    %27 = tpu.matmul %25, %26, %cst {dimension_numbers = #tpu.dot_dimension_numbers<[1], [0], [0], [1], [0, 0, 1, 1], [], []>, precision = #tpu.contract_precision<fp32>} : vector<8x128xf32>, vector<128x128xf32>, vector<8x128xf32> -> vector<8x128xf32>
    %28 = tpu.iota {dimensions = array<i32: 1>} : vector<1x128xi32>
    %29 = vector.extract_strided_slice %0 {offsets = [0, 4], sizes = [8, 1], strides = [1, 1]} : vector<8x6xi32> to vector<8x1xi32>
    %30 = vector.broadcast %29 : vector<8x1xi32> to vector<8x128xi32>
    %31 = vector.broadcast %28 : vector<1x128xi32> to vector<8x128xi32>
    %32 = arith.cmpi eq, %30, %31 : vector<8x128xi32>
    %33 = arith.extui %32 : vector<8x128xi1> to vector<8x128xi32>
    %34 = arith.sitofp %33 : vector<8x128xi32> to vector<8x128xf32>
    %c128 = arith.constant 128 : index
    %c0_3 = arith.constant 0 : index
    %35 = vector.load %arg2[%c128, %c0_3] : memref<384x128xf32, #tpu.memory_space<vmem>>, vector<128x128xf32>
    %cst_4 = arith.constant dense<0.000000e+00> : vector<8x128xf32>
    %36 = tpu.matmul %34, %35, %cst_4 {dimension_numbers = #tpu.dot_dimension_numbers<[1], [0], [0], [1], [0, 0, 1, 1], [], []>, precision = #tpu.contract_precision<fp32>} : vector<8x128xf32>, vector<128x128xf32>, vector<8x128xf32> -> vector<8x128xf32>
    %37 = arith.addf %27, %36 : vector<8x128xf32>
    %38 = tpu.iota {dimensions = array<i32: 1>} : vector<1x128xi32>
    %39 = vector.extract_strided_slice %0 {offsets = [0, 5], sizes = [8, 1], strides = [1, 1]} : vector<8x6xi32> to vector<8x1xi32>
    %40 = vector.broadcast %39 : vector<8x1xi32> to vector<8x128xi32>
    %41 = vector.broadcast %38 : vector<1x128xi32> to vector<8x128xi32>
    %42 = arith.cmpi eq, %40, %41 : vector<8x128xi32>
    %43 = arith.extui %42 : vector<8x128xi1> to vector<8x128xi32>
    %44 = arith.sitofp %43 : vector<8x128xi32> to vector<8x128xf32>
    %c256 = arith.constant 256 : index
    %c0_5 = arith.constant 0 : index
    %45 = vector.load %arg2[%c256, %c0_5] : memref<384x128xf32, #tpu.memory_space<vmem>>, vector<128x128xf32>
    %cst_6 = arith.constant dense<0.000000e+00> : vector<8x128xf32>
    %46 = tpu.matmul %44, %45, %cst_6 {dimension_numbers = #tpu.dot_dimension_numbers<[1], [0], [0], [1], [0, 0, 1, 1], [], []>, precision = #tpu.contract_precision<fp32>} : vector<8x128xf32>, vector<128x128xf32>, vector<8x128xf32> -> vector<8x128xf32>
    %47 = arith.addf %37, %46 : vector<8x128xf32>
    %c0_7 = arith.constant 0 : index
    %c0_8 = arith.constant 0 : index
    %48 = vector.load %arg3[%c0_7, %c0_8] : memref<8x128xf32, #tpu.memory_space<vmem>>, vector<8x128xf32>
    tpu.vector_store %arg3[%c0_7, %c0_8], %47 {strides = array<i32>} : memref<8x128xf32, #tpu.memory_space<vmem>>, vector<8x128xf32>,
    return
  }
  func.func @transform_0(%arg0: i32) -> (i32, i32) {
    %c0_i32 = arith.constant 0 : i32
    %c0_i32_0 = arith.constant 0 : i32
    return %arg0, %c0_i32 : i32, i32
  }
  func.func @transform_1(%arg0: i32) -> (i32, i32) {
    %c0_i32 = arith.constant 0 : i32
    %c0_i32_0 = arith.constant 0 : i32
    %c0_i32_1 = arith.constant 0 : i32
    return %c0_i32, %c0_i32_0 : i32, i32
  }
  func.func @transform_2(%arg0: i32) -> (i32, i32) {
    %c0_i32 = arith.constant 0 : i32
    %c0_i32_0 = arith.constant 0 : i32
    return %arg0, %c0_i32 : i32, i32
  }
}

</mosaic_0001>

<llo_original>
// kernel: tpu_custom_call.1
$region0: #{tpu_custom_call.1}
  #allocation0 [shape = 'u32[]', space=smem, size = 0x4, offset = 0x4, fixed_abs, tag = 'smem constant byte address 0x4 - core index']
  #allocation1 [shape = 'u32[144,128]{1,0:T(1,128)}', space=vmem, size = 0x12000, scoped, tag = 'internal scratch']
  %s0 = inlined_call_operand.vmem [shape: s32[16,6], index: 0, kind: input, shape index: {}]
  %s1 = inlined_call_operand.hbm [shape: f32[384,128], index: 1, kind: input, shape index: {}]
  %s2 = inlined_call_operand.hbm [shape: f32[16,128], index: 2, kind: output, shape index: {}]
  %s3 = sld [smem:[#allocation0]]
  $region45: #{tpu_custom_call.1} parent=0
    _
  %s5 = ssub.s32 1, %s3
  %s6 = scalar_select 0, %s5, %s3
  $region1: #{tpu_custom_call.1} parent=0
    #allocation2 [shape = 'u8[196608]{0}', space=vmem, size = 0x30000, scoped, tag = 'input window, operand 1, single buffered']
    #allocation3 [shape = 's32[2]{0}', space=sflag, size = 0x8, scoped, tag = 'scoped memory for tpu_custom_call.1']
    #allocation4 [shape = 's32[2]{0}', space=sflag, size = 0x8, scoped, tag = 'scoped memory for tpu_custom_call.1']
    #allocation5 [shape = 'u8[8192]{0}', space=vmem, size = 0x2000, scoped, tag = 'output window, operand 0']
    %7 = vsyncpa [#allocation3], 0
    %8 = vsyncpa [#allocation4], 0
    %s9 = scalar_lea.sflag [#allocation4], 1
    %10 = vsyncpa %s9, 0
    loop: start=0, step=1, limit=4
    $region2: #{tpu_custom_call.1} parent=1 // loop_pre_header
      _
    $region3: #{tpu_custom_call.1} parent=1 // loop_header
      %s12 = sphi 0, %s16
      %p13 = scmp.ge.s32.totalorder %s12, 4
      %s22 = sphi 0, %s24
      %s25 = sphi 0, %s22
      %s26 = sphi 0, %s25
      %s42 = sphi 0, %s26
      %s46 = sphi 0, %s46
      %s48 = sphi 0, %s46
      %s49 = sphi 0, %s48
      %s63 = sphi 0, %s49
      %s69 = sphi 0, %s71
      %s72 = sphi 0, %s69
      %s73 = sphi 0, %s72
      %s89 = sphi 0, %s73
    $region4: #{tpu_custom_call.1} parent=1 // loop_header_branch
      %15 = sbr.rel (%p13) target = $region8
    $region5: #{tpu_custom_call.1} parent=1 // loop_body
      %s17 = ssub.s32 %s12, 1
      %s18 = ssub.s32 %s12, 2
      %s19 = sadd.s32 %s12, 1
      %s20 = ssub.s32 %s12, %s19
      %p21 = scmp.eq.s32.totalorder %s20, 0
      %s23 = sadd.s32 %s22, 1
      %s24 = scalar_select %p21, %s22, %s23
      %p27 = pneg %p21
      %p28 = scmp.eq.s32.totalorder %s12, 1
      %p29 = por %p27, %p28
      %p30 = scmp.ne.s32.totalorder %s22, %s25
      %p31 = scmp.eq.s32.totalorder %s12, 0
      %p32 = por %p30, %p31
      %p33 = scmp.ne.s32.totalorder %s22, %s25
      %p34 = scmp.eq.s32.totalorder %s17, 1
      %p35 = por %p33, %p34
      %p36 = scmp.ne.s32.totalorder %s25, %s26
      %p37 = scmp.eq.s32.totalorder %s17, 0
      %p38 = por %p36, %p37
      %p39 = scmp.ne.s32.totalorder %s25, %s26
      %p40 = scmp.eq.s32.totalorder %s18, 1
      %p41 = por %p39, %p40
      %p43 = scmp.ne.s32.totalorder %s26, %s42
      %p44 = scmp.eq.s32.totalorder %s18, 0
      %p45 = por %p43, %p44
      %s47 = sadd.s32 %s46, 1
      %p50 = scmp.eq.s32.totalorder %s12, 1
      %p51 = scmp.ne.s32.totalorder %s46, %s48
      %p52 = scmp.eq.s32.totalorder %s12, 0
      %p53 = por %p51, %p52
      %p54 = scmp.ne.s32.totalorder %s46, %s48
      %p55 = scmp.eq.s32.totalorder %s17, 1
      %p56 = por %p54, %p55
      %p57 = scmp.ne.s32.totalorder %s48, %s49
      %p58 = scmp.eq.s32.totalorder %s17, 0
      %p59 = por %p57, %p58
      %p60 = scmp.ne.s32.totalorder %s48, %s49
      %p61 = scmp.eq.s32.totalorder %s18, 1
      %p62 = por %p60, %p61
      %p64 = scmp.ne.s32.totalorder %s49, %s63
      %p65 = scmp.eq.s32.totalorder %s18, 0
      %p66 = por %p64, %p65
      %s67 = ssub.s32 %s12, %s19
      %p68 = scmp.eq.s32.totalorder %s67, 0
      %s70 = sadd.s32 %s69, 1
      %s71 = scalar_select %p68, %s69, %s70
      %p74 = pneg %p68
      %p75 = scmp.eq.s32.totalorder %s12, 1
      %p76 = por %p74, %p75
      %p77 = scmp.ne.s32.totalorder %s69, %s72
      %p78 = scmp.eq.s32.totalorder %s12, 0
      %p79 = por %p77, %p78
      %p80 = scmp.ne.s32.totalorder %s69, %s72
      %p81 = scmp.eq.s32.totalorder %s17, 1
      %p82 = por %p80, %p81
      %p83 = scmp.ne.s32.totalorder %s72, %s73
      %p84 = scmp.eq.s32.totalorder %s17, 0
      %p85 = por %p83, %p84
      %p86 = scmp.ne.s32.totalorder %s72, %s73
      %p87 = scmp.eq.s32.totalorder %s18, 1
      %p88 = por %p86, %p87
      %p90 = scmp.ne.s32.totalorder %s73, %s89
      %p91 = scmp.eq.s32.totalorder %s18, 0
      %p92 = por %p90, %p91
      %p93 = scmp.le.s32.totalorder 1, %s12
      %p94 = scmp.lt.s32.totalorder %s12, 3
      %p95 = pnand %p93, %p94
      %p96 = pneg %p95
      // Predicated region
      $region9: #{tpu_custom_call.1} parent=5 // pred_check
        _
      $region10: #{tpu_custom_call.1} parent=5 // pred_check_branch
        %98 = sbr.rel (%p95) target = $region12
      $region11: #{tpu_custom_call.1} parent=5 // pred_region
        %s99 = ssub.s32 %s12, 1
        // Predicated region
        $region13: #{tpu_custom_call.1} parent=11 // pred_check
          %p100 = pneg %p59
        $region14: #{tpu_custom_call.1} parent=11 // pred_check_branch
          %102 = sbr.rel (%p100) target = $region16
        $region15: #{tpu_custom_call.1} parent=11 // pred_region
          %s104 = ssub.s32 6144, 6144
          %105 = vsyncadd [#allocation3], %s104
          %s106 = sshll.u32 [#allocation2], 4
          %s107 = int_to_ptr.vmem [resolvable:$true] %s106
          %112 = dma.hbm_to_vmem [thread:$0]  %s1, 6144, %s107, [#allocation3], 128, 128, 8
        $region16: #{tpu_custom_call.1} parent=11 // pred_fallthru
          _
      $region12: #{tpu_custom_call.1} parent=5 // pred_fallthru
        _
      %p113 = scmp.lt.s32.totalorder %s12, 2
      // Predicated region
      $region17: #{tpu_custom_call.1} parent=5 // pred_check
        %p114 = pneg %p113
      $region18: #{tpu_custom_call.1} parent=5 // pred_check_branch
        %116 = sbr.rel (%p114) target = $region20
      $region19: #{tpu_custom_call.1} parent=5 // pred_region
        // Predicated region
        $region21: #{tpu_custom_call.1} parent=19 // pred_check
          %p117 = pneg %p32
        $region22: #{tpu_custom_call.1} parent=19 // pred_check_branch
          %119 = sbr.rel (%p117) target = $region24
        $region23: #{tpu_custom_call.1} parent=19 // pred_region
          %p120 = scmp.lt.s32.totalorder %s12, 1
          %s121 = scalar_select %p120, %s12, 1
          %s122 = smul.addr %s121, 8
          %s123 = scalar_lea.vmem %s0, %s122
        $region24: #{tpu_custom_call.1} parent=19 // pred_fallthru
          _
      $region20: #{tpu_custom_call.1} parent=5 // pred_fallthru
        _
      %p124 = scmp.le.s32.totalorder 1, %s12
      %p125 = scmp.lt.s32.totalorder %s12, 3
      %p126 = pnand %p124, %p125
      %p127 = pneg %p126
      // Predicated region
      $region25: #{tpu_custom_call.1} parent=5 // pred_check
        _
      $region26: #{tpu_custom_call.1} parent=5 // pred_check_branch
        %129 = sbr.rel (%p126) target = $region28
      $region27: #{tpu_custom_call.1} parent=5 // pred_region
        %s130 = ssub.s32 %s12, 1
        // Predicated region
        $region29: #{tpu_custom_call.1} parent=27 // pred_check
          %p131 = pneg %p59
        $region30: #{tpu_custom_call.1} parent=27 // pred_check_branch
          %133 = sbr.rel (%p131) target = $region32
        $region31: #{tpu_custom_call.1} parent=27 // pred_region
          %134 = dma.done [#allocation3], 6144
        $region32: #{tpu_custom_call.1} parent=27 // pred_fallthru
          _
        %p135 = scmp.lt.s32.totalorder %s17, 1
        %s136 = scalar_select %p135, %s17, 1
        %s137 = smul.addr %s136, 8
        %s138 = scalar_lea.vmem %s0, %s137
        %p139 = pneg %p38
        %p140 = pneg %p35
        %p141 = pneg %p59
        %p142 = pneg %p56
        %p143 = pneg %p85
        %p144 = pneg %p82
        %s145 = sand.u32 %s72, 1
        %s146 = scalar_lea.sflag [#allocation4], %s145
        %s147 = sand.u32 %s72, 1
        %s148 = smul.addr %s147, 8
        %s149 = scalar_lea.vmem [#allocation5], %s148
        %p150 = scmp.lt.s32.totalorder %s17, 1
        %s151 = scalar_select %p150, %s17, 1
        %s152 = smul.addr %s151, 8
        %s153 = scalar_lea.vmem %s0, %s152
        %v154 = vld [vmem:[%s153] sm:$0xff]
        %v155 = vlaneseq
        %v156 = vand.u32 %v155, 127
        %157 = vset.pattern.permute.xlu0 0
        %158 = vperm.xlu0 %157, %v154
        %v159 = vpop.permute.xlu0 %158
        %vm160 = vcmp.eq.s32.totalorder %v159, %v156
        %v161 = vsel %vm160, 1, 0
        %162 = vset.pattern.permute.xlu0 1
        %163 = vperm.xlu0 %162, %v154
        %v164 = vpop.permute.xlu0 %163
        %vm165 = vcmp.eq.s32.totalorder %v164, %v156
        %v166 = vsel %vm165, 1, 0
        %v167 = vadd.s32 %v161, %v166
        %168 = vset.pattern.permute.xlu0 2
        %169 = vperm.xlu0 %168, %v154
        %v170 = vpop.permute.xlu0 %169
        %vm171 = vcmp.eq.s32.totalorder %v170, %v156
        %v172 = vsel %vm171, 1, 0
        %v173 = vadd.s32 %v167, %v172
        %174 = vset.pattern.permute.xlu0 3
        %175 = vperm.xlu0 %174, %v154
        %v176 = vpop.permute.xlu0 %175
        %vm177 = vcmp.eq.s32.totalorder %v176, %v156
        %v178 = vsel %vm177, 1, 0
        %v179 = vadd.s32 %v173, %v178
        %v180 = vcvt.s32.f32 %v179
        %v181 = vld [vmem:[#allocation2] sm:$0xff]
        %v182 = vld [vmem:[#allocation2 + $0x8] sm:$0xff]
        %v183 = vld [vmem:[#allocation2 + $0x10] sm:$0xff]
        %v184 = vld [vmem:[#allocation2 + $0x18] sm:$0xff]
        %v185 = vld [vmem:[#allocation2 + $0x20] sm:$0xff]
        %v186 = vld [vmem:[#allocation2 + $0x28] sm:$0xff]
        %v187 = vld [vmem:[#allocation2 + $0x30] sm:$0xff]
        %v188 = vld [vmem:[#allocation2 + $0x38] sm:$0xff]
        %v189 = vld [vmem:[#allocation2 + $0x40] sm:$0xff]
        %v190 = vld [vmem:[#allocation2 + $0x48] sm:$0xff]
        %v191 = vld [vmem:[#allocation2 + $0x50] sm:$0xff]
        %v192 = vld [vmem:[#allocation2 + $0x58] sm:$0xff]
        %v193 = vld [vmem:[#allocation2 + $0x60] sm:$0xff]
        %v194 = vld [vmem:[#allocation2 + $0x68] sm:$0xff]
        %v195 = vld [vmem:[#allocation2 + $0x70] sm:$0xff]
        %v196 = vld [vmem:[#allocation2 + $0x78] sm:$0xff]
        %197 = vset.pattern.permute.xlu0 4
        %198 = vperm.xlu0 %197, %v154
        %v199 = vpop.permute.xlu0 %198
        %vm200 = vcmp.eq.s32.totalorder %v199, %v156
        %v201 = vsel %vm200, 1, 0
        %v202 = vcvt.s32.f32 %v201
        %v203 = vld [vmem:[#allocation2 + $0x80] sm:$0xff]
        %v204 = vld [vmem:[#allocation2 + $0x88] sm:$0xff]
        %v205 = vld [vmem:[#allocation2 + $0x90] sm:$0xff]
        %v206 = vld [vmem:[#allocation2 + $0x98] sm:$0xff]
        %v207 = vld [vmem:[#allocation2 + $0xa0] sm:$0xff]
        %v208 = vld [vmem:[#allocation2 + $0xa8] sm:$0xff]
        %v209 = vld [vmem:[#allocation2 + $0xb0] sm:$0xff]
        %v210 = vld [vmem:[#allocation2 + $0xb8] sm:$0xff]
        %v211 = vld [vmem:[#allocation2 + $0xc0] sm:$0xff]
        %v212 = vld [vmem:[#allocation2 + $0xc8] sm:$0xff]
        %v213 = vld [vmem:[#allocation2 + $0xd0] sm:$0xff]
        %v214 = vld [vmem:[#allocation2 + $0xd8] sm:$0xff]
        %v215 = vld [vmem:[#allocation2 + $0xe0] sm:$0xff]
        %v216 = vld [vmem:[#allocation2 + $0xe8] sm:$0xff]
        %v217 = vld [vmem:[#allocation2 + $0xf0] sm:$0xff]
        %v218 = vld [vmem:[#allocation2 + $0xf8] sm:$0xff]
        %219 = vmatprep.subr.mxu0 0.0
        %v220 = vand.u32 %v203, 4294901760
        %221 = vmatpush1.msra.mxu0 %v220
        %222 = vmatprep.subr.mxu0 0.0
        %v223 = vand.u32 %v204, 4294901760
        %224 = vmatpush1.msra.mxu0 %v223
        %225 = vmatprep.subr.mxu0 0.0
        %v226 = vand.u32 %v205, 4294901760
        %227 = vmatpush1.msra.mxu0 %v226
        %228 = vmatprep.subr.mxu0 0.0
        %v229 = vand.u32 %v206, 4294901760
        %230 = vmatpush1.msra.mxu0 %v229
        %231 = vmatprep.subr.mxu0 0.0
        %v232 = vand.u32 %v207, 4294901760
        %233 = vmatpush1.msra.mxu0 %v232
        %234 = vmatprep.subr.mxu0 0.0
        %v235 = vand.u32 %v208, 4294901760
        %236 = vmatpush1.msra.mxu0 %v235
        %237 = vmatprep.subr.mxu0 0.0
        %v238 = vand.u32 %v209, 4294901760
        %239 = vmatpush1.msra.mxu0 %v238
        %240 = vmatprep.subr.mxu0 0.0
        %v241 = vand.u32 %v210, 4294901760
        %242 = vmatpush1.msra.mxu0 %v241
        %243 = vmatprep.subr.mxu0 0.0
        %v244 = vand.u32 %v211, 4294901760
        %245 = vmatpush1.msra.mxu0 %v244
        %246 = vmatprep.subr.mxu0 0.0
        %v247 = vand.u32 %v212, 4294901760
        %248 = vmatpush1.msra.mxu0 %v247
        %249 = vmatprep.subr.mxu0 0.0
        %v250 = vand.u32 %v213, 4294901760
        %251 = vmatpush1.msra.mxu0 %v250
        %252 = vmatprep.subr.mxu0 0.0
        %v253 = vand.u32 %v214, 4294901760
        %254 = vmatpush1.msra.mxu0 %v253
        %255 = vmatprep.subr.mxu0 0.0
        %v256 = vand.u32 %v215, 4294901760
        %257 = vmatpush1.msra.mxu0 %v256
        %258 = vmatprep.subr.mxu0 0.0
        %v259 = vand.u32 %v216, 4294901760
        %260 = vmatpush1.msra.mxu0 %v259
        %261 = vmatprep.subr.mxu0 0.0
        %v262 = vand.u32 %v217, 4294901760
        %263 = vmatpush1.msra.mxu0 %v262
        %264 = vmatprep.subr.mxu0 0.0
        %v265 = vand.u32 %v218, 4294901760
        %266 = vmatpush1.msra.mxu0 %v265
        %267 = vmatprep.subr.mxu0 0.0
        %268 = vmatpush1.msra.mxu0 0.0
        %269 = vmatprep.subr.mxu0 0.0
        %270 = vmatpush1.msra.mxu0 0.0
        %271 = vmatprep.subr.mxu0 0.0
        %272 = vmatpush1.msra.mxu0 0.0
        %273 = vmatprep.subr.mxu0 0.0
        %274 = vmatpush1.msra.mxu0 0.0
        %275 = vmatprep.subr.mxu0 0.0
        %276 = vmatpush1.msra.mxu0 0.0
        %277 = vmatprep.subr.mxu0 0.0
        %278 = vmatpush1.msra.mxu0 0.0
        %279 = vmatprep.subr.mxu0 0.0
        %280 = vmatpush1.msra.mxu0 0.0
        %281 = vmatprep.subr.mxu0 0.0
        %282 = vmatpush1.msra.mxu0 0.0
        %283 = vmatprep.subr.mxu0 0.0
        %284 = vmatpush1.msra.mxu0 0.0
        %285 = vmatprep.subr.mxu0 0.0
        %286 = vmatpush1.msra.mxu0 0.0
        %287 = vmatprep.subr.mxu0 0.0
        %288 = vmatpush1.msra.mxu0 0.0
        %289 = vmatprep.subr.mxu0 0.0
        %290 = vmatpush1.msra.mxu0 0.0
        %291 = vmatprep.subr.mxu0 0.0
        %292 = vmatpush1.msra.mxu0 0.0
        %293 = vmatprep.subr.mxu0 0.0
        %294 = vmatpush1.msra.mxu0 0.0
        %295 = vmatprep.subr.mxu0 0.0
        %296 = vmatpush1.msra.mxu0 0.0
        %297 = vmatprep.subr.mxu0 0.0
        %298 = vmatpush1.msra.mxu0 0.0
        %299 = vmatprep.mubr.f32.mxu0 0.0
        %v300 = vand.u32 %v202, 4294901760
        %v301 = vsub.f32 %v202, %v300
        %v302 = vand.u32 %v301, 4294901760
        %v303 = vsub.f32 %v301, %v302
        %v304 = vand.u32 %v303, 4294901760
        %305 = vmatmul.mubr.f32.gmra.mrb[0].mxu0 %v304
        %v306 = vpop.f32.mrb[0].mxu0
        %v307 = vadd.f32 0.0, %v306
        %v308 = vpop.f32.mrb[0].mxu0
        %309 = vdwg.mxu0
        %310 = vmatprep.subr.mxu0 0.0
        %v311 = vand.u32 %v203, 4294901760
        %v312 = vsub.f32 %v203, %v311
        %v313 = vand.u32 %v312, 4294901760
        %v314 = vsub.f32 %v312, %v313
        %v315 = vand.u32 %v314, 4294901760
        %316 = vmatpush1.msra.mxu0 %v315
        %317 = vmatprep.subr.mxu0 0.0
        %v318 = vand.u32 %v204, 4294901760
        %v319 = vsub.f32 %v204, %v318
        %v320 = vand.u32 %v319, 4294901760
        %v321 = vsub.f32 %v319, %v320
        %v322 = vand.u32 %v321, 4294901760
        %323 = vmatpush1.msra.mxu0 %v322
        %324 = vmatprep.subr.mxu0 0.0
        %v325 = vand.u32 %v205, 4294901760
        %v326 = vsub.f32 %v205, %v325
        %v327 = vand.u32 %v326, 4294901760
        %v328 = vsub.f32 %v326, %v327
        %v329 = vand.u32 %v328, 4294901760
        %330 = vmatpush1.msra.mxu0 %v329
        %331 = vmatprep.subr.mxu0 0.0
        %v332 = vand.u32 %v206, 4294901760
        %v333 = vsub.f32 %v206, %v332
        %v334 = vand.u32 %v333, 4294901760
        %v335 = vsub.f32 %v333, %v334
        %v336 = vand.u32 %v335, 4294901760
        %337 = vmatpush1.msra.mxu0 %v336
        %338 = vmatprep.subr.mxu0 0.0
        %v339 = vand.u32 %v207, 4294901760
        %v340 = vsub.f32 %v207, %v339
        %v341 = vand.u32 %v340, 4294901760
        %v342 = vsub.f32 %v340, %v341
        %v343 = vand.u32 %v342, 4294901760
        %344 = vmatpush1.msra.mxu0 %v343
        %345 = vmatprep.subr.mxu0 0.0
        %v346 = vand.u32 %v208, 4294901760
        %v347 = vsub.f32 %v208, %v346
        %v348 = vand.u32 %v347, 4294901760
        %v349 = vsub.f32 %v347, %v348
        %v350 = vand.u32 %v349, 4294901760
        %351 = vmatpush1.msra.mxu0 %v350
        %352 = vmatprep.subr.mxu0 0.0
        %v353 = vand.u32 %v209, 4294901760
        %v354 = vsub.f32 %v209, %v353
        %v355 = vand.u32 %v354, 4294901760
        %v356 = vsub.f32 %v354, %v355
        %v357 = vand.u32 %v356, 4294901760
        %358 = vmatpush1.msra.mxu0 %v357
        %359 = vmatprep.subr.mxu0 0.0
        %v360 = vand.u32 %v210, 4294901760
        %v361 = vsub.f32 %v210, %v360
        %v362 = vand.u32 %v361, 4294901760
        %v363 = vsub.f32 %v361, %v362
        %v364 = vand.u32 %v363, 4294901760
        %365 = vmatpush1.msra.mxu0 %v364
        %366 = vmatprep.subr.mxu0 0.0
        %v367 = vand.u32 %v211, 4294901760
        %v368 = vsub.f32 %v211, %v367
        %v369 = vand.u32 %v368, 4294901760
        %v370 = vsub.f32 %v368, %v369
        %v371 = vand.u32 %v370, 4294901760
        %372 = vmatpush1.msra.mxu0 %v371
        %373 = vmatprep.subr.mxu0 0.0
        %v374 = vand.u32 %v212, 4294901760
        %v375 = vsub.f32 %v212, %v374
        %v376 = vand.u32 %v375, 4294901760
        %v377 = vsub.f32 %v375, %v376
        %v378 = vand.u32 %v377, 4294901760
        %379 = vmatpush1.msra.mxu0 %v378
        %380 = vmatprep.subr.mxu0 0.0
        %v381 = vand.u32 %v213, 4294901760
        %v382 = vsub.f32 %v213, %v381
        %v383 = vand.u32 %v382, 4294901760
        %v384 = vsub.f32 %v382, %v383
        %v385 = vand.u32 %v384, 4294901760
        %386 = vmatpush1.msra.mxu0 %v385
        %387 = vmatprep.subr.mxu0 0.0
        %v388 = vand.u32 %v214, 4294901760
        %v389 = vsub.f32 %v214, %v388
        %v390 = vand.u32 %v389, 4294901760
        %v391 = vsub.f32 %v389, %v390
        %v392 = vand.u32 %v391, 4294901760
        %393 = vmatpush1.msra.mxu0 %v392
        %394 = vmatprep.subr.mxu0 0.0
        %v395 = vand.u32 %v215, 4294901760
        %v396 = vsub.f32 %v215, %v395
        %v397 = vand.u32 %v396, 4294901760
        %v398 = vsub.f32 %v396, %v397
        %v399 = vand.u32 %v398, 4294901760
        %400 = vmatpush1.msra.mxu0 %v399
        %401 = vmatprep.subr.mxu0 0.0
        %v402 = vand.u32 %v216, 4294901760
        %v403 = vsub.f32 %v216, %v402
        %v404 = vand.u32 %v403, 4294901760
        %v405 = vsub.f32 %v403, %v404
        %v406 = vand.u32 %v405, 4294901760
        %407 = vmatpush1.msra.mxu0 %v406
        %408 = vmatprep.subr.mxu0 0.0
        %v409 = vand.u32 %v217, 4294901760
        %v410 = vsub.f32 %v217, %v409
        %v411 = vand.u32 %v410, 4294901760
        %v412 = vsub.f32 %v410, %v411
        %v413 = vand.u32 %v412, 4294901760
        %414 = vmatpush1.msra.mxu0 %v413
        %415 = vmatprep.subr.mxu0 0.0
        %v416 = vand.u32 %v218, 4294901760
        %v417 = vsub.f32 %v218, %v416
        %v418 = vand.u32 %v417, 4294901760
        %v419 = vsub.f32 %v417, %v418
        %v420 = vand.u32 %v419, 4294901760
        %421 = vmatpush1.msra.mxu0 %v420
        %422 = vmatprep.subr.mxu0 0.0
        %423 = vmatpush1.msra.mxu0 0.0
        %424 = vmatprep.subr.mxu0 0.0
        %425 = vmatpush1.msra.mxu0 0.0
        %426 = vmatprep.subr.mxu0 0.0
        %427 = vmatpush1.msra.mxu0 0.0
        %428 = vmatprep.subr.mxu0 0.0
        %429 = vmatpush1.msra.mxu0 0.0
        %430 = vmatprep.subr.mxu0 0.0
        %431 = vmatpush1.msra.mxu0 0.0
        %432 = vmatprep.subr.mxu0 0.0
        %433 = vmatpush1.msra.mxu0 0.0
        %434 = vmatprep.subr.mxu0 0.0
        %435 = vmatpush1.msra.mxu0 0.0
        %436 = vmatprep.subr.mxu0 0.0
        %437 = vmatpush1.msra.mxu0 0.0
        %438 = vmatprep.subr.mxu0 0.0
        %439 = vmatpush1.msra.mxu0 0.0
        %440 = vmatprep.subr.mxu0 0.0
        %441 = vmatpush1.msra.mxu0 0.0
        %442 = vmatprep.subr.mxu0 0.0
        %443 = vmatpush1.msra.mxu0 0.0
        %444 = vmatprep.subr.mxu0 0.0
        %445 = vmatpush1.msra.mxu0 0.0
        %446 = vmatprep.subr.mxu0 0.0
        %447 = vmatpush1.msra.mxu0 0.0
        %448 = vmatprep.subr.mxu0 0.0
        %449 = vmatpush1.msra.mxu0 0.0
        %450 = vmatprep.subr.mxu0 0.0
        %451 = vmatpush1.msra.mxu0 0.0
        %452 = vmatprep.subr.mxu0 0.0
        %453 = vmatpush1.msra.mxu0 0.0
        %454 = vmatprep.mubr.f32.mxu0 0.0
        %v455 = vand.u32 %v202, 4294901760
        %456 = vmatmul.mubr.f32.gmra.mrb[0].mxu0 %v455
        %v457 = vpop.f32.mrb[0].mxu0
        %v458 = vadd.f32 %v307, %v457
        %v459 = vpop.f32.mrb[0].mxu0
        %460 = vdwg.mxu0
        %461 = vmatprep.subr.mxu0 0.0
        %v462 = vand.u32 %v203, 4294901760
        %v463 = vsub.f32 %v203, %v462
        %464 = vmatpush1.msra.mxu0 %v463
        %465 = vmatprep.subr.mxu0 0.0
        %v466 = vand.u32 %v204, 4294901760
        %v467 = vsub.f32 %v204, %v466
        %468 = vmatpush1.msra.mxu0 %v467
        %469 = vmatprep.subr.mxu0 0.0
        %v470 = vand.u32 %v205, 4294901760
        %v471 = vsub.f32 %v205, %v470
        %472 = vmatpush1.msra.mxu0 %v471
        %473 = vmatprep.subr.mxu0 0.0
        %v474 = vand.u32 %v206, 4294901760
        %v475 = vsub.f32 %v206, %v474
        %476 = vmatpush1.msra.mxu0 %v475
        %477 = vmatprep.subr.mxu0 0.0
        %v478 = vand.u32 %v207, 4294901760
        %v479 = vsub.f32 %v207, %v478
        %480 = vmatpush1.msra.mxu0 %v479
        %481 = vmatprep.subr.mxu0 0.0
        %v482 = vand.u32 %v208, 4294901760
        %v483 = vsub.f32 %v208, %v482
        %484 = vmatpush1.msra.mxu0 %v483
        %485 = vmatprep.subr.mxu0 0.0
        %v486 = vand.u32 %v209, 4294901760
        %v487 = vsub.f32 %v209, %v486
        %488 = vmatpush1.msra.mxu0 %v487
        %489 = vmatprep.subr.mxu0 0.0
        %v490 = vand.u32 %v210, 4294901760
        %v491 = vsub.f32 %v210, %v490
        %492 = vmatpush1.msra.mxu0 %v491
        %493 = vmatprep.subr.mxu0 0.0
        %v494 = vand.u32 %v211, 4294901760
        %v495 = vsub.f32 %v211, %v494
        %496 = vmatpush1.msra.mxu0 %v495
        %497 = vmatprep.subr.mxu0 0.0
        %v498 = vand.u32 %v212, 4294901760
        %v499 = vsub.f32 %v212, %v498
        %500 = vmatpush1.msra.mxu0 %v499
        %501 = vmatprep.subr.mxu0 0.0
        %v502 = vand.u32 %v213, 4294901760
        %v503 = vsub.f32 %v213, %v502
        %504 = vmatpush1.msra.mxu0 %v503
        %505 = vmatprep.subr.mxu0 0.0
        %v506 = vand.u32 %v214, 4294901760
        %v507 = vsub.f32 %v214, %v506
        %508 = vmatpush1.msra.mxu0 %v507
        %509 = vmatprep.subr.mxu0 0.0
        %v510 = vand.u32 %v215, 4294901760
        %v511 = vsub.f32 %v215, %v510
        %512 = vmatpush1.msra.mxu0 %v511
        %513 = vmatprep.subr.mxu0 0.0
        %v514 = vand.u32 %v216, 4294901760
        %v515 = vsub.f32 %v216, %v514
        %516 = vmatpush1.msra.mxu0 %v515
        %517 = vmatprep.subr.mxu0 0.0
        %v518 = vand.u32 %v217, 4294901760
        %v519 = vsub.f32 %v217, %v518
        %520 = vmatpush1.msra.mxu0 %v519
        %521 = vmatprep.subr.mxu0 0.0
        %v522 = vand.u32 %v218, 4294901760
        %v523 = vsub.f32 %v218, %v522
        %524 = vmatpush1.msra.mxu0 %v523
        %525 = vmatprep.subr.mxu0 0.0
        %526 = vmatpush1.msra.mxu0 0.0
        %527 = vmatprep.subr.mxu0 0.0
        %528 = vmatpush1.msra.mxu0 0.0
        %529 = vmatprep.subr.mxu0 0.0
        %530 = vmatpush1.msra.mxu0 0.0
        %531 = vmatprep.subr.mxu0 0.0
        %532 = vmatpush1.msra.mxu0 0.0
        %533 = vmatprep.subr.mxu0 0.0
        %534 = vmatpush1.msra.mxu0 0.0
        %535 = vmatprep.subr.mxu0 0.0
        %536 = vmatpush1.msra.mxu0 0.0
        %537 = vmatprep.subr.mxu0 0.0
        %538 = vmatpush1.msra.mxu0 0.0
        %539 = vmatprep.subr.mxu0 0.0
        %540 = vmatpush1.msra.mxu0 0.0
        %541 = vmatprep.subr.mxu0 0.0
        %542 = vmatpush1.msra.mxu0 0.0
        %543 = vmatprep.subr.mxu0 0.0
        %544 = vmatpush1.msra.mxu0 0.0
        %545 = vmatprep.subr.mxu0 0.0
        %546 = vmatpush1.msra.mxu0 0.0
        %547 = vmatprep.subr.mxu0 0.0
        %548 = vmatpush1.msra.mxu0 0.0
        %549 = vmatprep.subr.mxu0 0.0
        %550 = vmatpush1.msra.mxu0 0.0
        %551 = vmatprep.subr.mxu0 0.0
        %552 = vmatpush1.msra.mxu0 0.0
        %553 = vmatprep.subr.mxu0 0.0
        %554 = vmatpush1.msra.mxu0 0.0
        %555 = vmatprep.subr.mxu0 0.0
        %556 = vmatpush1.msra.mxu0 0.0
        %557 = vmatprep.mubr.f32.mxu0 0.0
        %v558 = vand.u32 %v202, 4294901760
        %v559 = vsub.f32 %v202, %v558
        %560 = vmatmul.mubr.f32.gmra.mrb[0].mxu0 %v559
        %v561 = vpop.f32.mrb[0].mxu0
        %v562 = vadd.f32 %v458, %v561
        %v563 = vpop.f32.mrb[0].mxu0
        %564 = vdwg.mxu0
        %565 = vmatprep.subr.mxu0 0.0
        %v566 = vand.u32 %v203, 4294901760
        %567 = vmatpush1.msra.mxu0 %v566
        %568 = vmatprep.subr.mxu0 0.0
        %v569 = vand.u32 %v204, 4294901760
        %570 = vmatpush1.msra.mxu0 %v569
        %571 = vmatprep.subr.mxu0 0.0
        %v572 = vand.u32 %v205, 4294901760
        %573 = vmatpush1.msra.mxu0 %v572
        %574 = vmatprep.subr.mxu0 0.0
        %v575 = vand.u32 %v206, 4294901760
        %576 = vmatpush1.msra.mxu0 %v575
        %577 = vmatprep.subr.mxu0 0.0
        %v578 = vand.u32 %v207, 4294901760
        %579 = vmatpush1.msra.mxu0 %v578
        %580 = vmatprep.subr.mxu0 0.0
        %v581 = vand.u32 %v208, 4294901760
        %582 = vmatpush1.msra.mxu0 %v581
        %583 = vmatprep.subr.mxu0 0.0
        %v584 = vand.u32 %v209, 4294901760
        %585 = vmatpush1.msra.mxu0 %v584
        %586 = vmatprep.subr.mxu0 0.0
        %v587 = vand.u32 %v210, 4294901760
        %588 = vmatpush1.msra.mxu0 %v587
        %589 = vmatprep.subr.mxu0 0.0
        %v590 = vand.u32 %v211, 4294901760
        %591 = vmatpush1.msra.mxu0 %v590
        %592 = vmatprep.subr.mxu0 0.0
        %v593 = vand.u32 %v212, 4294901760
        %594 = vmatpush1.msra.mxu0 %v593
        %595 = vmatprep.subr.mxu0 0.0
        %v596 = vand.u32 %v213, 4294901760
        %597 = vmatpush1.msra.mxu0 %v596
        %598 = vmatprep.subr.mxu0 0.0
        %v599 = vand.u32 %v214, 4294901760
        %600 = vmatpush1.msra.mxu0 %v599
        %601 = vmatprep.subr.mxu0 0.0
        %v602 = vand.u32 %v215, 4294901760
        %603 = vmatpush1.msra.mxu0 %v602
        %604 = vmatprep.subr.mxu0 0.0
        %v605 = vand.u32 %v216, 4294901760
        %606 = vmatpush1.msra.mxu0 %v605
        %607 = vmatprep.subr.mxu0 0.0
        %v608 = vand.u32 %v217, 4294901760
        %609 = vmatpush1.msra.mxu0 %v608
        %610 = vmatprep.subr.mxu0 0.0
        %v611 = vand.u32 %v218, 4294901760
        %612 = vmatpush1.msra.mxu0 %v611
        %613 = vmatprep.subr.mxu0 0.0
        %614 = vmatpush1.msra.mxu0 0.0
        %615 = vmatprep.subr.mxu0 0.0
        %616 = vmatpush1.msra.mxu0 0.0
        %617 = vmatprep.subr.mxu0 0.0
        %618 = vmatpush1.msra.mxu0 0.0
        %619 = vmatprep.subr.mxu0 0.0
        %620 = vmatpush1.msra.mxu0 0.0
        %621 = vmatprep.subr.mxu0 0.0
        %622 = vmatpush1.msra.mxu0 0.0
        %623 = vmatprep.subr.mxu0 0.0
        %624 = vmatpush1.msra.mxu0 0.0
        %625 = vmatprep.subr.mxu0 0.0
        %626 = vmatpush1.msra.mxu0 0.0
        %627 = vmatprep.subr.mxu0 0.0
        %628 = vmatpush1.msra.mxu0 0.0
        %629 = vmatprep.subr.mxu0 0.0
        %630 = vmatpush1.msra.mxu0 0.0
        %631 = vmatprep.subr.mxu0 0.0
        %632 = vmatpush1.msra.mxu0 0.0
        %633 = vmatprep.subr.mxu0 0.0
        %634 = vmatpush1.msra.mxu0 0.0
        %635 = vmatprep.subr.mxu0 0.0
        %636 = vmatpush1.msra.mxu0 0.0
        %637 = vmatprep.subr.mxu0 0.0
        %638 = vmatpush1.msra.mxu0 0.0
        %639 = vmatprep.subr.mxu0 0.0
        %640 = vmatpush1.msra.mxu0 0.0
        %641 = vmatprep.subr.mxu0 0.0
        %642 = vmatpush1.msra.mxu0 0.0
        %643 = vmatprep.subr.mxu0 0.0
        %644 = vmatpush1.msra.mxu0 0.0
        %645 = vmatprep.mubr.f32.mxu0 0.0
        %v646 = vand.u32 %v202, 4294901760
        %v647 = vsub.f32 %v202, %v646
        %v648 = vand.u32 %v647, 4294901760
        %649 = vmatmul.mubr.f32.gmra.mrb[0].mxu0 %v648
        %v650 = vpop.f32.mrb[0].mxu0
        %v651 = vadd.f32 %v562, %v650
        %v652 = vpop.f32.mrb[0].mxu0
        %653 = vdwg.mxu0
        %654 = vmatprep.subr.mxu0 0.0
        %v655 = vand.u32 %v203, 4294901760
        %v656 = vsub.f32 %v203, %v655
        %v657 = vand.u32 %v656, 4294901760
        %658 = vmatpush1.msra.mxu0 %v657
        %659 = vmatprep.subr.mxu0 0.0
        %v660 = vand.u32 %v204, 4294901760
        %v661 = vsub.f32 %v204, %v660
        %v662 = vand.u32 %v661, 4294901760
        %663 = vmatpush1.msra.mxu0 %v662
        %664 = vmatprep.subr.mxu0 0.0
        %v665 = vand.u32 %v205, 4294901760
        %v666 = vsub.f32 %v205, %v665
        %v667 = vand.u32 %v666, 4294901760
        %668 = vmatpush1.msra.mxu0 %v667
        %669 = vmatprep.subr.mxu0 0.0
        %v670 = vand.u32 %v206, 4294901760
        %v671 = vsub.f32 %v206, %v670
        %v672 = vand.u32 %v671, 4294901760
        %673 = vmatpush1.msra.mxu0 %v672
        %674 = vmatprep.subr.mxu0 0.0
        %v675 = vand.u32 %v207, 4294901760
        %v676 = vsub.f32 %v207, %v675
        %v677 = vand.u32 %v676, 4294901760
        %678 = vmatpush1.msra.mxu0 %v677
        %679 = vmatprep.subr.mxu0 0.0
        %v680 = vand.u32 %v208, 4294901760
        %v681 = vsub.f32 %v208, %v680
        %v682 = vand.u32 %v681, 4294901760
        %683 = vmatpush1.msra.mxu0 %v682
        %684 = vmatprep.subr.mxu0 0.0
        %v685 = vand.u32 %v209, 4294901760
        %v686 = vsub.f32 %v209, %v685
        %v687 = vand.u32 %v686, 4294901760
        %688 = vmatpush1.msra.mxu0 %v687
        %689 = vmatprep.subr.mxu0 0.0
        %v690 = vand.u32 %v210, 4294901760
        %v691 = vsub.f32 %v210, %v690
        %v692 = vand.u32 %v691, 4294901760
        %693 = vmatpush1.msra.mxu0 %v692
        %694 = vmatprep.subr.mxu0 0.0
        %v695 = vand.u32 %v211, 4294901760
        %v696 = vsub.f32 %v211, %v695
        %v697 = vand.u32 %v696, 4294901760
        %698 = vmatpush1.msra.mxu0 %v697
        %699 = vmatprep.subr.mxu0 0.0
        %v700 = vand.u32 %v212, 4294901760
        %v701 = vsub.f32 %v212, %v700
        %v702 = vand.u32 %v701, 4294901760
        %703 = vmatpush1.msra.mxu0 %v702
        %704 = vmatprep.subr.mxu0 0.0
        %v705 = vand.u32 %v213, 4294901760
        %v706 = vsub.f32 %v213, %v705
        %v707 = vand.u32 %v706, 4294901760
        %708 = vmatpush1.msra.mxu0 %v707
        %709 = vmatprep.subr.mxu0 0.0
        %v710 = vand.u32 %v214, 4294901760
        %v711 = vsub.f32 %v214, %v710
        %v712 = vand.u32 %v711, 4294901760
        %713 = vmatpush1.msra.mxu0 %v712
        %714 = vmatprep.subr.mxu0 0.0
        %v715 = vand.u32 %v215, 4294901760
        %v716 = vsub.f32 %v215, %v715
        %v717 = vand.u32 %v716, 4294901760
        %718 = vmatpush1.msra.mxu0 %v717
        %719 = vmatprep.subr.mxu0 0.0
        %v720 = vand.u32 %v216, 4294901760
        %v721 = vsub.f32 %v216, %v720
        %v722 = vand.u32 %v721, 4294901760
        %723 = vmatpush1.msra.mxu0 %v722
        %724 = vmatprep.subr.mxu0 0.0
        %v725 = vand.u32 %v217, 4294901760
        %v726 = vsub.f32 %v217, %v725
        %v727 = vand.u32 %v726, 4294901760
        %728 = vmatpush1.msra.mxu0 %v727
        %729 = vmatprep.subr.mxu0 0.0
        %v730 = vand.u32 %v218, 4294901760
        %v731 = vsub.f32 %v218, %v730
        %v732 = vand.u32 %v731, 4294901760
        %733 = vmatpush1.msra.mxu0 %v732
        %734 = vmatprep.subr.mxu0 0.0
        %735 = vmatpush1.msra.mxu0 0.0
        %736 = vmatprep.subr.mxu0 0.0
        %737 = vmatpush1.msra.mxu0 0.0
        %738 = vmatprep.subr.mxu0 0.0
        %739 = vmatpush1.msra.mxu0 0.0
        %740 = vmatprep.subr.mxu0 0.0
        %741 = vmatpush1.msra.mxu0 0.0
        %742 = vmatprep.subr.mxu0 0.0
        %743 = vmatpush1.msra.mxu0 0.0
        %744 = vmatprep.subr.mxu0 0.0
        %745 = vmatpush1.msra.mxu0 0.0
        %746 = vmatprep.subr.mxu0 0.0
        %747 = vmatpush1.msra.mxu0 0.0
        %748 = vmatprep.subr.mxu0 0.0
        %749 = vmatpush1.msra.mxu0 0.0
        %750 = vmatprep.subr.mxu0 0.0
        %751 = vmatpush1.msra.mxu0 0.0
        %752 = vmatprep.subr.mxu0 0.0
        %753 = vmatpush1.msra.mxu0 0.0
        %754 = vmatprep.subr.mxu0 0.0
        %755 = vmatpush1.msra.mxu0 0.0
        %756 = vmatprep.subr.mxu0 0.0
        %757 = vmatpush1.msra.mxu0 0.0
        %758 = vmatprep.subr.mxu0 0.0
        %759 = vmatpush1.msra.mxu0 0.0
        %760 = vmatprep.subr.mxu0 0.0
        %761 = vmatpush1.msra.mxu0 0.0
        %762 = vmatprep.subr.mxu0 0.0
        %763 = vmatpush1.msra.mxu0 0.0
        %764 = vmatprep.subr.mxu0 0.0
        %765 = vmatpush1.msra.mxu0 0.0
        %766 = vmatprep.mubr.f32.mxu0 0.0
        %v767 = vand.u32 %v202, 4294901760
        %768 = vmatmul.mubr.f32.gmra.mrb[0].mxu0 %v767
        %v769 = vpop.f32.mrb[0].mxu0
        %v770 = vadd.f32 %v651, %v769
        %v771 = vpop.f32.mrb[0].mxu0
        %772 = vdwg.mxu0
        %773 = vmatprep.subr.mxu0 0.0
        %v774 = vand.u32 %v203, 4294901760
        %775 = vmatpush1.msra.mxu0 %v774
        %776 = vmatprep.subr.mxu0 0.0
        %v777 = vand.u32 %v204, 4294901760
        %778 = vmatpush1.msra.mxu0 %v777
        %779 = vmatprep.subr.mxu0 0.0
        %v780 = vand.u32 %v205, 4294901760
        %781 = vmatpush1.msra.mxu0 %v780
        %782 = vmatprep.subr.mxu0 0.0
        %v783 = vand.u32 %v206, 4294901760
        %784 = vmatpush1.msra.mxu0 %v783
        %785 = vmatprep.subr.mxu0 0.0
        %v786 = vand.u32 %v207, 4294901760
        %787 = vmatpush1.msra.mxu0 %v786
        %788 = vmatprep.subr.mxu0 0.0
        %v789 = vand.u32 %v208, 4294901760
        %790 = vmatpush1.msra.mxu0 %v789
        %791 = vmatprep.subr.mxu0 0.0
        %v792 = vand.u32 %v209, 4294901760
        %793 = vmatpush1.msra.mxu0 %v792
        %794 = vmatprep.subr.mxu0 0.0
        %v795 = vand.u32 %v210, 4294901760
        %796 = vmatpush1.msra.mxu0 %v795
        %797 = vmatprep.subr.mxu0 0.0
        %v798 = vand.u32 %v211, 4294901760
        %799 = vmatpush1.msra.mxu0 %v798
        %800 = vmatprep.subr.mxu0 0.0
        %v801 = vand.u32 %v212, 4294901760
        %802 = vmatpush1.msra.mxu0 %v801
        %803 = vmatprep.subr.mxu0 0.0
        %v804 = vand.u32 %v213, 4294901760
        %805 = vmatpush1.msra.mxu0 %v804
        %806 = vmatprep.subr.mxu0 0.0
        %v807 = vand.u32 %v214, 4294901760
        %808 = vmatpush1.msra.mxu0 %v807
        %809 = vmatprep.subr.mxu0 0.0
        %v810 = vand.u32 %v215, 4294901760
        %811 = vmatpush1.msra.mxu0 %v810
        %812 = vmatprep.subr.mxu0 0.0
        %v813 = vand.u32 %v216, 4294901760
        %814 = vmatpush1.msra.mxu0 %v813
        %815 = vmatprep.subr.mxu0 0.0
        %v816 = vand.u32 %v217, 4294901760
        %817 = vmatpush1.msra.mxu0 %v816
        %818 = vmatprep.subr.mxu0 0.0
        %v819 = vand.u32 %v218, 4294901760
        %820 = vmatpush1.msra.mxu0 %v819
        %821 = vmatprep.subr.mxu0 0.0
        %822 = vmatpush1.msra.mxu0 0.0
        %823 = vmatprep.subr.mxu0 0.0
        %824 = vmatpush1.msra.mxu0 0.0
        %825 = vmatprep.subr.mxu0 0.0
        %826 = vmatpush1.msra.mxu0 0.0
        %827 = vmatprep.subr.mxu0 0.0
        %828 = vmatpush1.msra.mxu0 0.0
        %829 = vmatprep.subr.mxu0 0.0
        %830 = vmatpush1.msra.mxu0 0.0
        %831 = vmatprep.subr.mxu0 0.0
        %832 = vmatpush1.msra.mxu0 0.0
        %833 = vmatprep.subr.mxu0 0.0
        %834 = vmatpush1.msra.mxu0 0.0
        %835 = vmatprep.subr.mxu0 0.0
        %836 = vmatpush1.msra.mxu0 0.0
        %837 = vmatprep.subr.mxu0 0.0
        %838 = vmatpush1.msra.mxu0 0.0
        %839 = vmatprep.subr.mxu0 0.0
        %840 = vmatpush1.msra.mxu0 0.0
        %841 = vmatprep.subr.mxu0 0.0
        %842 = vmatpush1.msra.mxu0 0.0
        %843 = vmatprep.subr.mxu0 0.0
        %844 = vmatpush1.msra.mxu0 0.0
        %845 = vmatprep.subr.mxu0 0.0
        %846 = vmatpush1.msra.mxu0 0.0
        %847 = vmatprep.subr.mxu0 0.0
        %848 = vmatpush1.msra.mxu0 0.0
        %849 = vmatprep.subr.mxu0 0.0
        %850 = vmatpush1.msra.mxu0 0.0
        %851 = vmatprep.subr.mxu0 0.0
        %852 = vmatpush1.msra.mxu0 0.0
        %853 = vmatprep.mubr.f32.mxu0 0.0
        %v854 = vand.u32 %v202, 4294901760
        %855 = vmatmul.mubr.f32.gmra.mrb[0].mxu0 %v854
        %v856 = vpop.f32.mrb[0].mxu0
        %v857 = vadd.f32 %v770, %v856
        %v858 = vpop.f32.mrb[0].mxu0
        %859 = vdwg.mxu0
        %860 = vmatprep.subr.mxu0 0.0
        %v861 = vand.u32 %v181, 4294901760
        %862 = vmatpush1.msra.mxu0 %v861
        %863 = vmatprep.subr.mxu0 0.0
        %v864 = vand.u32 %v182, 4294901760
        %865 = vmatpush1.msra.mxu0 %v864
        %866 = vmatprep.subr.mxu0 0.0
        %v867 = vand.u32 %v183, 4294901760
        %868 = vmatpush1.msra.mxu0 %v867
        %869 = vmatprep.subr.mxu0 0.0
        %v870 = vand.u32 %v184, 4294901760
        %871 = vmatpush1.msra.mxu0 %v870
        %872 = vmatprep.subr.mxu0 0.0
        %v873 = vand.u32 %v185, 4294901760
        %874 = vmatpush1.msra.mxu0 %v873
        %875 = vmatprep.subr.mxu0 0.0
        %v876 = vand.u32 %v186, 4294901760
        %877 = vmatpush1.msra.mxu0 %v876
        %878 = vmatprep.subr.mxu0 0.0
        %v879 = vand.u32 %v187, 4294901760
        %880 = vmatpush1.msra.mxu0 %v879
        %881 = vmatprep.subr.mxu0 0.0
        %v882 = vand.u32 %v188, 4294901760
        %883 = vmatpush1.msra.mxu0 %v882
        %884 = vmatprep.subr.mxu0 0.0
        %v885 = vand.u32 %v189, 4294901760
        %886 = vmatpush1.msra.mxu0 %v885
        %887 = vmatprep.subr.mxu0 0.0
        %v888 = vand.u32 %v190, 4294901760
        %889 = vmatpush1.msra.mxu0 %v888
        %890 = vmatprep.subr.mxu0 0.0
        %v891 = vand.u32 %v191, 4294901760
        %892 = vmatpush1.msra.mxu0 %v891
        %893 = vmatprep.subr.mxu0 0.0
        %v894 = vand.u32 %v192, 4294901760
        %895 = vmatpush1.msra.mxu0 %v894
        %896 = vmatprep.subr.mxu0 0.0
        %v897 = vand.u32 %v193, 4294901760
        %898 = vmatpush1.msra.mxu0 %v897
        %899 = vmatprep.subr.mxu0 0.0
        %v900 = vand.u32 %v194, 4294901760
        %901 = vmatpush1.msra.mxu0 %v900
        %902 = vmatprep.subr.mxu0 0.0
        %v903 = vand.u32 %v195, 4294901760
        %904 = vmatpush1.msra.mxu0 %v903
        %905 = vmatprep.subr.mxu0 0.0
        %v906 = vand.u32 %v196, 4294901760
        %907 = vmatpush1.msra.mxu0 %v906
        %908 = vmatprep.subr.mxu0 0.0
        %909 = vmatpush1.msra.mxu0 0.0
        %910 = vmatprep.subr.mxu0 0.0
        %911 = vmatpush1.msra.mxu0 0.0
        %912 = vmatprep.subr.mxu0 0.0
        %913 = vmatpush1.msra.mxu0 0.0
        %914 = vmatprep.subr.mxu0 0.0
        %915 = vmatpush1.msra.mxu0 0.0
        %916 = vmatprep.subr.mxu0 0.0
        %917 = vmatpush1.msra.mxu0 0.0
        %918 = vmatprep.subr.mxu0 0.0
        %919 = vmatpush1.msra.mxu0 0.0
        %920 = vmatprep.subr.mxu0 0.0
        %921 = vmatpush1.msra.mxu0 0.0
        %922 = vmatprep.subr.mxu0 0.0
        %923 = vmatpush1.msra.mxu0 0.0
        %924 = vmatprep.subr.mxu0 0.0
        %925 = vmatpush1.msra.mxu0 0.0
        %926 = vmatprep.subr.mxu0 0.0
        %927 = vmatpush1.msra.mxu0 0.0
        %928 = vmatprep.subr.mxu0 0.0
        %929 = vmatpush1.msra.mxu0 0.0
        %930 = vmatprep.subr.mxu0 0.0
        %931 = vmatpush1.msra.mxu0 0.0
        %932 = vmatprep.subr.mxu0 0.0
        %933 = vmatpush1.msra.mxu0 0.0
        %934 = vmatprep.subr.mxu0 0.0
        %935 = vmatpush1.msra.mxu0 0.0
        %936 = vmatprep.subr.mxu0 0.0
        %937 = vmatpush1.msra.mxu0 0.0
        %938 = vmatprep.subr.mxu0 0.0
        %939 = vmatpush1.msra.mxu0 0.0
        %940 = vmatprep.mubr.f32.mxu0 0.0
        %v941 = vand.u32 %v180, 4294901760
        %v942 = vsub.f32 %v180, %v941
        %v943 = vand.u32 %v942, 4294901760
        %v944 = vsub.f32 %v942, %v943
        %v945 = vand.u32 %v944, 4294901760
        %946 = vmatmul.mubr.f32.gmra.mrb[0].mxu0 %v945
        %v947 = vpop.f32.mrb[0].mxu0
        %v948 = vadd.f32 %v857, %v947
        %v949 = vpop.f32.mrb[0].mxu0
        %950 = vdwg.mxu0
        %951 = vmatprep.subr.mxu0 0.0
        %v952 = vand.u32 %v181, 4294901760
        %v953 = vsub.f32 %v181, %v952
        %v954 = vand.u32 %v953, 4294901760
        %v955 = vsub.f32 %v953, %v954
        %v956 = vand.u32 %v955, 4294901760
        %957 = vmatpush1.msra.mxu0 %v956
        %958 = vmatprep.subr.mxu0 0.0
        %v959 = vand.u32 %v182, 4294901760
        %v960 = vsub.f32 %v182, %v959
        %v961 = vand.u32 %v960, 4294901760
        %v962 = vsub.f32 %v960, %v961
        %v963 = vand.u32 %v962, 4294901760
        %964 = vmatpush1.msra.mxu0 %v963
        %965 = vmatprep.subr.mxu0 0.0
        %v966 = vand.u32 %v183, 4294901760
        %v967 = vsub.f32 %v183, %v966
        %v968 = vand.u32 %v967, 4294901760
        %v969 = vsub.f32 %v967, %v968
        %v970 = vand.u32 %v969, 4294901760
        %971 = vmatpush1.msra.mxu0 %v970
        %972 = vmatprep.subr.mxu0 0.0
        %v973 = vand.u32 %v184, 4294901760
        %v974 = vsub.f32 %v184, %v973
        %v975 = vand.u32 %v974, 4294901760
        %v976 = vsub.f32 %v974, %v975
        %v977 = vand.u32 %v976, 4294901760
        %978 = vmatpush1.msra.mxu0 %v977
        %979 = vmatprep.subr.mxu0 0.0
        %v980 = vand.u32 %v185, 4294901760
        %v981 = vsub.f32 %v185, %v980
        %v982 = vand.u32 %v981, 4294901760
        %v983 = vsub.f32 %v981, %v982
        %v984 = vand.u32 %v983, 4294901760
        %985 = vmatpush1.msra.mxu0 %v984
        %986 = vmatprep.subr.mxu0 0.0
        %v987 = vand.u32 %v186, 4294901760
        %v988 = vsub.f32 %v186, %v987
        %v989 = vand.u32 %v988, 4294901760
        %v990 = vsub.f32 %v988, %v989
        %v991 = vand.u32 %v990, 4294901760
        %992 = vmatpush1.msra.mxu0 %v991
        %993 = vmatprep.subr.mxu0 0.0
        %v994 = vand.u32 %v187, 4294901760
        %v995 = vsub.f32 %v187, %v994
        %v996 = vand.u32 %v995, 4294901760
        %v997 = vsub.f32 %v995, %v996
        %v998 = vand.u32 %v997, 4294901760
        %999 = vmatpush1.msra.mxu0 %v998
        %1000 = vmatprep.subr.mxu0 0.0
        %v1001 = vand.u32 %v188, 4294901760
        %v1002 = vsub.f32 %v188, %v1001
        %v1003 = vand.u32 %v1002, 4294901760
        %v1004 = vsub.f32 %v1002, %v1003
        %v1005 = vand.u32 %v1004, 4294901760
        %1006 = vmatpush1.msra.mxu0 %v1005
        %1007 = vmatprep.subr.mxu0 0.0
        %v1008 = vand.u32 %v189, 4294901760
        %v1009 = vsub.f32 %v189, %v1008
        %v1010 = vand.u32 %v1009, 4294901760
        %v1011 = vsub.f32 %v1009, %v1010
        %v1012 = vand.u32 %v1011, 4294901760
        %1013 = vmatpush1.msra.mxu0 %v1012
        %1014 = vmatprep.subr.mxu0 0.0
        %v1015 = vand.u32 %v190, 4294901760
        %v1016 = vsub.f32 %v190, %v1015
        %v1017 = vand.u32 %v1016, 4294901760
        %v1018 = vsub.f32 %v1016, %v1017
        %v1019 = vand.u32 %v1018, 4294901760
        %1020 = vmatpush1.msra.mxu0 %v1019
        %1021 = vmatprep.subr.mxu0 0.0
        %v1022 = vand.u32 %v191, 4294901760
        %v1023 = vsub.f32 %v191, %v1022
        %v1024 = vand.u32 %v1023, 4294901760
        %v1025 = vsub.f32 %v1023, %v1024
        %v1026 = vand.u32 %v1025, 4294901760
        %1027 = vmatpush1.msra.mxu0 %v1026
        %1028 = vmatprep.subr.mxu0 0.0
        %v1029 = vand.u32 %v192, 4294901760
        %v1030 = vsub.f32 %v192, %v1029
        %v1031 = vand.u32 %v1030, 4294901760
        %v1032 = vsub.f32 %v1030, %v1031
        %v1033 = vand.u32 %v1032, 4294901760
        %1034 = vmatpush1.msra.mxu0 %v1033
        %1035 = vmatprep.subr.mxu0 0.0
        %v1036 = vand.u32 %v193, 4294901760
        %v1037 = vsub.f32 %v193, %v1036
        %v1038 = vand.u32 %v1037, 4294901760
        %v1039 = vsub.f32 %v1037, %v1038
        %v1040 = vand.u32 %v1039, 4294901760
        %1041 = vmatpush1.msra.mxu0 %v1040
        %1042 = vmatprep.subr.mxu0 0.0
        %v1043 = vand.u32 %v194, 4294901760
        %v1044 = vsub.f32 %v194, %v1043
        %v1045 = vand.u32 %v1044, 4294901760
        %v1046 = vsub.f32 %v1044, %v1045
        %v1047 = vand.u32 %v1046, 4294901760
        %1048 = vmatpush1.msra.mxu0 %v1047
        %1049 = vmatprep.subr.mxu0 0.0
        %v1050 = vand.u32 %v195, 4294901760
        %v1051 = vsub.f32 %v195, %v1050
        %v1052 = vand.u32 %v1051, 4294901760
        %v1053 = vsub.f32 %v1051, %v1052
        %v1054 = vand.u32 %v1053, 4294901760
        %1055 = vmatpush1.msra.mxu0 %v1054
        %1056 = vmatprep.subr.mxu0 0.0
        %v1057 = vand.u32 %v196, 4294901760
        %v1058 = vsub.f32 %v196, %v1057
        %v1059 = vand.u32 %v1058, 4294901760
        %v1060 = vsub.f32 %v1058, %v1059
        %v1061 = vand.u32 %v1060, 4294901760
        %1062 = vmatpush1.msra.mxu0 %v1061
        %1063 = vmatprep.subr.mxu0 0.0
        %1064 = vmatpush1.msra.mxu0 0.0
        %1065 = vmatprep.subr.mxu0 0.0
        %1066 = vmatpush1.msra.mxu0 0.0
        %1067 = vmatprep.subr.mxu0 0.0
        %1068 = vmatpush1.msra.mxu0 0.0
        %1069 = vmatprep.subr.mxu0 0.0
        %1070 = vmatpush1.msra.mxu0 0.0
        %1071 = vmatprep.subr.mxu0 0.0
        %1072 = vmatpush1.msra.mxu0 0.0
        %1073 = vmatprep.subr.mxu0 0.0
        %1074 = vmatpush1.msra.mxu0 0.0
        %1075 = vmatprep.subr.mxu0 0.0
        %1076 = vmatpush1.msra.mxu0 0.0
        %1077 = vmatprep.subr.mxu0 0.0
        %1078 = vmatpush1.msra.mxu0 0.0
        %1079 = vmatprep.subr.mxu0 0.0
        %1080 = vmatpush1.msra.mxu0 0.0
        %1081 = vmatprep.subr.mxu0 0.0
        %1082 = vmatpush1.msra.mxu0 0.0
        %1083 = vmatprep.subr.mxu0 0.0
        %1084 = vmatpush1.msra.mxu0 0.0
        %1085 = vmatprep.subr.mxu0 0.0
        %1086 = vmatpush1.msra.mxu0 0.0
        %1087 = vmatprep.subr.mxu0 0.0
        %1088 = vmatpush1.msra.mxu0 0.0
        %1089 = vmatprep.subr.mxu0 0.0
        %1090 = vmatpush1.msra.mxu0 0.0
        %1091 = vmatprep.subr.mxu0 0.0
        %1092 = vmatpush1.msra.mxu0 0.0
        %1093 = vmatprep.subr.mxu0 0.0
        %1094 = vmatpush1.msra.mxu0 0.0
        %1095 = vmatprep.mubr.f32.mxu0 0.0
        %v1096 = vand.u32 %v180, 4294901760
        %1097 = vmatmul.mubr.f32.gmra.mrb[0].mxu0 %v1096
        %v1098 = vpop.f32.mrb[0].mxu0
        %v1099 = vadd.f32 %v948, %v1098
        %v1100 = vpop.f32.mrb[0].mxu0
        %1101 = vdwg.mxu0
        %1102 = vmatprep.subr.mxu0 0.0
        %v1103 = vand.u32 %v181, 4294901760
        %v1104 = vsub.f32 %v181, %v1103
        %1105 = vmatpush1.msra.mxu0 %v1104
        %1106 = vmatprep.subr.mxu0 0.0
        %v1107 = vand.u32 %v182, 4294901760
        %v1108 = vsub.f32 %v182, %v1107
        %1109 = vmatpush1.msra.mxu0 %v1108
        %1110 = vmatprep.subr.mxu0 0.0
        %v1111 = vand.u32 %v183, 4294901760
        %v1112 = vsub.f32 %v183, %v1111
        %1113 = vmatpush1.msra.mxu0 %v1112
        %1114 = vmatprep.subr.mxu0 0.0
        %v1115 = vand.u32 %v184, 4294901760
        %v1116 = vsub.f32 %v184, %v1115
        %1117 = vmatpush1.msra.mxu0 %v1116
        %1118 = vmatprep.subr.mxu0 0.0
        %v1119 = vand.u32 %v185, 4294901760
        %v1120 = vsub.f32 %v185, %v1119
        %1121 = vmatpush1.msra.mxu0 %v1120
        %1122 = vmatprep.subr.mxu0 0.0
        %v1123 = vand.u32 %v186, 4294901760
        %v1124 = vsub.f32 %v186, %v1123
        %1125 = vmatpush1.msra.mxu0 %v1124
        %1126 = vmatprep.subr.mxu0 0.0
        %v1127 = vand.u32 %v187, 4294901760
        %v1128 = vsub.f32 %v187, %v1127
        %1129 = vmatpush1.msra.mxu0 %v1128
        %1130 = vmatprep.subr.mxu0 0.0
        %v1131 = vand.u32 %v188, 4294901760
        %v1132 = vsub.f32 %v188, %v1131
        %1133 = vmatpush1.msra.mxu0 %v1132
        %1134 = vmatprep.subr.mxu0 0.0
        %v1135 = vand.u32 %v189, 4294901760
        %v1136 = vsub.f32 %v189, %v1135
        %1137 = vmatpush1.msra.mxu0 %v1136
        %1138 = vmatprep.subr.mxu0 0.0
        %v1139 = vand.u32 %v190, 4294901760
        %v1140 = vsub.f32 %v190, %v1139
        %1141 = vmatpush1.msra.mxu0 %v1140
        %1142 = vmatprep.subr.mxu0 0.0
        %v1143 = vand.u32 %v191, 4294901760
        %v1144 = vsub.f32 %v191, %v1143
        %1145 = vmatpush1.msra.mxu0 %v1144
        %1146 = vmatprep.subr.mxu0 0.0
        %v1147 = vand.u32 %v192, 4294901760
        %v1148 = vsub.f32 %v192, %v1147
        %1149 = vmatpush1.msra.mxu0 %v1148
        %1150 = vmatprep.subr.mxu0 0.0
        %v1151 = vand.u32 %v193, 4294901760
        %v1152 = vsub.f32 %v193, %v1151
        %1153 = vmatpush1.msra.mxu0 %v1152
        %1154 = vmatprep.subr.mxu0 0.0
        %v1155 = vand.u32 %v194, 4294901760
        %v1156 = vsub.f32 %v194, %v1155
        %1157 = vmatpush1.msra.mxu0 %v1156
        %1158 = vmatprep.subr.mxu0 0.0
        %v1159 = vand.u32 %v195, 4294901760
        %v1160 = vsub.f32 %v195, %v1159
        %1161 = vmatpush1.msra.mxu0 %v1160
        %1162 = vmatprep.subr.mxu0 0.0
        %v1163 = vand.u32 %v196, 4294901760
        %v1164 = vsub.f32 %v196, %v1163
        %1165 = vmatpush1.msra.mxu0 %v1164
        %1166 = vmatprep.subr.mxu0 0.0
        %1167 = vmatpush1.msra.mxu0 0.0
        %1168 = vmatprep.subr.mxu0 0.0
        %1169 = vmatpush1.msra.mxu0 0.0
        %1170 = vmatprep.subr.mxu0 0.0
        %1171 = vmatpush1.msra.mxu0 0.0
        %1172 = vmatprep.subr.mxu0 0.0
        %1173 = vmatpush1.msra.mxu0 0.0
        %1174 = vmatprep.subr.mxu0 0.0
        %1175 = vmatpush1.msra.mxu0 0.0
        %1176 = vmatprep.subr.mxu0 0.0
        %1177 = vmatpush1.msra.mxu0 0.0
        %1178 = vmatprep.subr.mxu0 0.0
        %1179 = vmatpush1.msra.mxu0 0.0
        %1180 = vmatprep.subr.mxu0 0.0
        %1181 = vmatpush1.msra.mxu0 0.0
        %1182 = vmatprep.subr.mxu0 0.0
        %1183 = vmatpush1.msra.mxu0 0.0
        %1184 = vmatprep.subr.mxu0 0.0
        %1185 = vmatpush1.msra.mxu0 0.0
        %1186 = vmatprep.subr.mxu0 0.0
        %1187 = vmatpush1.msra.mxu0 0.0
        %1188 = vmatprep.subr.mxu0 0.0
        %1189 = vmatpush1.msra.mxu0 0.0
        %1190 = vmatprep.subr.mxu0 0.0
        %1191 = vmatpush1.msra.mxu0 0.0
        %1192 = vmatprep.subr.mxu0 0.0
        %1193 = vmatpush1.msra.mxu0 0.0
        %1194 = vmatprep.subr.mxu0 0.0
        %1195 = vmatpush1.msra.mxu0 0.0
        %1196 = vmatprep.subr.mxu0 0.0
        %1197 = vmatpush1.msra.mxu0 0.0
        %1198 = vmatprep.mubr.f32.mxu0 0.0
        %v1199 = vand.u32 %v180, 4294901760
        %v1200 = vsub.f32 %v180, %v1199
        %1201 = vmatmul.mubr.f32.gmra.mrb[0].mxu0 %v1200
        %v1202 = vpop.f32.mrb[0].mxu0
        %v1203 = vadd.f32 %v1099, %v1202
        %v1204 = vpop.f32.mrb[0].mxu0
        %1205 = vdwg.mxu0
        %1206 = vmatprep.subr.mxu0 0.0
        %v1207 = vand.u32 %v181, 4294901760
        %1208 = vmatpush1.msra.mxu0 %v1207
        %1209 = vmatprep.subr.mxu0 0.0
        %v1210 = vand.u32 %v182, 4294901760
        %1211 = vmatpush1.msra.mxu0 %v1210
        %1212 = vmatprep.subr.mxu0 0.0
        %v1213 = vand.u32 %v183, 4294901760
        %1214 = vmatpush1.msra.mxu0 %v1213
        %1215 = vmatprep.subr.mxu0 0.0
        %v1216 = vand.u32 %v184, 4294901760
        %1217 = vmatpush1.msra.mxu0 %v1216
        %1218 = vmatprep.subr.mxu0 0.0
        %v1219 = vand.u32 %v185, 4294901760
        %1220 = vmatpush1.msra.mxu0 %v1219
        %1221 = vmatprep.subr.mxu0 0.0
        %v1222 = vand.u32 %v186, 4294901760
        %1223 = vmatpush1.msra.mxu0 %v1222
        %1224 = vmatprep.subr.mxu0 0.0
        %v1225 = vand.u32 %v187, 4294901760
        %1226 = vmatpush1.msra.mxu0 %v1225
        %1227 = vmatprep.subr.mxu0 0.0
        %v1228 = vand.u32 %v188, 4294901760
        %1229 = vmatpush1.msra.mxu0 %v1228
        %1230 = vmatprep.subr.mxu0 0.0
        %v1231 = vand.u32 %v189, 4294901760
        %1232 = vmatpush1.msra.mxu0 %v1231
        %1233 = vmatprep.subr.mxu0 0.0
        %v1234 = vand.u32 %v190, 4294901760
        %1235 = vmatpush1.msra.mxu0 %v1234
        %1236 = vmatprep.subr.mxu0 0.0
        %v1237 = vand.u32 %v191, 4294901760
        %1238 = vmatpush1.msra.mxu0 %v1237
        %1239 = vmatprep.subr.mxu0 0.0
        %v1240 = vand.u32 %v192, 4294901760
        %1241 = vmatpush1.msra.mxu0 %v1240
        %1242 = vmatprep.subr.mxu0 0.0
        %v1243 = vand.u32 %v193, 4294901760
        %1244 = vmatpush1.msra.mxu0 %v1243
        %1245 = vmatprep.subr.mxu0 0.0
        %v1246 = vand.u32 %v194, 4294901760
        %1247 = vmatpush1.msra.mxu0 %v1246
        %1248 = vmatprep.subr.mxu0 0.0
        %v1249 = vand.u32 %v195, 4294901760
        %1250 = vmatpush1.msra.mxu0 %v1249
        %1251 = vmatprep.subr.mxu0 0.0
        %v1252 = vand.u32 %v196, 4294901760
        %1253 = vmatpush1.msra.mxu0 %v1252
        %1254 = vmatprep.subr.mxu0 0.0
        %1255 = vmatpush1.msra.mxu0 0.0
        %1256 = vmatprep.subr.mxu0 0.0
        %1257 = vmatpush1.msra.mxu0 0.0
        %1258 = vmatprep.subr.mxu0 0.0
        %1259 = vmatpush1.msra.mxu0 0.0
        %1260 = vmatprep.subr.mxu0 0.0
        %1261 = vmatpush1.msra.mxu0 0.0
        %1262 = vmatprep.subr.mxu0 0.0
        %1263 = vmatpush1.msra.mxu0 0.0
        %1264 = vmatprep.subr.mxu0 0.0
        %1265 = vmatpush1.msra.mxu0 0.0
        %1266 = vmatprep.subr.mxu0 0.0
        %1267 = vmatpush1.msra.mxu0 0.0
        %1268 = vmatprep.subr.mxu0 0.0
        %1269 = vmatpush1.msra.mxu0 0.0
        %1270 = vmatprep.subr.mxu0 0.0
        %1271 = vmatpush1.msra.mxu0 0.0
        %1272 = vmatprep.subr.mxu0 0.0
        %1273 = vmatpush1.msra.mxu0 0.0
        %1274 = vmatprep.subr.mxu0 0.0
        %1275 = vmatpush1.msra.mxu0 0.0
        %1276 = vmatprep.subr.mxu0 0.0
        %1277 = vmatpush1.msra.mxu0 0.0
        %1278 = vmatprep.subr.mxu0 0.0
        %1279 = vmatpush1.msra.mxu0 0.0
        %1280 = vmatprep.subr.mxu0 0.0
        %1281 = vmatpush1.msra.mxu0 0.0
        %1282 = vmatprep.subr.mxu0 0.0
        %1283 = vmatpush1.msra.mxu0 0.0
        %1284 = vmatprep.subr.mxu0 0.0
        %1285 = vmatpush1.msra.mxu0 0.0
        %1286 = vmatprep.mubr.f32.mxu0 0.0
        %v1287 = vand.u32 %v180, 4294901760
        %v1288 = vsub.f32 %v180, %v1287
        %v1289 = vand.u32 %v1288, 4294901760
        %1290 = vmatmul.mubr.f32.gmra.mrb[0].mxu0 %v1289
        %v1291 = vpop.f32.mrb[0].mxu0
        %v1292 = vadd.f32 %v1203, %v1291
        %v1293 = vpop.f32.mrb[0].mxu0
        %1294 = vdwg.mxu0
        %1295 = vmatprep.subr.mxu0 0.0
        %v1296 = vand.u32 %v181, 4294901760
        %v1297 = vsub.f32 %v181, %v1296
        %v1298 = vand.u32 %v1297, 4294901760
        %1299 = vmatpush1.msra.mxu0 %v1298
        %1300 = vmatprep.subr.mxu0 0.0
        %v1301 = vand.u32 %v182, 4294901760
        %v1302 = vsub.f32 %v182, %v1301
        %v1303 = vand.u32 %v1302, 4294901760
        %1304 = vmatpush1.msra.mxu0 %v1303
        %1305 = vmatprep.subr.mxu0 0.0
        %v1306 = vand.u32 %v183, 4294901760
        %v1307 = vsub.f32 %v183, %v1306
        %v1308 = vand.u32 %v1307, 4294901760
        %1309 = vmatpush1.msra.mxu0 %v1308
        %1310 = vmatprep.subr.mxu0 0.0
        %v1311 = vand.u32 %v184, 4294901760
        %v1312 = vsub.f32 %v184, %v1311
        %v1313 = vand.u32 %v1312, 4294901760
        %1314 = vmatpush1.msra.mxu0 %v1313
        %1315 = vmatprep.subr.mxu0 0.0
        %v1316 = vand.u32 %v185, 4294901760
        %v1317 = vsub.f32 %v185, %v1316
        %v1318 = vand.u32 %v1317, 4294901760
        %1319 = vmatpush1.msra.mxu0 %v1318
        %1320 = vmatprep.subr.mxu0 0.0
        %v1321 = vand.u32 %v186, 4294901760
        %v1322 = vsub.f32 %v186, %v1321
        %v1323 = vand.u32 %v1322, 4294901760
        %1324 = vmatpush1.msra.mxu0 %v1323
        %1325 = vmatprep.subr.mxu0 0.0
        %v1326 = vand.u32 %v187, 4294901760
        %v1327 = vsub.f32 %v187, %v1326
        %v1328 = vand.u32 %v1327, 4294901760
        %1329 = vmatpush1.msra.mxu0 %v1328
        %1330 = vmatprep.subr.mxu0 0.0
        %v1331 = vand.u32 %v188, 4294901760
        %v1332 = vsub.f32 %v188, %v1331
        %v1333 = vand.u32 %v1332, 4294901760
        %1334 = vmatpush1.msra.mxu0 %v1333
        %1335 = vmatprep.subr.mxu0 0.0
        %v1336 = vand.u32 %v189, 4294901760
        %v1337 = vsub.f32 %v189, %v1336
        %v1338 = vand.u32 %v1337, 4294901760
        %1339 = vmatpush1.msra.mxu0 %v1338
        %1340 = vmatprep.subr.mxu0 0.0
        %v1341 = vand.u32 %v190, 4294901760
        %v1342 = vsub.f32 %v190, %v1341
        %v1343 = vand.u32 %v1342, 4294901760
        %1344 = vmatpush1.msra.mxu0 %v1343
        %1345 = vmatprep.subr.mxu0 0.0
        %v1346 = vand.u32 %v191, 4294901760
        %v1347 = vsub.f32 %v191, %v1346
        %v1348 = vand.u32 %v1347, 4294901760
        %1349 = vmatpush1.msra.mxu0 %v1348
        %1350 = vmatprep.subr.mxu0 0.0
        %v1351 = vand.u32 %v192, 4294901760
        %v1352 = vsub.f32 %v192, %v1351
        %v1353 = vand.u32 %v1352, 4294901760
        %1354 = vmatpush1.msra.mxu0 %v1353
        %1355 = vmatprep.subr.mxu0 0.0
        %v1356 = vand.u32 %v193, 4294901760
        %v1357 = vsub.f32 %v193, %v1356
        %v1358 = vand.u32 %v1357, 4294901760
        %1359 = vmatpush1.msra.mxu0 %v1358
        %1360 = vmatprep.subr.mxu0 0.0
        %v1361 = vand.u32 %v194, 4294901760
        %v1362 = vsub.f32 %v194, %v1361
        %v1363 = vand.u32 %v1362, 4294901760
        %1364 = vmatpush1.msra.mxu0 %v1363
        %1365 = vmatprep.subr.mxu0 0.0
        %v1366 = vand.u32 %v195, 4294901760
        %v1367 = vsub.f32 %v195, %v1366
        %v1368 = vand.u32 %v1367, 4294901760
        %1369 = vmatpush1.msra.mxu0 %v1368
        %1370 = vmatprep.subr.mxu0 0.0
        %v1371 = vand.u32 %v196, 4294901760
        %v1372 = vsub.f32 %v196, %v1371
        %v1373 = vand.u32 %v1372, 4294901760
        %1374 = vmatpush1.msra.mxu0 %v1373
        %1375 = vmatprep.subr.mxu0 0.0
        %1376 = vmatpush1.msra.mxu0 0.0
        %1377 = vmatprep.subr.mxu0 0.0
        %1378 = vmatpush1.msra.mxu0 0.0
        %1379 = vmatprep.subr.mxu0 0.0
        %1380 = vmatpush1.msra.mxu0 0.0
        %1381 = vmatprep.subr.mxu0 0.0
        %1382 = vmatpush1.msra.mxu0 0.0
        %1383 = vmatprep.subr.mxu0 0.0
        %1384 = vmatpush1.msra.mxu0 0.0
        %1385 = vmatprep.subr.mxu0 0.0
        %1386 = vmatpush1.msra.mxu0 0.0
        %1387 = vmatprep.subr.mxu0 0.0
        %1388 = vmatpush1.msra.mxu0 0.0
        %1389 = vmatprep.subr.mxu0 0.0
        %1390 = vmatpush1.msra.mxu0 0.0
        %1391 = vmatprep.subr.mxu0 0.0
        %1392 = vmatpush1.msra.mxu0 0.0
        %1393 = vmatprep.subr.mxu0 0.0
        %1394 = vmatpush1.msra.mxu0 0.0
        %1395 = vmatprep.subr.mxu0 0.0
        %1396 = vmatpush1.msra.mxu0 0.0
        %1397 = vmatprep.subr.mxu0 0.0
        %1398 = vmatpush1.msra.mxu0 0.0
        %1399 = vmatprep.subr.mxu0 0.0
        %1400 = vmatpush1.msra.mxu0 0.0
        %1401 = vmatprep.subr.mxu0 0.0
        %1402 = vmatpush1.msra.mxu0 0.0
        %1403 = vmatprep.subr.mxu0 0.0
        %1404 = vmatpush1.msra.mxu0 0.0
        %1405 = vmatprep.subr.mxu0 0.0
        %1406 = vmatpush1.msra.mxu0 0.0
        %1407 = vmatprep.mubr.f32.mxu0 0.0
        %v1408 = vand.u32 %v180, 4294901760
        %1409 = vmatmul.mubr.f32.gmra.mrb[0].mxu0 %v1408
        %v1410 = vpop.f32.mrb[0].mxu0
        %v1411 = vadd.f32 %v1292, %v1410
        %v1412 = vpop.f32.mrb[0].mxu0
        %1413 = vdwg.mxu0
        %1414 = vmatprep.subr.mxu0 0.0
        %v1415 = vand.u32 %v181, 4294901760
        %1416 = vmatpush1.msra.mxu0 %v1415
        %1417 = vmatprep.subr.mxu0 0.0
        %v1418 = vand.u32 %v182, 4294901760
        %1419 = vmatpush1.msra.mxu0 %v1418
        %1420 = vmatprep.subr.mxu0 0.0
        %v1421 = vand.u32 %v183, 4294901760
        %1422 = vmatpush1.msra.mxu0 %v1421
        %1423 = vmatprep.subr.mxu0 0.0
        %v1424 = vand.u32 %v184, 4294901760
        %1425 = vmatpush1.msra.mxu0 %v1424
        %1426 = vmatprep.subr.mxu0 0.0
        %v1427 = vand.u32 %v185, 4294901760
        %1428 = vmatpush1.msra.mxu0 %v1427
        %1429 = vmatprep.subr.mxu0 0.0
        %v1430 = vand.u32 %v186, 4294901760
        %1431 = vmatpush1.msra.mxu0 %v1430
        %1432 = vmatprep.subr.mxu0 0.0
        %v1433 = vand.u32 %v187, 4294901760
        %1434 = vmatpush1.msra.mxu0 %v1433
        %1435 = vmatprep.subr.mxu0 0.0
        %v1436 = vand.u32 %v188, 4294901760
        %1437 = vmatpush1.msra.mxu0 %v1436
        %1438 = vmatprep.subr.mxu0 0.0
        %v1439 = vand.u32 %v189, 4294901760
        %1440 = vmatpush1.msra.mxu0 %v1439
        %1441 = vmatprep.subr.mxu0 0.0
        %v1442 = vand.u32 %v190, 4294901760
        %1443 = vmatpush1.msra.mxu0 %v1442
        %1444 = vmatprep.subr.mxu0 0.0
        %v1445 = vand.u32 %v191, 4294901760
        %1446 = vmatpush1.msra.mxu0 %v1445
        %1447 = vmatprep.subr.mxu0 0.0
        %v1448 = vand.u32 %v192, 4294901760
        %1449 = vmatpush1.msra.mxu0 %v1448
        %1450 = vmatprep.subr.mxu0 0.0
        %v1451 = vand.u32 %v193, 4294901760
        %1452 = vmatpush1.msra.mxu0 %v1451
        %1453 = vmatprep.subr.mxu0 0.0
        %v1454 = vand.u32 %v194, 4294901760
        %1455 = vmatpush1.msra.mxu0 %v1454
        %1456 = vmatprep.subr.mxu0 0.0
        %v1457 = vand.u32 %v195, 4294901760
        %1458 = vmatpush1.msra.mxu0 %v1457
        %1459 = vmatprep.subr.mxu0 0.0
        %v1460 = vand.u32 %v196, 4294901760
        %1461 = vmatpush1.msra.mxu0 %v1460
        %1462 = vmatprep.subr.mxu0 0.0
        %1463 = vmatpush1.msra.mxu0 0.0
        %1464 = vmatprep.subr.mxu0 0.0
        %1465 = vmatpush1.msra.mxu0 0.0
        %1466 = vmatprep.subr.mxu0 0.0
        %1467 = vmatpush1.msra.mxu0 0.0
        %1468 = vmatprep.subr.mxu0 0.0
        %1469 = vmatpush1.msra.mxu0 0.0
        %1470 = vmatprep.subr.mxu0 0.0
        %1471 = vmatpush1.msra.mxu0 0.0
        %1472 = vmatprep.subr.mxu0 0.0
        %1473 = vmatpush1.msra.mxu0 0.0
        %1474 = vmatprep.subr.mxu0 0.0
        %1475 = vmatpush1.msra.mxu0 0.0
        %1476 = vmatprep.subr.mxu0 0.0
        %1477 = vmatpush1.msra.mxu0 0.0
        %1478 = vmatprep.subr.mxu0 0.0
        %1479 = vmatpush1.msra.mxu0 0.0
        %1480 = vmatprep.subr.mxu0 0.0
        %1481 = vmatpush1.msra.mxu0 0.0
        %1482 = vmatprep.subr.mxu0 0.0
        %1483 = vmatpush1.msra.mxu0 0.0
        %1484 = vmatprep.subr.mxu0 0.0
        %1485 = vmatpush1.msra.mxu0 0.0
        %1486 = vmatprep.subr.mxu0 0.0
        %1487 = vmatpush1.msra.mxu0 0.0
        %1488 = vmatprep.subr.mxu0 0.0
        %1489 = vmatpush1.msra.mxu0 0.0
        %1490 = vmatprep.subr.mxu0 0.0
        %1491 = vmatpush1.msra.mxu0 0.0
        %1492 = vmatprep.subr.mxu0 0.0
        %1493 = vmatpush1.msra.mxu0 0.0
        %1494 = vmatprep.mubr.f32.mxu0 0.0
        %v1495 = vand.u32 %v180, 4294901760
        %1496 = vmatmul.mubr.f32.gmra.mrb[0].mxu0 %v1495
        %v1497 = vpop.f32.mrb[0].mxu0
        %v1498 = vadd.f32 %v1411, %v1497
        %v1499 = vpop.f32.mrb[0].mxu0
        %1500 = vdwg.mxu0
        %1501 = vset.pattern.permute.xlu0 5
        %1502 = vperm.xlu0 %1501, %v154
        %v1503 = vpop.permute.xlu0 %1502
        %vm1504 = vcmp.eq.s32.totalorder %v1503, %v156
        %v1505 = vsel %vm1504, 1, 0
        %v1506 = vcvt.s32.f32 %v1505
        %v1507 = vld [vmem:[#allocation2 + $0x100] sm:$0xff]
        %v1508 = vld [vmem:[#allocation2 + $0x108] sm:$0xff]
        %v1509 = vld [vmem:[#allocation2 + $0x110] sm:$0xff]
        %v1510 = vld [vmem:[#allocation2 + $0x118] sm:$0xff]
        %v1511 = vld [vmem:[#allocation2 + $0x120] sm:$0xff]
        %v1512 = vld [vmem:[#allocation2 + $0x128] sm:$0xff]
        %v1513 = vld [vmem:[#allocation2 + $0x130] sm:$0xff]
        %v1514 = vld [vmem:[#allocation2 + $0x138] sm:$0xff]
        %v1515 = vld [vmem:[#allocation2 + $0x140] sm:$0xff]
        %v1516 = vld [vmem:[#allocation2 + $0x148] sm:$0xff]
        %v1517 = vld [vmem:[#allocation2 + $0x150] sm:$0xff]
        %v1518 = vld [vmem:[#allocation2 + $0x158] sm:$0xff]
        %v1519 = vld [vmem:[#allocation2 + $0x160] sm:$0xff]
        %v1520 = vld [vmem:[#allocation2 + $0x168] sm:$0xff]
        %v1521 = vld [vmem:[#allocation2 + $0x170] sm:$0xff]
        %v1522 = vld [vmem:[#allocation2 + $0x178] sm:$0xff]
        %1523 = vmatprep.subr.mxu0 0.0
        %v1524 = vand.u32 %v1507, 4294901760
        %1525 = vmatpush1.msra.mxu0 %v1524
        %1526 = vmatprep.subr.mxu0 0.0
        %v1527 = vand.u32 %v1508, 4294901760
        %1528 = vmatpush1.msra.mxu0 %v1527
        %1529 = vmatprep.subr.mxu0 0.0
        %v1530 = vand.u32 %v1509, 4294901760
        %1531 = vmatpush1.msra.mxu0 %v1530
        %1532 = vmatprep.subr.mxu0 0.0
        %v1533 = vand.u32 %v1510, 4294901760
        %1534 = vmatpush1.msra.mxu0 %v1533
        %1535 = vmatprep.subr.mxu0 0.0
        %v1536 = vand.u32 %v1511, 4294901760
        %1537 = vmatpush1.msra.mxu0 %v1536
        %1538 = vmatprep.subr.mxu0 0.0
        %v1539 = vand.u32 %v1512, 4294901760
        %1540 = vmatpush1.msra.mxu0 %v1539
        %1541 = vmatprep.subr.mxu0 0.0
        %v1542 = vand.u32 %v1513, 4294901760
        %1543 = vmatpush1.msra.mxu0 %v1542
        %1544 = vmatprep.subr.mxu0 0.0
        %v1545 = vand.u32 %v1514, 4294901760
        %1546 = vmatpush1.msra.mxu0 %v1545
        %1547 = vmatprep.subr.mxu0 0.0
        %v1548 = vand.u32 %v1515, 4294901760
        %1549 = vmatpush1.msra.mxu0 %v1548
        %1550 = vmatprep.subr.mxu0 0.0
        %v1551 = vand.u32 %v1516, 4294901760
        %1552 = vmatpush1.msra.mxu0 %v1551
        %1553 = vmatprep.subr.mxu0 0.0
        %v1554 = vand.u32 %v1517, 4294901760
        %1555 = vmatpush1.msra.mxu0 %v1554
        %1556 = vmatprep.subr.mxu0 0.0
        %v1557 = vand.u32 %v1518, 4294901760
        %1558 = vmatpush1.msra.mxu0 %v1557
        %1559 = vmatprep.subr.mxu0 0.0
        %v1560 = vand.u32 %v1519, 4294901760
        %1561 = vmatpush1.msra.mxu0 %v1560
        %1562 = vmatprep.subr.mxu0 0.0
        %v1563 = vand.u32 %v1520, 4294901760
        %1564 = vmatpush1.msra.mxu0 %v1563
        %1565 = vmatprep.subr.mxu0 0.0
        %v1566 = vand.u32 %v1521, 4294901760
        %1567 = vmatpush1.msra.mxu0 %v1566
        %1568 = vmatprep.subr.mxu0 0.0
        %v1569 = vand.u32 %v1522, 4294901760
        %1570 = vmatpush1.msra.mxu0 %v1569
        %1571 = vmatprep.subr.mxu0 0.0
        %1572 = vmatpush1.msra.mxu0 0.0
        %1573 = vmatprep.subr.mxu0 0.0
        %1574 = vmatpush1.msra.mxu0 0.0
        %1575 = vmatprep.subr.mxu0 0.0
        %1576 = vmatpush1.msra.mxu0 0.0
        %1577 = vmatprep.subr.mxu0 0.0
        %1578 = vmatpush1.msra.mxu0 0.0
        %1579 = vmatprep.subr.mxu0 0.0
        %1580 = vmatpush1.msra.mxu0 0.0
        %1581 = vmatprep.subr.mxu0 0.0
        %1582 = vmatpush1.msra.mxu0 0.0
        %1583 = vmatprep.subr.mxu0 0.0
        %1584 = vmatpush1.msra.mxu0 0.0
        %1585 = vmatprep.subr.mxu0 0.0
        %1586 = vmatpush1.msra.mxu0 0.0
        %1587 = vmatprep.subr.mxu0 0.0
        %1588 = vmatpush1.msra.mxu0 0.0
        %1589 = vmatprep.subr.mxu0 0.0
        %1590 = vmatpush1.msra.mxu0 0.0
        %1591 = vmatprep.subr.mxu0 0.0
        %1592 = vmatpush1.msra.mxu0 0.0
        %1593 = vmatprep.subr.mxu0 0.0
        %1594 = vmatpush1.msra.mxu0 0.0
        %1595 = vmatprep.subr.mxu0 0.0
        %1596 = vmatpush1.msra.mxu0 0.0
        %1597 = vmatprep.subr.mxu0 0.0
        %1598 = vmatpush1.msra.mxu0 0.0
        %1599 = vmatprep.subr.mxu0 0.0
        %1600 = vmatpush1.msra.mxu0 0.0
        %1601 = vmatprep.subr.mxu0 0.0
        %1602 = vmatpush1.msra.mxu0 0.0
        %1603 = vmatprep.mubr.f32.mxu0 0.0
        %v1604 = vand.u32 %v1506, 4294901760
        %v1605 = vsub.f32 %v1506, %v1604
        %v1606 = vand.u32 %v1605, 4294901760
        %v1607 = vsub.f32 %v1605, %v1606
        %v1608 = vand.u32 %v1607, 4294901760
        %1609 = vmatmul.mubr.f32.gmra.mrb[0].mxu0 %v1608
        %v1610 = vpop.f32.mrb[0].mxu0
        %v1611 = vadd.f32 0.0, %v1610
        %v1612 = vpop.f32.mrb[0].mxu0
        %1613 = vdwg.mxu0
        %1614 = vmatprep.subr.mxu0 0.0
        %v1615 = vand.u32 %v1507, 4294901760
        %v1616 = vsub.f32 %v1507, %v1615
        %v1617 = vand.u32 %v1616, 4294901760
        %v1618 = vsub.f32 %v1616, %v1617
        %v1619 = vand.u32 %v1618, 4294901760
        %1620 = vmatpush1.msra.mxu0 %v1619
        %1621 = vmatprep.subr.mxu0 0.0
        %v1622 = vand.u32 %v1508, 4294901760
        %v1623 = vsub.f32 %v1508, %v1622
        %v1624 = vand.u32 %v1623, 4294901760
        %v1625 = vsub.f32 %v1623, %v1624
        %v1626 = vand.u32 %v1625, 4294901760
        %1627 = vmatpush1.msra.mxu0 %v1626
        %1628 = vmatprep.subr.mxu0 0.0
        %v1629 = vand.u32 %v1509, 4294901760
        %v1630 = vsub.f32 %v1509, %v1629
        %v1631 = vand.u32 %v1630, 4294901760
        %v1632 = vsub.f32 %v1630, %v1631
        %v1633 = vand.u32 %v1632, 4294901760
        %1634 = vmatpush1.msra.mxu0 %v1633
        %1635 = vmatprep.subr.mxu0 0.0
        %v1636 = vand.u32 %v1510, 4294901760
        %v1637 = vsub.f32 %v1510, %v1636
        %v1638 = vand.u32 %v1637, 4294901760
        %v1639 = vsub.f32 %v1637, %v1638
        %v1640 = vand.u32 %v1639, 4294901760
        %1641 = vmatpush1.msra.mxu0 %v1640
        %1642 = vmatprep.subr.mxu0 0.0
        %v1643 = vand.u32 %v1511, 4294901760
        %v1644 = vsub.f32 %v1511, %v1643
        %v1645 = vand.u32 %v1644, 4294901760
        %v1646 = vsub.f32 %v1644, %v1645
        %v1647 = vand.u32 %v1646, 4294901760
        %1648 = vmatpush1.msra.mxu0 %v1647
        %1649 = vmatprep.subr.mxu0 0.0
        %v1650 = vand.u32 %v1512, 4294901760
        %v1651 = vsub.f32 %v1512, %v1650
        %v1652 = vand.u32 %v1651, 4294901760
        %v1653 = vsub.f32 %v1651, %v1652
        %v1654 = vand.u32 %v1653, 4294901760
        %1655 = vmatpush1.msra.mxu0 %v1654
        %1656 = vmatprep.subr.mxu0 0.0
        %v1657 = vand.u32 %v1513, 4294901760
        %v1658 = vsub.f32 %v1513, %v1657
        %v1659 = vand.u32 %v1658, 4294901760
        %v1660 = vsub.f32 %v1658, %v1659
        %v1661 = vand.u32 %v1660, 4294901760
        %1662 = vmatpush1.msra.mxu0 %v1661
        %1663 = vmatprep.subr.mxu0 0.0
        %v1664 = vand.u32 %v1514, 4294901760
        %v1665 = vsub.f32 %v1514, %v1664
        %v1666 = vand.u32 %v1665, 4294901760
        %v1667 = vsub.f32 %v1665, %v1666
        %v1668 = vand.u32 %v1667, 4294901760
        %1669 = vmatpush1.msra.mxu0 %v1668
        %1670 = vmatprep.subr.mxu0 0.0
        %v1671 = vand.u32 %v1515, 4294901760
        %v1672 = vsub.f32 %v1515, %v1671
        %v1673 = vand.u32 %v1672, 4294901760
        %v1674 = vsub.f32 %v1672, %v1673
        %v1675 = vand.u32 %v1674, 4294901760
        %1676 = vmatpush1.msra.mxu0 %v1675
        %1677 = vmatprep.subr.mxu0 0.0
        %v1678 = vand.u32 %v1516, 4294901760
        %v1679 = vsub.f32 %v1516, %v1678
        %v1680 = vand.u32 %v1679, 4294901760
        %v1681 = vsub.f32 %v1679, %v1680
        %v1682 = vand.u32 %v1681, 4294901760
        %1683 = vmatpush1.msra.mxu0 %v1682
        %1684 = vmatprep.subr.mxu0 0.0
        %v1685 = vand.u32 %v1517, 4294901760
        %v1686 = vsub.f32 %v1517, %v1685
        %v1687 = vand.u32 %v1686, 4294901760
        %v1688 = vsub.f32 %v1686, %v1687
        %v1689 = vand.u32 %v1688, 4294901760
        %1690 = vmatpush1.msra.mxu0 %v1689
        %1691 = vmatprep.subr.mxu0 0.0
        %v1692 = vand.u32 %v1518, 4294901760
        %v1693 = vsub.f32 %v1518, %v1692
        %v1694 = vand.u32 %v1693, 4294901760
        %v1695 = vsub.f32 %v1693, %v1694
        %v1696 = vand.u32 %v1695, 4294901760
        %1697 = vmatpush1.msra.mxu0 %v1696
        %1698 = vmatprep.subr.mxu0 0.0
        %v1699 = vand.u32 %v1519, 4294901760
        %v1700 = vsub.f32 %v1519, %v1699
        %v1701 = vand.u32 %v1700, 4294901760
        %v1702 = vsub.f32 %v1700, %v1701
        %v1703 = vand.u32 %v1702, 4294901760
        %1704 = vmatpush1.msra.mxu0 %v1703
        %1705 = vmatprep.subr.mxu0 0.0
        %v1706 = vand.u32 %v1520, 4294901760
        %v1707 = vsub.f32 %v1520, %v1706
        %v1708 = vand.u32 %v1707, 4294901760
        %v1709 = vsub.f32 %v1707, %v1708
        %v1710 = vand.u32 %v1709, 4294901760
        %1711 = vmatpush1.msra.mxu0 %v1710
        %1712 = vmatprep.subr.mxu0 0.0
        %v1713 = vand.u32 %v1521, 4294901760
        %v1714 = vsub.f32 %v1521, %v1713
        %v1715 = vand.u32 %v1714, 4294901760
        %v1716 = vsub.f32 %v1714, %v1715
        %v1717 = vand.u32 %v1716, 4294901760
        %1718 = vmatpush1.msra.mxu0 %v1717
        %1719 = vmatprep.subr.mxu0 0.0
        %v1720 = vand.u32 %v1522, 4294901760
        %v1721 = vsub.f32 %v1522, %v1720
        %v1722 = vand.u32 %v1721, 4294901760
        %v1723 = vsub.f32 %v1721, %v1722
        %v1724 = vand.u32 %v1723, 4294901760
        %1725 = vmatpush1.msra.mxu0 %v1724
        %1726 = vmatprep.subr.mxu0 0.0
        %1727 = vmatpush1.msra.mxu0 0.0
        %1728 = vmatprep.subr.mxu0 0.0
        %1729 = vmatpush1.msra.mxu0 0.0
        %1730 = vmatprep.subr.mxu0 0.0
        %1731 = vmatpush1.msra.mxu0 0.0
        %1732 = vmatprep.subr.mxu0 0.0
        %1733 = vmatpush1.msra.mxu0 0.0
        %1734 = vmatprep.subr.mxu0 0.0
        %1735 = vmatpush1.msra.mxu0 0.0
        %1736 = vmatprep.subr.mxu0 0.0
        %1737 = vmatpush1.msra.mxu0 0.0
        %1738 = vmatprep.subr.mxu0 0.0
        %1739 = vmatpush1.msra.mxu0 0.0
        %1740 = vmatprep.subr.mxu0 0.0
        %1741 = vmatpush1.msra.mxu0 0.0
        %1742 = vmatprep.subr.mxu0 0.0
        %1743 = vmatpush1.msra.mxu0 0.0
        %1744 = vmatprep.subr.mxu0 0.0
        %1745 = vmatpush1.msra.mxu0 0.0
        %1746 = vmatprep.subr.mxu0 0.0
        %1747 = vmatpush1.msra.mxu0 0.0
        %1748 = vmatprep.subr.mxu0 0.0
        %1749 = vmatpush1.msra.mxu0 0.0
        %1750 = vmatprep.subr.mxu0 0.0
        %1751 = vmatpush1.msra.mxu0 0.0
        %1752 = vmatprep.subr.mxu0 0.0
        %1753 = vmatpush1.msra.mxu0 0.0
        %1754 = vmatprep.subr.mxu0 0.0
        %1755 = vmatpush1.msra.mxu0 0.0
        %1756 = vmatprep.subr.mxu0 0.0
        %1757 = vmatpush1.msra.mxu0 0.0
        %1758 = vmatprep.mubr.f32.mxu0 0.0
        %v1759 = vand.u32 %v1506, 4294901760
        %1760 = vmatmul.mubr.f32.gmra.mrb[0].mxu0 %v1759
        %v1761 = vpop.f32.mrb[0].mxu0
        %v1762 = vadd.f32 %v1611, %v1761
        %v1763 = vpop.f32.mrb[0].mxu0
        %1764 = vdwg.mxu0
        %1765 = vmatprep.subr.mxu0 0.0
        %v1766 = vand.u32 %v1507, 4294901760
        %v1767 = vsub.f32 %v1507, %v1766
        %1768 = vmatpush1.msra.mxu0 %v1767
        %1769 = vmatprep.subr.mxu0 0.0
        %v1770 = vand.u32 %v1508, 4294901760
        %v1771 = vsub.f32 %v1508, %v1770
        %1772 = vmatpush1.msra.mxu0 %v1771
        %1773 = vmatprep.subr.mxu0 0.0
        %v1774 = vand.u32 %v1509, 4294901760
        %v1775 = vsub.f32 %v1509, %v1774
        %1776 = vmatpush1.msra.mxu0 %v1775
        %1777 = vmatprep.subr.mxu0 0.0
        %v1778 = vand.u32 %v1510, 4294901760
        %v1779 = vsub.f32 %v1510, %v1778
        %1780 = vmatpush1.msra.mxu0 %v1779
        %1781 = vmatprep.subr.mxu0 0.0
        %v1782 = vand.u32 %v1511, 4294901760
        %v1783 = vsub.f32 %v1511, %v1782
        %1784 = vmatpush1.msra.mxu0 %v1783
        %1785 = vmatprep.subr.mxu0 0.0
        %v1786 = vand.u32 %v1512, 4294901760
        %v1787 = vsub.f32 %v1512, %v1786
        %1788 = vmatpush1.msra.mxu0 %v1787
        %1789 = vmatprep.subr.mxu0 0.0
        %v1790 = vand.u32 %v1513, 4294901760
        %v1791 = vsub.f32 %v1513, %v1790
        %1792 = vmatpush1.msra.mxu0 %v1791
        %1793 = vmatprep.subr.mxu0 0.0
        %v1794 = vand.u32 %v1514, 4294901760
        %v1795 = vsub.f32 %v1514, %v1794
        %1796 = vmatpush1.msra.mxu0 %v1795
        %1797 = vmatprep.subr.mxu0 0.0
        %v1798 = vand.u32 %v1515, 4294901760
        %v1799 = vsub.f32 %v1515, %v1798
        %1800 = vmatpush1.msra.mxu0 %v1799
        %1801 = vmatprep.subr.mxu0 0.0
        %v1802 = vand.u32 %v1516, 4294901760
        %v1803 = vsub.f32 %v1516, %v1802
        %1804 = vmatpush1.msra.mxu0 %v1803
        %1805 = vmatprep.subr.mxu0 0.0
        %v1806 = vand.u32 %v1517, 4294901760
        %v1807 = vsub.f32 %v1517, %v1806
        %1808 = vmatpush1.msra.mxu0 %v1807
        %1809 = vmatprep.subr.mxu0 0.0
        %v1810 = vand.u32 %v1518, 4294901760
        %v1811 = vsub.f32 %v1518, %v1810
        %1812 = vmatpush1.msra.mxu0 %v1811
        %1813 = vmatprep.subr.mxu0 0.0
        %v1814 = vand.u32 %v1519, 4294901760
        %v1815 = vsub.f32 %v1519, %v1814
        %1816 = vmatpush1.msra.mxu0 %v1815
        %1817 = vmatprep.subr.mxu0 0.0
        %v1818 = vand.u32 %v1520, 4294901760
        %v1819 = vsub.f32 %v1520, %v1818
        %1820 = vmatpush1.msra.mxu0 %v1819
        %1821 = vmatprep.subr.mxu0 0.0
        %v1822 = vand.u32 %v1521, 4294901760
        %v1823 = vsub.f32 %v1521, %v1822
        %1824 = vmatpush1.msra.mxu0 %v1823
        %1825 = vmatprep.subr.mxu0 0.0
        %v1826 = vand.u32 %v1522, 4294901760
        %v1827 = vsub.f32 %v1522, %v1826
        %1828 = vmatpush1.msra.mxu0 %v1827
        %1829 = vmatprep.subr.mxu0 0.0
        %1830 = vmatpush1.msra.mxu0 0.0
        %1831 = vmatprep.subr.mxu0 0.0
        %1832 = vmatpush1.msra.mxu0 0.0
        %1833 = vmatprep.subr.mxu0 0.0
        %1834 = vmatpush1.msra.mxu0 0.0
        %1835 = vmatprep.subr.mxu0 0.0
        %1836 = vmatpush1.msra.mxu0 0.0
        %1837 = vmatprep.subr.mxu0 0.0
        %1838 = vmatpush1.msra.mxu0 0.0
        %1839 = vmatprep.subr.mxu0 0.0
        %1840 = vmatpush1.msra.mxu0 0.0
        %1841 = vmatprep.subr.mxu0 0.0
        %1842 = vmatpush1.msra.mxu0 0.0
        %1843 = vmatprep.subr.mxu0 0.0
        %1844 = vmatpush1.msra.mxu0 0.0
        %1845 = vmatprep.subr.mxu0 0.0
        %1846 = vmatpush1.msra.mxu0 0.0
        %1847 = vmatprep.subr.mxu0 0.0
        %1848 = vmatpush1.msra.mxu0 0.0
        %1849 = vmatprep.subr.mxu0 0.0
        %1850 = vmatpush1.msra.mxu0 0.0
        %1851 = vmatprep.subr.mxu0 0.0
        %1852 = vmatpush1.msra.mxu0 0.0
        %1853 = vmatprep.subr.mxu0 0.0
        %1854 = vmatpush1.msra.mxu0 0.0
        %1855 = vmatprep.subr.mxu0 0.0
        %1856 = vmatpush1.msra.mxu0 0.0
        %1857 = vmatprep.subr.mxu0 0.0
        %1858 = vmatpush1.msra.mxu0 0.0
        %1859 = vmatprep.subr.mxu0 0.0
        %1860 = vmatpush1.msra.mxu0 0.0
        %1861 = vmatprep.mubr.f32.mxu0 0.0
        %v1862 = vand.u32 %v1506, 4294901760
        %v1863 = vsub.f32 %v1506, %v1862
        %1864 = vmatmul.mubr.f32.gmra.mrb[0].mxu0 %v1863
        %v1865 = vpop.f32.mrb[0].mxu0
        %v1866 = vadd.f32 %v1762, %v1865
        %v1867 = vpop.f32.mrb[0].mxu0
        %1868 = vdwg.mxu0
        %1869 = vmatprep.subr.mxu0 0.0
        %v1870 = vand.u32 %v1507, 4294901760
        %1871 = vmatpush1.msra.mxu0 %v1870
        %1872 = vmatprep.subr.mxu0 0.0
        %v1873 = vand.u32 %v1508, 4294901760
        %1874 = vmatpush1.msra.mxu0 %v1873
        %1875 = vmatprep.subr.mxu0 0.0
        %v1876 = vand.u32 %v1509, 4294901760
        %1877 = vmatpush1.msra.mxu0 %v1876
        %1878 = vmatprep.subr.mxu0 0.0
        %v1879 = vand.u32 %v1510, 4294901760
        %1880 = vmatpush1.msra.mxu0 %v1879
        %1881 = vmatprep.subr.mxu0 0.0
        %v1882 = vand.u32 %v1511, 4294901760
        %1883 = vmatpush1.msra.mxu0 %v1882
        %1884 = vmatprep.subr.mxu0 0.0
        %v1885 = vand.u32 %v1512, 4294901760
        %1886 = vmatpush1.msra.mxu0 %v1885
        %1887 = vmatprep.subr.mxu0 0.0
        %v1888 = vand.u32 %v1513, 4294901760
        %1889 = vmatpush1.msra.mxu0 %v1888
        %1890 = vmatprep.subr.mxu0 0.0
        %v1891 = vand.u32 %v1514, 4294901760
        %1892 = vmatpush1.msra.mxu0 %v1891
        %1893 = vmatprep.subr.mxu0 0.0
        %v1894 = vand.u32 %v1515, 4294901760
        %1895 = vmatpush1.msra.mxu0 %v1894
        %1896 = vmatprep.subr.mxu0 0.0
        %v1897 = vand.u32 %v1516, 4294901760
        %1898 = vmatpush1.msra.mxu0 %v1897
        %1899 = vmatprep.subr.mxu0 0.0
        %v1900 = vand.u32 %v1517, 4294901760
        %1901 = vmatpush1.msra.mxu0 %v1900
        %1902 = vmatprep.subr.mxu0 0.0
        %v1903 = vand.u32 %v1518, 4294901760
        %1904 = vmatpush1.msra.mxu0 %v1903
        %1905 = vmatprep.subr.mxu0 0.0
        %v1906 = vand.u32 %v1519, 4294901760
        %1907 = vmatpush1.msra.mxu0 %v1906
        %1908 = vmatprep.subr.mxu0 0.0
        %v1909 = vand.u32 %v1520, 4294901760
        %1910 = vmatpush1.msra.mxu0 %v1909
        %1911 = vmatprep.subr.mxu0 0.0
        %v1912 = vand.u32 %v1521, 4294901760
        %1913 = vmatpush1.msra.mxu0 %v1912
        %1914 = vmatprep.subr.mxu0 0.0
        %v1915 = vand.u32 %v1522, 4294901760
        %1916 = vmatpush1.msra.mxu0 %v1915
        %1917 = vmatprep.subr.mxu0 0.0
        %1918 = vmatpush1.msra.mxu0 0.0
        %1919 = vmatprep.subr.mxu0 0.0
        %1920 = vmatpush1.msra.mxu0 0.0
        %1921 = vmatprep.subr.mxu0 0.0
        %1922 = vmatpush1.msra.mxu0 0.0
        %1923 = vmatprep.subr.mxu0 0.0
        %1924 = vmatpush1.msra.mxu0 0.0
        %1925 = vmatprep.subr.mxu0 0.0
        %1926 = vmatpush1.msra.mxu0 0.0
        %1927 = vmatprep.subr.mxu0 0.0
        %1928 = vmatpush1.msra.mxu0 0.0
        %1929 = vmatprep.subr.mxu0 0.0
        %1930 = vmatpush1.msra.mxu0 0.0
        %1931 = vmatprep.subr.mxu0 0.0
        %1932 = vmatpush1.msra.mxu0 0.0
        %1933 = vmatprep.subr.mxu0 0.0
        %1934 = vmatpush1.msra.mxu0 0.0
        %1935 = vmatprep.subr.mxu0 0.0
        %1936 = vmatpush1.msra.mxu0 0.0
        %1937 = vmatprep.subr.mxu0 0.0
        %1938 = vmatpush1.msra.mxu0 0.0
        %1939 = vmatprep.subr.mxu0 0.0
        %1940 = vmatpush1.msra.mxu0 0.0
        %1941 = vmatprep.subr.mxu0 0.0
        %1942 = vmatpush1.msra.mxu0 0.0
        %1943 = vmatprep.subr.mxu0 0.0
        %1944 = vmatpush1.msra.mxu0 0.0
        %1945 = vmatprep.subr.mxu0 0.0
        %1946 = vmatpush1.msra.mxu0 0.0
        %1947 = vmatprep.subr.mxu0 0.0
        %1948 = vmatpush1.msra.mxu0 0.0
        %1949 = vmatprep.mubr.f32.mxu0 0.0
        %v1950 = vand.u32 %v1506, 4294901760
        %v1951 = vsub.f32 %v1506, %v1950
        %v1952 = vand.u32 %v1951, 4294901760
        %1953 = vmatmul.mubr.f32.gmra.mrb[0].mxu0 %v1952
        %v1954 = vpop.f32.mrb[0].mxu0
        %v1955 = vadd.f32 %v1866, %v1954
        %v1956 = vpop.f32.mrb[0].mxu0
        %1957 = vdwg.mxu0
        %1958 = vmatprep.subr.mxu0 0.0
        %v1959 = vand.u32 %v1507, 4294901760
        %v1960 = vsub.f32 %v1507, %v1959
        %v1961 = vand.u32 %v1960, 4294901760
        %1962 = vmatpush1.msra.mxu0 %v1961
        %1963 = vmatprep.subr.mxu0 0.0
        %v1964 = vand.u32 %v1508, 4294901760
        %v1965 = vsub.f32 %v1508, %v1964
        %v1966 = vand.u32 %v1965, 4294901760
        %1967 = vmatpush1.msra.mxu0 %v1966
        %1968 = vmatprep.subr.mxu0 0.0
        %v1969 = vand.u32 %v1509, 4294901760
        %v1970 = vsub.f32 %v1509, %v1969
        %v1971 = vand.u32 %v1970, 4294901760
        %1972 = vmatpush1.msra.mxu0 %v1971
        %1973 = vmatprep.subr.mxu0 0.0
        %v1974 = vand.u32 %v1510, 4294901760
        %v1975 = vsub.f32 %v1510, %v1974
        %v1976 = vand.u32 %v1975, 4294901760
        %1977 = vmatpush1.msra.mxu0 %v1976
        %1978 = vmatprep.subr.mxu0 0.0
        %v1979 = vand.u32 %v1511, 4294901760
        %v1980 = vsub.f32 %v1511, %v1979
        %v1981 = vand.u32 %v1980, 4294901760
        %1982 = vmatpush1.msra.mxu0 %v1981
        %1983 = vmatprep.subr.mxu0 0.0
        %v1984 = vand.u32 %v1512, 4294901760
        %v1985 = vsub.f32 %v1512, %v1984
        %v1986 = vand.u32 %v1985, 4294901760
        %1987 = vmatpush1.msra.mxu0 %v1986
        %1988 = vmatprep.subr.mxu0 0.0
        %v1989 = vand.u32 %v1513, 4294901760
        %v1990 = vsub.f32 %v1513, %v1989
        %v1991 = vand.u32 %v1990, 4294901760
        %1992 = vmatpush1.msra.mxu0 %v1991
        %1993 = vmatprep.subr.mxu0 0.0
        %v1994 = vand.u32 %v1514, 4294901760
        %v1995 = vsub.f32 %v1514, %v1994
        %v1996 = vand.u32 %v1995, 4294901760
        %1997 = vmatpush1.msra.mxu0 %v1996
        %1998 = vmatprep.subr.mxu0 0.0
        %v1999 = vand.u32 %v1515, 4294901760
        %v2000 = vsub.f32 %v1515, %v1999
        %v2001 = vand.u32 %v2000, 4294901760
        %2002 = vmatpush1.msra.mxu0 %v2001
        %2003 = vmatprep.subr.mxu0 0.0
        %v2004 = vand.u32 %v1516, 4294901760
        %v2005 = vsub.f32 %v1516, %v2004
        %v2006 = vand.u32 %v2005, 4294901760
        %2007 = vmatpush1.msra.mxu0 %v2006
        %2008 = vmatprep.subr.mxu0 0.0
        %v2009 = vand.u32 %v1517, 4294901760
        %v2010 = vsub.f32 %v1517, %v2009
        %v2011 = vand.u32 %v2010, 4294901760
        %2012 = vmatpush1.msra.mxu0 %v2011
        %2013 = vmatprep.subr.mxu0 0.0
        %v2014 = vand.u32 %v1518, 4294901760
        %v2015 = vsub.f32 %v1518, %v2014
        %v2016 = vand.u32 %v2015, 4294901760
        %2017 = vmatpush1.msra.mxu0 %v2016
        %2018 = vmatprep.subr.mxu0 0.0
        %v2019 = vand.u32 %v1519, 4294901760
        %v2020 = vsub.f32 %v1519, %v2019
        %v2021 = vand.u32 %v2020, 4294901760
        %2022 = vmatpush1.msra.mxu0 %v2021
        %2023 = vmatprep.subr.mxu0 0.0
        %v2024 = vand.u32 %v1520, 4294901760
        %v2025 = vsub.f32 %v1520, %v2024
        %v2026 = vand.u32 %v2025, 4294901760
        %2027 = vmatpush1.msra.mxu0 %v2026
        %2028 = vmatprep.subr.mxu0 0.0
        %v2029 = vand.u32 %v1521, 4294901760
        %v2030 = vsub.f32 %v1521, %v2029
        %v2031 = vand.u32 %v2030, 4294901760
        %2032 = vmatpush1.msra.mxu0 %v2031
        %2033 = vmatprep.subr.mxu0 0.0
        %v2034 = vand.u32 %v1522, 4294901760
        %v2035 = vsub.f32 %v1522, %v2034
        %v2036 = vand.u32 %v2035, 4294901760
        %2037 = vmatpush1.msra.mxu0 %v2036
        %2038 = vmatprep.subr.mxu0 0.0
        %2039 = vmatpush1.msra.mxu0 0.0
        %2040 = vmatprep.subr.mxu0 0.0
        %2041 = vmatpush1.msra.mxu0 0.0
        %2042 = vmatprep.subr.mxu0 0.0
        %2043 = vmatpush1.msra.mxu0 0.0
        %2044 = vmatprep.subr.mxu0 0.0
        %2045 = vmatpush1.msra.mxu0 0.0
        %2046 = vmatprep.subr.mxu0 0.0
        %2047 = vmatpush1.msra.mxu0 0.0
        %2048 = vmatprep.subr.mxu0 0.0
        %2049 = vmatpush1.msra.mxu0 0.0
        %2050 = vmatprep.subr.mxu0 0.0
        %2051 = vmatpush1.msra.mxu0 0.0
        %2052 = vmatprep.subr.mxu0 0.0
        %2053 = vmatpush1.msra.mxu0 0.0
        %2054 = vmatprep.subr.mxu0 0.0
        %2055 = vmatpush1.msra.mxu0 0.0
        %2056 = vmatprep.subr.mxu0 0.0
        %2057 = vmatpush1.msra.mxu0 0.0
        %2058 = vmatprep.subr.mxu0 0.0
        %2059 = vmatpush1.msra.mxu0 0.0
        %2060 = vmatprep.subr.mxu0 0.0
        %2061 = vmatpush1.msra.mxu0 0.0
        %2062 = vmatprep.subr.mxu0 0.0
        %2063 = vmatpush1.msra.mxu0 0.0
        %2064 = vmatprep.subr.mxu0 0.0
        %2065 = vmatpush1.msra.mxu0 0.0
        %2066 = vmatprep.subr.mxu0 0.0
        %2067 = vmatpush1.msra.mxu0 0.0
        %2068 = vmatprep.subr.mxu0 0.0
        %2069 = vmatpush1.msra.mxu0 0.0
        %2070 = vmatprep.mubr.f32.mxu0 0.0
        %v2071 = vand.u32 %v1506, 4294901760
        %2072 = vmatmul.mubr.f32.gmra.mrb[0].mxu0 %v2071
        %v2073 = vpop.f32.mrb[0].mxu0
        %v2074 = vadd.f32 %v1955, %v2073
        %v2075 = vpop.f32.mrb[0].mxu0
        %2076 = vdwg.mxu0
        %2077 = vmatprep.subr.mxu0 0.0
        %v2078 = vand.u32 %v1507, 4294901760
        %2079 = vmatpush1.msra.mxu0 %v2078
        %2080 = vmatprep.subr.mxu0 0.0
        %v2081 = vand.u32 %v1508, 4294901760
        %2082 = vmatpush1.msra.mxu0 %v2081
        %2083 = vmatprep.subr.mxu0 0.0
        %v2084 = vand.u32 %v1509, 4294901760
        %2085 = vmatpush1.msra.mxu0 %v2084
        %2086 = vmatprep.subr.mxu0 0.0
        %v2087 = vand.u32 %v1510, 4294901760
        %2088 = vmatpush1.msra.mxu0 %v2087
        %2089 = vmatprep.subr.mxu0 0.0
        %v2090 = vand.u32 %v1511, 4294901760
        %2091 = vmatpush1.msra.mxu0 %v2090
        %2092 = vmatprep.subr.mxu0 0.0
        %v2093 = vand.u32 %v1512, 4294901760
        %2094 = vmatpush1.msra.mxu0 %v2093
        %2095 = vmatprep.subr.mxu0 0.0
        %v2096 = vand.u32 %v1513, 4294901760
        %2097 = vmatpush1.msra.mxu0 %v2096
        %2098 = vmatprep.subr.mxu0 0.0
        %v2099 = vand.u32 %v1514, 4294901760
        %2100 = vmatpush1.msra.mxu0 %v2099
        %2101 = vmatprep.subr.mxu0 0.0
        %v2102 = vand.u32 %v1515, 4294901760
        %2103 = vmatpush1.msra.mxu0 %v2102
        %2104 = vmatprep.subr.mxu0 0.0
        %v2105 = vand.u32 %v1516, 4294901760
        %2106 = vmatpush1.msra.mxu0 %v2105
        %2107 = vmatprep.subr.mxu0 0.0
        %v2108 = vand.u32 %v1517, 4294901760
        %2109 = vmatpush1.msra.mxu0 %v2108
        %2110 = vmatprep.subr.mxu0 0.0
        %v2111 = vand.u32 %v1518, 4294901760
        %2112 = vmatpush1.msra.mxu0 %v2111
        %2113 = vmatprep.subr.mxu0 0.0
        %v2114 = vand.u32 %v1519, 4294901760
        %2115 = vmatpush1.msra.mxu0 %v2114
        %2116 = vmatprep.subr.mxu0 0.0
        %v2117 = vand.u32 %v1520, 4294901760
        %2118 = vmatpush1.msra.mxu0 %v2117
        %2119 = vmatprep.subr.mxu0 0.0
        %v2120 = vand.u32 %v1521, 4294901760
        %2121 = vmatpush1.msra.mxu0 %v2120
        %2122 = vmatprep.subr.mxu0 0.0
        %v2123 = vand.u32 %v1522, 4294901760
        %2124 = vmatpush1.msra.mxu0 %v2123
        %2125 = vmatprep.subr.mxu0 0.0
        %2126 = vmatpush1.msra.mxu0 0.0
        %2127 = vmatprep.subr.mxu0 0.0
        %2128 = vmatpush1.msra.mxu0 0.0
        %2129 = vmatprep.subr.mxu0 0.0
        %2130 = vmatpush1.msra.mxu0 0.0
        %2131 = vmatprep.subr.mxu0 0.0
        %2132 = vmatpush1.msra.mxu0 0.0
        %2133 = vmatprep.subr.mxu0 0.0
        %2134 = vmatpush1.msra.mxu0 0.0
        %2135 = vmatprep.subr.mxu0 0.0
        %2136 = vmatpush1.msra.mxu0 0.0
        %2137 = vmatprep.subr.mxu0 0.0
        %2138 = vmatpush1.msra.mxu0 0.0
        %2139 = vmatprep.subr.mxu0 0.0
        %2140 = vmatpush1.msra.mxu0 0.0
        %2141 = vmatprep.subr.mxu0 0.0
        %2142 = vmatpush1.msra.mxu0 0.0
        %2143 = vmatprep.subr.mxu0 0.0
        %2144 = vmatpush1.msra.mxu0 0.0
        %2145 = vmatprep.subr.mxu0 0.0
        %2146 = vmatpush1.msra.mxu0 0.0
        %2147 = vmatprep.subr.mxu0 0.0
        %2148 = vmatpush1.msra.mxu0 0.0
        %2149 = vmatprep.subr.mxu0 0.0
        %2150 = vmatpush1.msra.mxu0 0.0
        %2151 = vmatprep.subr.mxu0 0.0
        %2152 = vmatpush1.msra.mxu0 0.0
        %2153 = vmatprep.subr.mxu0 0.0
        %2154 = vmatpush1.msra.mxu0 0.0
        %2155 = vmatprep.subr.mxu0 0.0
        %2156 = vmatpush1.msra.mxu0 0.0
        %2157 = vmatprep.mubr.f32.mxu0 0.0
        %v2158 = vand.u32 %v1506, 4294901760
        %2159 = vmatmul.mubr.f32.gmra.mrb[0].mxu0 %v2158
        %v2160 = vpop.f32.mrb[0].mxu0
        %v2161 = vadd.f32 %v2074, %v2160
        %v2162 = vpop.f32.mrb[0].mxu0
        %2163 = vdwg.mxu0
        %v2164 = vadd.f32 %v1498, %v2161
        %2165 = vst [vmem:[%s149] sm:$0xff] %v2164
        %s2166 = sand.u32 %s72, 1
        %s2167 = scalar_lea.sflag [#allocation4], %s2166
        %s2168 = sand.u32 %s72, 1
        %s2169 = smul.addr %s2168, 8
        %s2170 = scalar_lea.vmem [#allocation5], %s2169
        // Predicated region
        $region33: #{tpu_custom_call.1} parent=27 // pred_check
          %p2171 = pneg %p82
        $region34: #{tpu_custom_call.1} parent=27 // pred_check_branch
          %2173 = sbr.rel (%p2171) target = $region36
        $region35: #{tpu_custom_call.1} parent=27 // pred_region
          %s2175 = ssub.s32 128, 128
          %2176 = vsyncadd %s2167, %s2175
          %s2177 = smul.addr %s17, 128
          %s2178 = scalar_lea.hbm %s2, %s2177
          %s2180 = sshll.u32 %s2170, 4
          %s2181 = int_to_ptr.vmem [resolvable:$true] %s2180
          %2183 = dma.vmem_to_hbm [thread:$0]  %s2181, 128, %s2178, %s2167
        $region36: #{tpu_custom_call.1} parent=27 // pred_fallthru
          _
      $region28: #{tpu_custom_call.1} parent=5 // pred_fallthru
        _
      %p2184 = scmp.le.s32.totalorder 2, %s12
      // Predicated region
      $region37: #{tpu_custom_call.1} parent=5 // pred_check
        %p2185 = pneg %p2184
      $region38: #{tpu_custom_call.1} parent=5 // pred_check_branch
        %2187 = sbr.rel (%p2185) target = $region40
      $region39: #{tpu_custom_call.1} parent=5 // pred_region
        %s2188 = ssub.s32 %s12, 2
        // Predicated region
        $region41: #{tpu_custom_call.1} parent=39 // pred_check
          %p2189 = pneg %p88
        $region42: #{tpu_custom_call.1} parent=39 // pred_check_branch
          %2191 = sbr.rel (%p2189) target = $region44
        $region43: #{tpu_custom_call.1} parent=39 // pred_region
          %s2192 = sand.u32 %s73, 1
          %s2193 = scalar_lea.sflag [#allocation4], %s2192
          %s2194 = sand.u32 %s73, 1
          %s2195 = smul.addr %s2194, 8
          %s2196 = scalar_lea.vmem [#allocation5], %s2195
          %2197 = dma.done %s2193, 128
        $region44: #{tpu_custom_call.1} parent=39 // pred_fallthru
          _
      $region40: #{tpu_custom_call.1} parent=5 // pred_fallthru
        _
    $region6: #{tpu_custom_call.1} parent=1 // loop_footer
      %s16 = sadd.s32 1, %s12
    $region7: #{tpu_custom_call.1} parent=1 // loop_footer_branch
      %11 = sbr.rel target = $region3
    $region8: #{tpu_custom_call.1} parent=1 // loop_exit
      _
    %2198 = vsyncpa [#allocation3], 1
    %s2199 = scalar_lea.sflag [#allocation3], 1
    %2200 = vsyncpa %s2199, 1
    %2201 = vsyncpa [#allocation4], 1
    %s2202 = scalar_lea.sflag [#allocation4], 1
    %2203 = vsyncpa %s2202, 1

// kernel: tpu_custom_call.1
$region0: #{tpu_custom_call.1}
  #allocation0 [shape = 'u32[]', space=smem, size = 0x4, offset = 0x4, fixed_abs, tag = 'smem constant byte address 0x4 - core index']
  #allocation1 [shape = 'u32[144,128]{1,0:T(1,128)}', space=vmem, size = 0x12000, scoped, tag = 'internal scratch']
  %s0 = inlined_call_operand.vmem [shape: s32[16,6], index: 0, kind: input, shape index: {}]
  %s1 = inlined_call_operand.hbm [shape: f32[384,128], index: 1, kind: input, shape index: {}]
  %s2 = inlined_call_operand.hbm [shape: f32[16,128], index: 2, kind: output, shape index: {}]
  %s3 = sld [smem:[#allocation0]]
  $region45: #{tpu_custom_call.1} parent=0
    _
  %s5 = ssub.s32 1, %s3
  %s6 = scalar_select 0, %s5, %s3
  $region1: #{tpu_custom_call.1} parent=0
    #allocation2 [shape = 'u8[196608]{0}', space=vmem, size = 0x30000, scoped, tag = 'input window, operand 1, single buffered']
    #allocation3 [shape = 's32[2]{0}', space=sflag, size = 0x8, scoped, tag = 'scoped memory for tpu_custom_call.1']
    #allocation4 [shape = 's32[2]{0}', space=sflag, size = 0x8, scoped, tag = 'scoped memory for tpu_custom_call.1']
    #allocation5 [shape = 'u8[8192]{0}', space=vmem, size = 0x2000, scoped, tag = 'output window, operand 0']
    %7 = vsyncpa [#allocation3], 0
    %8 = vsyncpa [#allocation4], 0
    %s9 = scalar_lea.sflag [#allocation4], 1
    %10 = vsyncpa %s9, 0
    loop: start=0, step=1, limit=4
    $region2: #{tpu_custom_call.1} parent=1 // loop_pre_header
      _
    $region3: #{tpu_custom_call.1} parent=1 // loop_header
      %s12 = sphi 0, %s16
      %p13 = scmp.ge.s32.totalorder %s12, 4
      %s22 = sphi 0, %s24
      %s25 = sphi 0, %s22
      %s26 = sphi 0, %s25
      %s42 = sphi 0, %s26
      %s46 = sphi 0, %s46
      %s48 = sphi 0, %s46
      %s49 = sphi 0, %s48
      %s63 = sphi 0, %s49
      %s69 = sphi 0, %s71
      %s72 = sphi 0, %s69
      %s73 = sphi 0, %s72
      %s89 = sphi 0, %s73
    $region4: #{tpu_custom_call.1} parent=1 // loop_header_branch
      %15 = sbr.rel (%p13) target = $region8
    $region5: #{tpu_custom_call.1} parent=1 // loop_body
      %s17 = ssub.s32 %s12, 1
      %s18 = ssub.s32 %s12, 2
      %s19 = sadd.s32 %s12, 1
      %s20 = ssub.s32 %s12, %s19
      %p21 = scmp.eq.s32.totalorder %s20, 0
      %s23 = sadd.s32 %s22, 1
      %s24 = scalar_select %p21, %s22, %s23
      %p27 = pneg %p21
      %p28 = scmp.eq.s32.totalorder %s12, 1
      %p29 = por %p27, %p28
      %p30 = scmp.ne.s32.totalorder %s22, %s25
      %p31 = scmp.eq.s32.totalorder %s12, 0
      %p32 = por %p30, %p31
      %p33 = scmp.ne.s32.totalorder %s22, %s25
      %p34 = scmp.eq.s32.totalorder %s17, 1
      %p35 = por %p33, %p34
      %p36 = scmp.ne.s32.totalorder %s25, %s26
      %p37 = scmp.eq.s32.totalorder %s17, 0
      %p38 = por %p36, %p37
      %p39 = scmp.ne.s32.totalorder %s25, %s26
      %p40 = scmp.eq.s32.totalorder %s18, 1
      %p41 = por %p39, %p40
      %p43 = scmp.ne.s32.totalorder %s26, %s42
      %p44 = scmp.eq.s32.totalorder %s18, 0
      %p45 = por %p43, %p44
      %s47 = sadd.s32 %s46, 1
      %p50 = scmp.eq.s32.totalorder %s12, 1
      %p51 = scmp.ne.s32.totalorder %s46, %s48
      %p52 = scmp.eq.s32.totalorder %s12, 0
      %p53 = por %p51, %p52
      %p54 = scmp.ne.s32.totalorder %s46, %s48
      %p55 = scmp.eq.s32.totalorder %s17, 1
      %p56 = por %p54, %p55
      %p57 = scmp.ne.s32.totalorder %s48, %s49
      %p58 = scmp.eq.s32.totalorder %s17, 0
      %p59 = por %p57, %p58
      %p60 = scmp.ne.s32.totalorder %s48, %s49
      %p61 = scmp.eq.s32.totalorder %s18, 1
      %p62 = por %p60, %p61
      %p64 = scmp.ne.s32.totalorder %s49, %s63
      %p65 = scmp.eq.s32.totalorder %s18, 0
      %p66 = por %p64, %p65
      %s67 = ssub.s32 %s12, %s19
      %p68 = scmp.eq.s32.totalorder %s67, 0
      %s70 = sadd.s32 %s69, 1
      %s71 = scalar_select %p68, %s69, %s70
      %p74 = pneg %p68
      %p75 = scmp.eq.s32.totalorder %s12, 1
      %p76 = por %p74, %p75
      %p77 = scmp.ne.s32.totalorder %s69, %s72
      %p78 = scmp.eq.s32.totalorder %s12, 0
      %p79 = por %p77, %p78
      %p80 = scmp.ne.s32.totalorder %s69, %s72
      %p81 = scmp.eq.s32.totalorder %s17, 1
      %p82 = por %p80, %p81
      %p83 = scmp.ne.s32.totalorder %s72, %s73
      %p84 = scmp.eq.s32.totalorder %s17, 0
      %p85 = por %p83, %p84
      %p86 = scmp.ne.s32.totalorder %s72, %s73
      %p87 = scmp.eq.s32.totalorder %s18, 1
      %p88 = por %p86, %p87
      %p90 = scmp.ne.s32.totalorder %s73, %s89
      %p91 = scmp.eq.s32.totalorder %s18, 0
      %p92 = por %p90, %p91
      %p93 = scmp.le.s32.totalorder 1, %s12
      %p94 = scmp.lt.s32.totalorder %s12, 3
      %p95 = pnand %p93, %p94
      %p96 = pneg %p95
      // Predicated region
      $region9: #{tpu_custom_call.1} parent=5 // pred_check
        _
      $region10: #{tpu_custom_call.1} parent=5 // pred_check_branch
        %98 = sbr.rel (%p95) target = $region12
      $region11: #{tpu_custom_call.1} parent=5 // pred_region
        %s99 = ssub.s32 %s12, 1
        // Predicated region
        $region13: #{tpu_custom_call.1} parent=11 // pred_check
          %p100 = pneg %p59
        $region14: #{tpu_custom_call.1} parent=11 // pred_check_branch
          %102 = sbr.rel (%p100) target = $region16
        $region15: #{tpu_custom_call.1} parent=11 // pred_region
          %s104 = ssub.s32 6144, 6144
          %105 = vsyncadd [#allocation3], %s104
          %s106 = sshll.u32 [#allocation2], 4
          %s107 = int_to_ptr.vmem [resolvable:$true] %s106
          %112 = dma.hbm_to_vmem [thread:$0]  %s1, 6144, %s107, [#allocation3], 128, 128, 8
        $region16: #{tpu_custom_call.1} parent=11 // pred_fallthru
          _
      $region12: #{tpu_custom_call.1} parent=5 // pred_fallthru
        _
      %p113 = scmp.lt.s32.totalorder %s12, 2
      // Predicated region
      $region17: #{tpu_custom_call.1} parent=5 // pred_check
        %p114 = pneg %p113
      $region18: #{tpu_custom_call.1} parent=5 // pred_check_branch
        %116 = sbr.rel (%p114) target = $region20
      $region19: #{tpu_custom_call.1} parent=5 // pred_region
        // Predicated region
        $region21: #{tpu_custom_call.1} parent=19 // pred_check
          %p117 = pneg %p32
        $region22: #{tpu_custom_call.1} parent=19 // pred_check_branch
          %119 = sbr.rel (%p117) target = $region24
        $region23: #{tpu_custom_call.1} parent=19 // pred_region
          %p120 = scmp.lt.s32.totalorder %s12, 1
          %s121 = scalar_select %p120, %s12, 1
          %s122 = smul.addr %s121, 8
          %s123 = scalar_lea.vmem %s0, %s122
        $region24: #{tpu_custom_call.1} parent=19 // pred_fallthru
          _
      $region20: #{tpu_custom_call.1} parent=5 // pred_fallthru
        _
      %p124 = scmp.le.s32.totalorder 1, %s12
      %p125 = scmp.lt.s32.totalorder %s12, 3
      %p126 = pnand %p124, %p125
      %p127 = pneg %p126
      // Predicated region
      $region25: #{tpu_custom_call.1} parent=5 // pred_check
        _
      $region26: #{tpu_custom_call.1} parent=5 // pred_check_branch
        %129 = sbr.rel (%p126) target = $region28
      $region27: #{tpu_custom_call.1} parent=5 // pred_region
        %s130 = ssub.s32 %s12, 1
        // Predicated region
        $region29: #{tpu_custom_call.1} parent=27 // pred_check
          %p131 = pneg %p59
        $region30: #{tpu_custom_call.1} parent=27 // pred_check_branch
          %133 = sbr.rel (%p131) target = $region32
        $region31: #{tpu_custom_call.1} parent=27 // pred_region
          %134 = dma.done [#allocation3], 6144
        $region32: #{tpu_custom_call.1} parent=27 // pred_fallthru
          _
        %p135 = scmp.lt.s32.totalorder %s17, 1
        %s136 = scalar_select %p135, %s17, 1
        %s137 = smul.addr %s136, 8
        %s138 = scalar_lea.vmem %s0, %s137
        %p139 = pneg %p38
        %p140 = pneg %p35
        %p141 = pneg %p59
        %p142 = pneg %p56
        %p143 = pneg %p85
        %p144 = pneg %p82
        %s145 = sand.u32 %s72, 1
        %s146 = scalar_lea.sflag [#allocation4], %s145
        %s147 = sand.u32 %s72, 1
        %s148 = smul.addr %s147, 8
        %s149 = scalar_lea.vmem [#allocation5], %s148
        %p150 = scmp.lt.s32.totalorder %s17, 1
        %s151 = scalar_select %p150, %s17, 1
        %s152 = smul.addr %s151, 8
        %s153 = scalar_lea.vmem %s0, %s152
        %v154 = vld [vmem:[%s153] sm:$0xff]
        %v155 = vlaneseq
        %v156 = vand.u32 %v155, 127
        %157 = vset.pattern.permute.xlu0 0
        %158 = vperm.xlu0 %157, %v154
        %v159 = vpop.permute.xlu0 %158
        %vm160 = vcmp.eq.s32.totalorder %v159, %v156
        %v161 = vsel %vm160, 1, 0
        %162 = vset.pattern.permute.xlu0 1
        %163 = vperm.xlu0 %162, %v154
        %v164 = vpop.permute.xlu0 %163
        %vm165 = vcmp.eq.s32.totalorder %v164, %v156
        %v166 = vsel %vm165, 1, 0
        %v167 = vadd.s32 %v161, %v166
        %168 = vset.pattern.permute.xlu0 2
        %169 = vperm.xlu0 %168, %v154
        %v170 = vpop.permute.xlu0 %169
        %vm171 = vcmp.eq.s32.totalorder %v170, %v156
        %v172 = vsel %vm171, 1, 0
        %v173 = vadd.s32 %v167, %v172
        %174 = vset.pattern.permute.xlu0 3
        %175 = vperm.xlu0 %174, %v154
        %v176 = vpop.permute.xlu0 %175
        %vm177 = vcmp.eq.s32.totalorder %v176, %v156
        %v178 = vsel %vm177, 1, 0
        %v179 = vadd.s32 %v173, %v178
        %v180 = vcvt.s32.f32 %v179
        %v181 = vld [vmem:[#allocation2] sm:$0xff]
        %v182 = vld [vmem:[#allocation2 + $0x8] sm:$0xff]
        %v183 = vld [vmem:[#allocation2 + $0x10] sm:$0xff]
        %v184 = vld [vmem:[#allocation2 + $0x18] sm:$0xff]
        %v185 = vld [vmem:[#allocation2 + $0x20] sm:$0xff]
        %v186 = vld [vmem:[#allocation2 + $0x28] sm:$0xff]
        %v187 = vld [vmem:[#allocation2 + $0x30] sm:$0xff]
        %v188 = vld [vmem:[#allocation2 + $0x38] sm:$0xff]
        %v189 = vld [vmem:[#allocation2 + $0x40] sm:$0xff]
        %v190 = vld [vmem:[#allocation2 + $0x48] sm:$0xff]
        %v191 = vld [vmem:[#allocation2 + $0x50] sm:$0xff]
        %v192 = vld [vmem:[#allocation2 + $0x58] sm:$0xff]
        %v193 = vld [vmem:[#allocation2 + $0x60] sm:$0xff]
        %v194 = vld [vmem:[#allocation2 + $0x68] sm:$0xff]
        %v195 = vld [vmem:[#allocation2 + $0x70] sm:$0xff]
        %v196 = vld [vmem:[#allocation2 + $0x78] sm:$0xff]
        %197 = vset.pattern.permute.xlu0 4
        %198 = vperm.xlu0 %197, %v154
        %v199 = vpop.permute.xlu0 %198
        %vm200 = vcmp.eq.s32.totalorder %v199, %v156
        %v201 = vsel %vm200, 1, 0
        %v202 = vcvt.s32.f32 %v201
        %v203 = vld [vmem:[#allocation2 + $0x80] sm:$0xff]
        %v204 = vld [vmem:[#allocation2 + $0x88] sm:$0xff]
        %v205 = vld [vmem:[#allocation2 + $0x90] sm:$0xff]
        %v206 = vld [vmem:[#allocation2 + $0x98] sm:$0xff]
        %v207 = vld [vmem:[#allocation2 + $0xa0] sm:$0xff]
        %v208 = vld [vmem:[#allocation2 + $0xa8] sm:$0xff]
        %v209 = vld [vmem:[#allocation2 + $0xb0] sm:$0xff]
        %v210 = vld [vmem:[#allocation2 + $0xb8] sm:$0xff]
        %v211 = vld [vmem:[#allocation2 + $0xc0] sm:$0xff]
        %v212 = vld [vmem:[#allocation2 + $0xc8] sm:$0xff]
        %v213 = vld [vmem:[#allocation2 + $0xd0] sm:$0xff]
        %v214 = vld [vmem:[#allocation2 + $0xd8] sm:$0xff]
        %v215 = vld [vmem:[#allocation2 + $0xe0] sm:$0xff]
        %v216 = vld [vmem:[#allocation2 + $0xe8] sm:$0xff]
        %v217 = vld [vmem:[#allocation2 + $0xf0] sm:$0xff]
        %v218 = vld [vmem:[#allocation2 + $0xf8] sm:$0xff]
        %219 = vmatprep.subr.mxu0 0.0
        %v220 = vand.u32 %v203, 4294901760
        %221 = vmatpush1.msra.mxu0 %v220
        %222 = vmatprep.subr.mxu0 0.0
        %v223 = vand.u32 %v204, 4294901760
        %224 = vmatpush1.msra.mxu0 %v223
        %225 = vmatprep.subr.mxu0 0.0
        %v226 = vand.u32 %v205, 4294901760
        %227 = vmatpush1.msra.mxu0 %v226
        %228 = vmatprep.subr.mxu0 0.0
        %v229 = vand.u32 %v206, 4294901760
        %230 = vmatpush1.msra.mxu0 %v229
        %231 = vmatprep.subr.mxu0 0.0
        %v232 = vand.u32 %v207, 4294901760
        %233 = vmatpush1.msra.mxu0 %v232
        %234 = vmatprep.subr.mxu0 0.0
        %v235 = vand.u32 %v208, 4294901760
        %236 = vmatpush1.msra.mxu0 %v235
        %237 = vmatprep.subr.mxu0 0.0
        %v238 = vand.u32 %v209, 4294901760
        %239 = vmatpush1.msra.mxu0 %v238
        %240 = vmatprep.subr.mxu0 0.0
        %v241 = vand.u32 %v210, 4294901760
        %242 = vmatpush1.msra.mxu0 %v241
        %243 = vmatprep.subr.mxu0 0.0
        %v244 = vand.u32 %v211, 4294901760
        %245 = vmatpush1.msra.mxu0 %v244
        %246 = vmatprep.subr.mxu0 0.0
        %v247 = vand.u32 %v212, 4294901760
        %248 = vmatpush1.msra.mxu0 %v247
        %249 = vmatprep.subr.mxu0 0.0
        %v250 = vand.u32 %v213, 4294901760
        %251 = vmatpush1.msra.mxu0 %v250
        %252 = vmatprep.subr.mxu0 0.0
        %v253 = vand.u32 %v214, 4294901760
        %254 = vmatpush1.msra.mxu0 %v253
        %255 = vmatprep.subr.mxu0 0.0
        %v256 = vand.u32 %v215, 4294901760
        %257 = vmatpush1.msra.mxu0 %v256
        %258 = vmatprep.subr.mxu0 0.0
        %v259 = vand.u32 %v216, 4294901760
        %260 = vmatpush1.msra.mxu0 %v259
        %261 = vmatprep.subr.mxu0 0.0
        %v262 = vand.u32 %v217, 4294901760
        %263 = vmatpush1.msra.mxu0 %v262
        %264 = vmatprep.subr.mxu0 0.0
        %v265 = vand.u32 %v218, 4294901760
        %266 = vmatpush1.msra.mxu0 %v265
        %267 = vmatprep.subr.mxu0 0.0
        %268 = vmatpush1.msra.mxu0 0.0
        %269 = vmatprep.subr.mxu0 0.0
        %270 = vmatpush1.msra.mxu0 0.0
        %271 = vmatprep.subr.mxu0 0.0
        %272 = vmatpush1.msra.mxu0 0.0
        %273 = vmatprep.subr.mxu0 0.0
        %274 = vmatpush1.msra.mxu0 0.0
        %275 = vmatprep.subr.mxu0 0.0
        %276 = vmatpush1.msra.mxu0 0.0
        %277 = vmatprep.subr.mxu0 0.0
        %278 = vmatpush1.msra.mxu0 0.0
        %279 = vmatprep.subr.mxu0 0.0
        %280 = vmatpush1.msra.mxu0 0.0
        %281 = vmatprep.subr.mxu0 0.0
        %282 = vmatpush1.msra.mxu0 0.0
        %283 = vmatprep.subr.mxu0 0.0
        %284 = vmatpush1.msra.mxu0 0.0
        %285 = vmatprep.subr.mxu0 0.0
        %286 = vmatpush1.msra.mxu0 0.0
        %287 = vmatprep.subr.mxu0 0.0
        %288 = vmatpush1.msra.mxu0 0.0
        %289 = vmatprep.subr.mxu0 0.0
        %290 = vmatpush1.msra.mxu0 0.0
        %291 = vmatprep.subr.mxu0 0.0
        %292 = vmatpush1.msra.mxu0 0.0
        %293 = vmatprep.subr.mxu0 0.0
        %294 = vmatpush1.msra.mxu0 0.0
        %295 = vmatprep.subr.mxu0 0.0
        %296 = vmatpush1.msra.mxu0 0.0
        %297 = vmatprep.subr.mxu0 0.0
        %298 = vmatpush1.msra.mxu0 0.0
        %299 = vmatprep.mubr.f32.mxu0 0.0
        %v300 = vand.u32 %v202, 4294901760
        %v301 = vsub.f32 %v202, %v300
        %v302 = vand.u32 %v301, 4294901760
        %v303 = vsub.f32 %v301, %v302
        %v304 = vand.u32 %v303, 4294901760
        %305 = vmatmul.mubr.f32.gmra.mrb[0].mxu0 %v304
        %v306 = vpop.f32.mrb[0].mxu0
        %v307 = vadd.f32 0.0, %v306
        %v308 = vpop.f32.mrb[0].mxu0
        %309 = vdwg.mxu0
        %310 = vmatprep.subr.mxu0 0.0
        %v311 = vand.u32 %v203, 4294901760
        %v312 = vsub.f32 %v203, %v311
        %v313 = vand.u32 %v312, 4294901760
        %v314 = vsub.f32 %v312, %v313
        %v315 = vand.u32 %v314, 4294901760
        %316 = vmatpush1.msra.mxu0 %v315
        %317 = vmatprep.subr.mxu0 0.0
        %v318 = vand.u32 %v204, 4294901760
        %v319 = vsub.f32 %v204, %v318
        %v320 = vand.u32 %v319, 4294901760
        %v321 = vsub.f32 %v319, %v320
        %v322 = vand.u32 %v321, 4294901760
        %323 = vmatpush1.msra.mxu0 %v322
        %324 = vmatprep.subr.mxu0 0.0
        %v325 = vand.u32 %v205, 4294901760
        %v326 = vsub.f32 %v205, %v325
        %v327 = vand.u32 %v326, 4294901760
        %v328 = vsub.f32 %v326, %v327
        %v329 = vand.u32 %v328, 4294901760
        %330 = vmatpush1.msra.mxu0 %v329
        %331 = vmatprep.subr.mxu0 0.0
        %v332 = vand.u32 %v206, 4294901760
        %v333 = vsub.f32 %v206, %v332
        %v334 = vand.u32 %v333, 4294901760
        %v335 = vsub.f32 %v333, %v334
        %v336 = vand.u32 %v335, 4294901760
        %337 = vmatpush1.msra.mxu0 %v336
        %338 = vmatprep.subr.mxu0 0.0
        %v339 = vand.u32 %v207, 4294901760
        %v340 = vsub.f32 %v207, %v339
        %v341 = vand.u32 %v340, 4294901760
        %v342 = vsub.f32 %v340, %v341
        %v343 = vand.u32 %v342, 4294901760
        %344 = vmatpush1.msra.mxu0 %v343
        %345 = vmatprep.subr.mxu0 0.0
        %v346 = vand.u32 %v208, 4294901760
        %v347 = vsub.f32 %v208, %v346
        %v348 = vand.u32 %v347, 4294901760
        %v349 = vsub.f32 %v347, %v348
        %v350 = vand.u32 %v349, 4294901760
        %351 = vmatpush1.msra.mxu0 %v350
        %352 = vmatprep.subr.mxu0 0.0
        %v353 = vand.u32 %v209, 4294901760
        %v354 = vsub.f32 %v209, %v353
        %v355 = vand.u32 %v354, 4294901760
        %v356 = vsub.f32 %v354, %v355
        %v357 = vand.u32 %v356, 4294901760
        %358 = vmatpush1.msra.mxu0 %v357
        %359 = vmatprep.subr.mxu0 0.0
        %v360 = vand.u32 %v210, 4294901760
        %v361 = vsub.f32 %v210, %v360
        %v362 = vand.u32 %v361, 4294901760
        %v363 = vsub.f32 %v361, %v362
        %v364 = vand.u32 %v363, 4294901760
        %365 = vmatpush1.msra.mxu0 %v364
        %366 = vmatprep.subr.mxu0 0.0
        %v367 = vand.u32 %v211, 4294901760
        %v368 = vsub.f32 %v211, %v367
        %v369 = vand.u32 %v368, 4294901760
        %v370 = vsub.f32 %v368, %v369
        %v371 = vand.u32 %v370, 4294901760
        %372 = vmatpush1.msra.mxu0 %v371
        %373 = vmatprep.subr.mxu0 0.0
        %v374 = vand.u32 %v212, 4294901760
        %v375 = vsub.f32 %v212, %v374
        %v376 = vand.u32 %v375, 4294901760
        %v377 = vsub.f32 %v375, %v376
        %v378 = vand.u32 %v377, 4294901760
        %379 = vmatpush1.msra.mxu0 %v378
        %380 = vmatprep.subr.mxu0 0.0
        %v381 = vand.u32 %v213, 4294901760
        %v382 = vsub.f32 %v213, %v381
        %v383 = vand.u32 %v382, 4294901760
        %v384 = vsub.f32 %v382, %v383
        %v385 = vand.u32 %v384, 4294901760
        %386 = vmatpush1.msra.mxu0 %v385
        %387 = vmatprep.subr.mxu0 0.0
        %v388 = vand.u32 %v214, 4294901760
        %v389 = vsub.f32 %v214, %v388
        %v390 = vand.u32 %v389, 4294901760
        %v391 = vsub.f32 %v389, %v390
        %v392 = vand.u32 %v391, 4294901760
        %393 = vmatpush1.msra.mxu0 %v392
        %394 = vmatprep.subr.mxu0 0.0
        %v395 = vand.u32 %v215, 4294901760
        %v396 = vsub.f32 %v215, %v395
        %v397 = vand.u32 %v396, 4294901760
        %v398 = vsub.f32 %v396, %v397
        %v399 = vand.u32 %v398, 4294901760
        %400 = vmatpush1.msra.mxu0 %v399
        %401 = vmatprep.subr.mxu0 0.0
        %v402 = vand.u32 %v216, 4294901760
        %v403 = vsub.f32 %v216, %v402
        %v404 = vand.u32 %v403, 4294901760
        %v405 = vsub.f32 %v403, %v404
        %v406 = vand.u32 %v405, 4294901760
        %407 = vmatpush1.msra.mxu0 %v406
        %408 = vmatprep.subr.mxu0 0.0
        %v409 = vand.u32 %v217, 4294901760
        %v410 = vsub.f32 %v217, %v409
        %v411 = vand.u32 %v410, 4294901760
        %v412 = vsub.f32 %v410, %v411
        %v413 = vand.u32 %v412, 4294901760
        %414 = vmatpush1.msra.mxu0 %v413
        %415 = vmatprep.subr.mxu0 0.0
        %v416 = vand.u32 %v218, 4294901760
        %v417 = vsub.f32 %v218, %v416
        %v418 = vand.u32 %v417, 4294901760
        %v419 = vsub.f32 %v417, %v418
        %v420 = vand.u32 %v419, 4294901760
        %421 = vmatpush1.msra.mxu0 %v420
        %422 = vmatprep.subr.mxu0 0.0
        %423 = vmatpush1.msra.mxu0 0.0
        %424 = vmatprep.subr.mxu0 0.0
        %425 = vmatpush1.msra.mxu0 0.0
        %426 = vmatprep.subr.mxu0 0.0
        %427 = vmatpush1.msra.mxu0 0.0
        %428 = vmatprep.subr.mxu0 0.0
        %429 = vmatpush1.msra.mxu0 0.0
        %430 = vmatprep.subr.mxu0 0.0
        %431 = vmatpush1.msra.mxu0 0.0
        %432 = vmatprep.subr.mxu0 0.0
        %433 = vmatpush1.msra.mxu0 0.0
        %434 = vmatprep.subr.mxu0 0.0
        %435 = vmatpush1.msra.mxu0 0.0
        %436 = vmatprep.subr.mxu0 0.0
        %437 = vmatpush1.msra.mxu0 0.0
        %438 = vmatprep.subr.mxu0 0.0
        %439 = vmatpush1.msra.mxu0 0.0
        %440 = vmatprep.subr.mxu0 0.0
        %441 = vmatpush1.msra.mxu0 0.0
        %442 = vmatprep.subr.mxu0 0.0
        %443 = vmatpush1.msra.mxu0 0.0
        %444 = vmatprep.subr.mxu0 0.0
        %445 = vmatpush1.msra.mxu0 0.0
        %446 = vmatprep.subr.mxu0 0.0
        %447 = vmatpush1.msra.mxu0 0.0
        %448 = vmatprep.subr.mxu0 0.0
        %449 = vmatpush1.msra.mxu0 0.0
        %450 = vmatprep.subr.mxu0 0.0
        %451 = vmatpush1.msra.mxu0 0.0
        %452 = vmatprep.subr.mxu0 0.0
        %453 = vmatpush1.msra.mxu0 0.0
        %454 = vmatprep.mubr.f32.mxu0 0.0
        %v455 = vand.u32 %v202, 4294901760
        %456 = vmatmul.mubr.f32.gmra.mrb[0].mxu0 %v455
        %v457 = vpop.f32.mrb[0].mxu0
        %v458 = vadd.f32 %v307, %v457
        %v459 = vpop.f32.mrb[0].mxu0
        %460 = vdwg.mxu0
        %461 = vmatprep.subr.mxu0 0.0
        %v462 = vand.u32 %v203, 4294901760
        %v463 = vsub.f32 %v203, %v462
        %464 = vmatpush1.msra.mxu0 %v463
        %465 = vmatprep.subr.mxu0 0.0
        %v466 = vand.u32 %v204, 4294901760
        %v467 = vsub.f32 %v204, %v466
        %468 = vmatpush1.msra.mxu0 %v467
        %469 = vmatprep.subr.mxu0 0.0
        %v470 = vand.u32 %v205, 4294901760
        %v471 = vsub.f32 %v205, %v470
        %472 = vmatpush1.msra.mxu0 %v471
        %473 = vmatprep.subr.mxu0 0.0
        %v474 = vand.u32 %v206, 4294901760
        %v475 = vsub.f32 %v206, %v474
        %476 = vmatpush1.msra.mxu0 %v475
        %477 = vmatprep.subr.mxu0 0.0
        %v478 = vand.u32 %v207, 4294901760
        %v479 = vsub.f32 %v207, %v478
        %480 = vmatpush1.msra.mxu0 %v479
        %481 = vmatprep.subr.mxu0 0.0
        %v482 = vand.u32 %v208, 4294901760
        %v483 = vsub.f32 %v208, %v482
        %484 = vmatpush1.msra.mxu0 %v483
        %485 = vmatprep.subr.mxu0 0.0
        %v486 = vand.u32 %v209, 4294901760
        %v487 = vsub.f32 %v209, %v486
        %488 = vmatpush1.msra.mxu0 %v487
        %489 = vmatprep.subr.mxu0 0.0
        %v490 = vand.u32 %v210, 4294901760
        %v491 = vsub.f32 %v210, %v490
        %492 = vmatpush1.msra.mxu0 %v491
        %493 = vmatprep.subr.mxu0 0.0
        %v494 = vand.u32 %v211, 4294901760
        %v495 = vsub.f32 %v211, %v494
        %496 = vmatpush1.msra.mxu0 %v495
        %497 = vmatprep.subr.mxu0 0.0
        %v498 = vand.u32 %v212, 4294901760
        %v499 = vsub.f32 %v212, %v498
        %500 = vmatpush1.msra.mxu0 %v499
        %501 = vmatprep.subr.mxu0 0.0
        %v502 = vand.u32 %v213, 4294901760
        %v503 = vsub.f32 %v213, %v502
        %504 = vmatpush1.msra.mxu0 %v503
        %505 = vmatprep.subr.mxu0 0.0
        %v506 = vand.u32 %v214, 4294901760
        %v507 = vsub.f32 %v214, %v506
        %508 = vmatpush1.msra.mxu0 %v507
        %509 = vmatprep.subr.mxu0 0.0
        %v510 = vand.u32 %v215, 4294901760
        %v511 = vsub.f32 %v215, %v510
        %512 = vmatpush1.msra.mxu0 %v511
        %513 = vmatprep.subr.mxu0 0.0
        %v514 = vand.u32 %v216, 4294901760
        %v515 = vsub.f32 %v216, %v514
        %516 = vmatpush1.msra.mxu0 %v515
        %517 = vmatprep.subr.mxu0 0.0
        %v518 = vand.u32 %v217, 4294901760
        %v519 = vsub.f32 %v217, %v518
        %520 = vmatpush1.msra.mxu0 %v519
        %521 = vmatprep.subr.mxu0 0.0
        %v522 = vand.u32 %v218, 4294901760
        %v523 = vsub.f32 %v218, %v522
        %524 = vmatpush1.msra.mxu0 %v523
        %525 = vmatprep.subr.mxu0 0.0
        %526 = vmatpush1.msra.mxu0 0.0
        %527 = vmatprep.subr.mxu0 0.0
        %528 = vmatpush1.msra.mxu0 0.0
        %529 = vmatprep.subr.mxu0 0.0
        %530 = vmatpush1.msra.mxu0 0.0
        %531 = vmatprep.subr.mxu0 0.0
        %532 = vmatpush1.msra.mxu0 0.0
        %533 = vmatprep.subr.mxu0 0.0
        %534 = vmatpush1.msra.mxu0 0.0
        %535 = vmatprep.subr.mxu0 0.0
        %536 = vmatpush1.msra.mxu0 0.0
        %537 = vmatprep.subr.mxu0 0.0
        %538 = vmatpush1.msra.mxu0 0.0
        %539 = vmatprep.subr.mxu0 0.0
        %540 = vmatpush1.msra.mxu0 0.0
        %541 = vmatprep.subr.mxu0 0.0
        %542 = vmatpush1.msra.mxu0 0.0
        %543 = vmatprep.subr.mxu0 0.0
        %544 = vmatpush1.msra.mxu0 0.0
        %545 = vmatprep.subr.mxu0 0.0
        %546 = vmatpush1.msra.mxu0 0.0
        %547 = vmatprep.subr.mxu0 0.0
        %548 = vmatpush1.msra.mxu0 0.0
        %549 = vmatprep.subr.mxu0 0.0
        %550 = vmatpush1.msra.mxu0 0.0
        %551 = vmatprep.subr.mxu0 0.0
        %552 = vmatpush1.msra.mxu0 0.0
        %553 = vmatprep.subr.mxu0 0.0
        %554 = vmatpush1.msra.mxu0 0.0
        %555 = vmatprep.subr.mxu0 0.0
        %556 = vmatpush1.msra.mxu0 0.0
        %557 = vmatprep.mubr.f32.mxu0 0.0
        %v558 = vand.u32 %v202, 4294901760
        %v559 = vsub.f32 %v202, %v558
        %560 = vmatmul.mubr.f32.gmra.mrb[0].mxu0 %v559
        %v561 = vpop.f32.mrb[0].mxu0
        %v562 = vadd.f32 %v458, %v561
        %v563 = vpop.f32.mrb[0].mxu0
        %564 = vdwg.mxu0
        %565 = vmatprep.subr.mxu0 0.0
        %v566 = vand.u32 %v203, 4294901760
        %567 = vmatpush1.msra.mxu0 %v566
        %568 = vmatprep.subr.mxu0 0.0
        %v569 = vand.u32 %v204, 4294901760
        %570 = vmatpush1.msra.mxu0 %v569
        %571 = vmatprep.subr.mxu0 0.0
        %v572 = vand.u32 %v205, 4294901760
        %573 = vmatpush1.msra.mxu0 %v572
        %574 = vmatprep.subr.mxu0 0.0
        %v575 = vand.u32 %v206, 4294901760
        %576 = vmatpush1.msra.mxu0 %v575
        %577 = vmatprep.subr.mxu0 0.0
        %v578 = vand.u32 %v207, 4294901760
        %579 = vmatpush1.msra.mxu0 %v578
        %580 = vmatprep.subr.mxu0 0.0
        %v581 = vand.u32 %v208, 4294901760
        %582 = vmatpush1.msra.mxu0 %v581
        %583 = vmatprep.subr.mxu0 0.0
        %v584 = vand.u32 %v209, 4294901760
        %585 = vmatpush1.msra.mxu0 %v584
        %586 = vmatprep.subr.mxu0 0.0
        %v587 = vand.u32 %v210, 4294901760
        %588 = vmatpush1.msra.mxu0 %v587
        %589 = vmatprep.subr.mxu0 0.0
        %v590 = vand.u32 %v211, 4294901760
        %591 = vmatpush1.msra.mxu0 %v590
        %592 = vmatprep.subr.mxu0 0.0
        %v593 = vand.u32 %v212, 4294901760
        %594 = vmatpush1.msra.mxu0 %v593
        %595 = vmatprep.subr.mxu0 0.0
        %v596 = vand.u32 %v213, 4294901760
        %597 = vmatpush1.msra.mxu0 %v596
        %598 = vmatprep.subr.mxu0 0.0
        %v599 = vand.u32 %v214, 4294901760
        %600 = vmatpush1.msra.mxu0 %v599
        %601 = vmatprep.subr.mxu0 0.0
        %v602 = vand.u32 %v215, 4294901760
        %603 = vmatpush1.msra.mxu0 %v602
        %604 = vmatprep.subr.mxu0 0.0
        %v605 = vand.u32 %v216, 4294901760
        %606 = vmatpush1.msra.mxu0 %v605
        %607 = vmatprep.subr.mxu0 0.0
        %v608 = vand.u32 %v217, 4294901760
        %609 = vmatpush1.msra.mxu0 %v608
        %610 = vmatprep.subr.mxu0 0.0
        %v611 = vand.u32 %v218, 4294901760
        %612 = vmatpush1.msra.mxu0 %v611
        %613 = vmatprep.subr.mxu0 0.0
        %614 = vmatpush1.msra.mxu0 0.0
        %615 = vmatprep.subr.mxu0 0.0
        %616 = vmatpush1.msra.mxu0 0.0
        %617 = vmatprep.subr.mxu0 0.0
        %618 = vmatpush1.msra.mxu0 0.0
        %619 = vmatprep.subr.mxu0 0.0
        %620 = vmatpush1.msra.mxu0 0.0
        %621 = vmatprep.subr.mxu0 0.0
        %622 = vmatpush1.msra.mxu0 0.0
        %623 = vmatprep.subr.mxu0 0.0
        %624 = vmatpush1.msra.mxu0 0.0
        %625 = vmatprep.subr.mxu0 0.0
        %626 = vmatpush1.msra.mxu0 0.0
        %627 = vmatprep.subr.mxu0 0.0
        %628 = vmatpush1.msra.mxu0 0.0
        %629 = vmatprep.subr.mxu0 0.0
        %630 = vmatpush1.msra.mxu0 0.0
        %631 = vmatprep.subr.mxu0 0.0
        %632 = vmatpush1.msra.mxu0 0.0
        %633 = vmatprep.subr.mxu0 0.0
        %634 = vmatpush1.msra.mxu0 0.0
        %635 = vmatprep.subr.mxu0 0.0
        %636 = vmatpush1.msra.mxu0 0.0
        %637 = vmatprep.subr.mxu0 0.0
        %638 = vmatpush1.msra.mxu0 0.0
        %639 = vmatprep.subr.mxu0 0.0
        %640 = vmatpush1.msra.mxu0 0.0
        %641 = vmatprep.subr.mxu0 0.0
        %642 = vmatpush1.msra.mxu0 0.0
        %643 = vmatprep.subr.mxu0 0.0
        %644 = vmatpush1.msra.mxu0 0.0
        %645 = vmatprep.mubr.f32.mxu0 0.0
        %v646 = vand.u32 %v202, 4294901760
        %v647 = vsub.f32 %v202, %v646
        %v648 = vand.u32 %v647, 4294901760
        %649 = vmatmul.mubr.f32.gmra.mrb[0].mxu0 %v648
        %v650 = vpop.f32.mrb[0].mxu0
        %v651 = vadd.f32 %v562, %v650
        %v652 = vpop.f32.mrb[0].mxu0
        %653 = vdwg.mxu0
        %654 = vmatprep.subr.mxu0 0.0
        %v655 = vand.u32 %v203, 4294901760
        %v656 = vsub.f32 %v203, %v655
        %v657 = vand.u32 %v656, 4294901760
        %658 = vmatpush1.msra.mxu0 %v657
        %659 = vmatprep.subr.mxu0 0.0
        %v660 = vand.u32 %v204, 4294901760
        %v661 = vsub.f32 %v204, %v660
        %v662 = vand.u32 %v661, 4294901760
        %663 = vmatpush1.msra.mxu0 %v662
        %664 = vmatprep.subr.mxu0 0.0
        %v665 = vand.u32 %v205, 4294901760
        %v666 = vsub.f32 %v205, %v665
        %v667 = vand.u32 %v666, 4294901760
        %668 = vmatpush1.msra.mxu0 %v667
        %669 = vmatprep.subr.mxu0 0.0
        %v670 = vand.u32 %v206, 4294901760
        %v671 = vsub.f32 %v206, %v670
        %v672 = vand.u32 %v671, 4294901760
        %673 = vmatpush1.msra.mxu0 %v672
        %674 = vmatprep.subr.mxu0 0.0
        %v675 = vand.u32 %v207, 4294901760
        %v676 = vsub.f32 %v207, %v675
        %v677 = vand.u32 %v676, 4294901760
        %678 = vmatpush1.msra.mxu0 %v677
        %679 = vmatprep.subr.mxu0 0.0
        %v680 = vand.u32 %v208, 4294901760
        %v681 = vsub.f32 %v208, %v680
        %v682 = vand.u32 %v681, 4294901760
        %683 = vmatpush1.msra.mxu0 %v682
        %684 = vmatprep.subr.mxu0 0.0
        %v685 = vand.u32 %v209, 4294901760
        %v686 = vsub.f32 %v209, %v685
        %v687 = vand.u32 %v686, 4294901760
        %688 = vmatpush1.msra.mxu0 %v687
        %689 = vmatprep.subr.mxu0 0.0
        %v690 = vand.u32 %v210, 4294901760
        %v691 = vsub.f32 %v210, %v690
        %v692 = vand.u32 %v691, 4294901760
        %693 = vmatpush1.msra.mxu0 %v692
        %694 = vmatprep.subr.mxu0 0.0
        %v695 = vand.u32 %v211, 4294901760
        %v696 = vsub.f32 %v211, %v695
        %v697 = vand.u32 %v696, 4294901760
        %698 = vmatpush1.msra.mxu0 %v697
        %699 = vmatprep.subr.mxu0 0.0
        %v700 = vand.u32 %v212, 4294901760
        %v701 = vsub.f32 %v212, %v700
        %v702 = vand.u32 %v701, 4294901760
        %703 = vmatpush1.msra.mxu0 %v702
        %704 = vmatprep.subr.mxu0 0.0
        %v705 = vand.u32 %v213, 4294901760
        %v706 = vsub.f32 %v213, %v705
        %v707 = vand.u32 %v706, 4294901760
        %708 = vmatpush1.msra.mxu0 %v707
        %709 = vmatprep.subr.mxu0 0.0
        %v710 = vand.u32 %v214, 4294901760
        %v711 = vsub.f32 %v214, %v710
        %v712 = vand.u32 %v711, 4294901760
        %713 = vmatpush1.msra.mxu0 %v712
        %714 = vmatprep.subr.mxu0 0.0
        %v715 = vand.u32 %v215, 4294901760
        %v716 = vsub.f32 %v215, %v715
        %v717 = vand.u32 %v716, 4294901760
        %718 = vmatpush1.msra.mxu0 %v717
        %719 = vmatprep.subr.mxu0 0.0
        %v720 = vand.u32 %v216, 4294901760
        %v721 = vsub.f32 %v216, %v720
        %v722 = vand.u32 %v721, 4294901760
        %723 = vmatpush1.msra.mxu0 %v722
        %724 = vmatprep.subr.mxu0 0.0
        %v725 = vand.u32 %v217, 4294901760
        %v726 = vsub.f32 %v217, %v725
        %v727 = vand.u32 %v726, 4294901760
        %728 = vmatpush1.msra.mxu0 %v727
        %729 = vmatprep.subr.mxu0 0.0
        %v730 = vand.u32 %v218, 4294901760
        %v731 = vsub.f32 %v218, %v730
        %v732 = vand.u32 %v731, 4294901760
        %733 = vmatpush1.msra.mxu0 %v732
        %734 = vmatprep.subr.mxu0 0.0
        %735 = vmatpush1.msra.mxu0 0.0
        %736 = vmatprep.subr.mxu0 0.0
        %737 = vmatpush1.msra.mxu0 0.0
        %738 = vmatprep.subr.mxu0 0.0
        %739 = vmatpush1.msra.mxu0 0.0
        %740 = vmatprep.subr.mxu0 0.0
        %741 = vmatpush1.msra.mxu0 0.0
        %742 = vmatprep.subr.mxu0 0.0
        %743 = vmatpush1.msra.mxu0 0.0
        %744 = vmatprep.subr.mxu0 0.0
        %745 = vmatpush1.msra.mxu0 0.0
        %746 = vmatprep.subr.mxu0 0.0
        %747 = vmatpush1.msra.mxu0 0.0
        %748 = vmatprep.subr.mxu0 0.0
        %749 = vmatpush1.msra.mxu0 0.0
        %750 = vmatprep.subr.mxu0 0.0
        %751 = vmatpush1.msra.mxu0 0.0
        %752 = vmatprep.subr.mxu0 0.0
        %753 = vmatpush1.msra.mxu0 0.0
        %754 = vmatprep.subr.mxu0 0.0
        %755 = vmatpush1.msra.mxu0 0.0
        %756 = vmatprep.subr.mxu0 0.0
        %757 = vmatpush1.msra.mxu0 0.0
        %758 = vmatprep.subr.mxu0 0.0
        %759 = vmatpush1.msra.mxu0 0.0
        %760 = vmatprep.subr.mxu0 0.0
        %761 = vmatpush1.msra.mxu0 0.0
        %762 = vmatprep.subr.mxu0 0.0
        %763 = vmatpush1.msra.mxu0 0.0
        %764 = vmatprep.subr.mxu0 0.0
        %765 = vmatpush1.msra.mxu0 0.0
        %766 = vmatprep.mubr.f32.mxu0 0.0
        %v767 = vand.u32 %v202, 4294901760
        %768 = vmatmul.mubr.f32.gmra.mrb[0].mxu0 %v767
        %v769 = vpop.f32.mrb[0].mxu0
        %v770 = vadd.f32 %v651, %v769
        %v771 = vpop.f32.mrb[0].mxu0
        %772 = vdwg.mxu0
        %773 = vmatprep.subr.mxu0 0.0
        %v774 = vand.u32 %v203, 4294901760
        %775 = vmatpush1.msra.mxu0 %v774
        %776 = vmatprep.subr.mxu0 0.0
        %v777 = vand.u32 %v204, 4294901760
        %778 = vmatpush1.msra.mxu0 %v777
        %779 = vmatprep.subr.mxu0 0.0
        %v780 = vand.u32 %v205, 4294901760
        %781 = vmatpush1.msra.mxu0 %v780
        %782 = vmatprep.subr.mxu0 0.0
        %v783 = vand.u32 %v206, 4294901760
        %784 = vmatpush1.msra.mxu0 %v783
        %785 = vmatprep.subr.mxu0 0.0
        %v786 = vand.u32 %v207, 4294901760
        %787 = vmatpush1.msra.mxu0 %v786
        %788 = vmatprep.subr.mxu0 0.0
        %v789 = vand.u32 %v208, 4294901760
        %790 = vmatpush1.msra.mxu0 %v789
        %791 = vmatprep.subr.mxu0 0.0
        %v792 = vand.u32 %v209, 4294901760
        %793 = vmatpush1.msra.mxu0 %v792
        %794 = vmatprep.subr.mxu0 0.0
        %v795 = vand.u32 %v210, 4294901760
        %796 = vmatpush1.msra.mxu0 %v795
        %797 = vmatprep.subr.mxu0 0.0
        %v798 = vand.u32 %v211, 4294901760
        %799 = vmatpush1.msra.mxu0 %v798
        %800 = vmatprep.subr.mxu0 0.0
        %v801 = vand.u32 %v212, 4294901760
        %802 = vmatpush1.msra.mxu0 %v801
        %803 = vmatprep.subr.mxu0 0.0
        %v804 = vand.u32 %v213, 4294901760
        %805 = vmatpush1.msra.mxu0 %v804
        %806 = vmatprep.subr.mxu0 0.0
        %v807 = vand.u32 %v214, 4294901760
        %808 = vmatpush1.msra.mxu0 %v807
        %809 = vmatprep.subr.mxu0 0.0
        %v810 = vand.u32 %v215, 4294901760
        %811 = vmatpush1.msra.mxu0 %v810
        %812 = vmatprep.subr.mxu0 0.0
        %v813 = vand.u32 %v216, 4294901760
        %814 = vmatpush1.msra.mxu0 %v813
        %815 = vmatprep.subr.mxu0 0.0
        %v816 = vand.u32 %v217, 4294901760
        %817 = vmatpush1.msra.mxu0 %v816
        %818 = vmatprep.subr.mxu0 0.0
        %v819 = vand.u32 %v218, 4294901760
        %820 = vmatpush1.msra.mxu0 %v819
        %821 = vmatprep.subr.mxu0 0.0
        %822 = vmatpush1.msra.mxu0 0.0
        %823 = vmatprep.subr.mxu0 0.0
        %824 = vmatpush1.msra.mxu0 0.0
        %825 = vmatprep.subr.mxu0 0.0
        %826 = vmatpush1.msra.mxu0 0.0
        %827 = vmatprep.subr.mxu0 0.0
        %828 = vmatpush1.msra.mxu0 0.0
        %829 = vmatprep.subr.mxu0 0.0
        %830 = vmatpush1.msra.mxu0 0.0
        %831 = vmatprep.subr.mxu0 0.0
        %832 = vmatpush1.msra.mxu0 0.0
        %833 = vmatprep.subr.mxu0 0.0
        %834 = vmatpush1.msra.mxu0 0.0
        %835 = vmatprep.subr.mxu0 0.0
        %836 = vmatpush1.msra.mxu0 0.0
        %837 = vmatprep.subr.mxu0 0.0
        %838 = vmatpush1.msra.mxu0 0.0
        %839 = vmatprep.subr.mxu0 0.0
        %840 = vmatpush1.msra.mxu0 0.0
        %841 = vmatprep.subr.mxu0 0.0
        %842 = vmatpush1.msra.mxu0 0.0
        %843 = vmatprep.subr.mxu0 0.0
        %844 = vmatpush1.msra.mxu0 0.0
        %845 = vmatprep.subr.mxu0 0.0
        %846 = vmatpush1.msra.mxu0 0.0
        %847 = vmatprep.subr.mxu0 0.0
        %848 = vmatpush1.msra.mxu0 0.0
        %849 = vmatprep.subr.mxu0 0.0
        %850 = vmatpush1.msra.mxu0 0.0
        %851 = vmatprep.subr.mxu0 0.0
        %852 = vmatpush1.msra.mxu0 0.0
        %853 = vmatprep.mubr.f32.mxu0 0.0
        %v854 = vand.u32 %v202, 4294901760
        %855 = vmatmul.mubr.f32.gmra.mrb[0].mxu0 %v854
        %v856 = vpop.f32.mrb[0].mxu0
        %v857 = vadd.f32 %v770, %v856
        %v858 = vpop.f32.mrb[0].mxu0
        %859 = vdwg.mxu0
        %860 = vmatprep.subr.mxu0 0.0
        %v861 = vand.u32 %v181, 4294901760
        %862 = vmatpush1.msra.mxu0 %v861
        %863 = vmatprep.subr.mxu0 0.0
        %v864 = vand.u32 %v182, 4294901760
        %865 = vmatpush1.msra.mxu0 %v864
        %866 = vmatprep.subr.mxu0 0.0
        %v867 = vand.u32 %v183, 4294901760
        %868 = vmatpush1.msra.mxu0 %v867
        %869 = vmatprep.subr.mxu0 0.0
        %v870 = vand.u32 %v184, 4294901760
        %871 = vmatpush1.msra.mxu0 %v870
        %872 = vmatprep.subr.mxu0 0.0
        %v873 = vand.u32 %v185, 4294901760
        %874 = vmatpush1.msra.mxu0 %v873
        %875 = vmatprep.subr.mxu0 0.0
        %v876 = vand.u32 %v186, 4294901760
        %877 = vmatpush1.msra.mxu0 %v876
        %878 = vmatprep.subr.mxu0 0.0
        %v879 = vand.u32 %v187, 4294901760
        %880 = vmatpush1.msra.mxu0 %v879
        %881 = vmatprep.subr.mxu0 0.0
        %v882 = vand.u32 %v188, 4294901760
        %883 = vmatpush1.msra.mxu0 %v882
        %884 = vmatprep.subr.mxu0 0.0
        %v885 = vand.u32 %v189, 4294901760
        %886 = vmatpush1.msra.mxu0 %v885
        %887 = vmatprep.subr.mxu0 0.0
        %v888 = vand.u32 %v190, 4294901760
        %889 = vmatpush1.msra.mxu0 %v888
        %890 = vmatprep.subr.mxu0 0.0
        %v891 = vand.u32 %v191, 4294901760
        %892 = vmatpush1.msra.mxu0 %v891
        %893 = vmatprep.subr.mxu0 0.0
        %v894 = vand.u32 %v192, 4294901760
        %895 = vmatpush1.msra.mxu0 %v894
        %896 = vmatprep.subr.mxu0 0.0
        %v897 = vand.u32 %v193, 4294901760
        %898 = vmatpush1.msra.mxu0 %v897
        %899 = vmatprep.subr.mxu0 0.0
        %v900 = vand.u32 %v194, 4294901760
        %901 = vmatpush1.msra.mxu0 %v900
        %902 = vmatprep.subr.mxu0 0.0
        %v903 = vand.u32 %v195, 4294901760
        %904 = vmatpush1.msra.mxu0 %v903
        %905 = vmatprep.subr.mxu0 0.0
        %v906 = vand.u32 %v196, 4294901760
        %907 = vmatpush1.msra.mxu0 %v906
        %908 = vmatprep.subr.mxu0 0.0
        %909 = vmatpush1.msra.mxu0 0.0
        %910 = vmatprep.subr.mxu0 0.0
        %911 = vmatpush1.msra.mxu0 0.0
        %912 = vmatprep.subr.mxu0 0.0
        %913 = vmatpush1.msra.mxu0 0.0
        %914 = vmatprep.subr.mxu0 0.0
        %915 = vmatpush1.msra.mxu0 0.0
        %916 = vmatprep.subr.mxu0 0.0
        %917 = vmatpush1.msra.mxu0 0.0
        %918 = vmatprep.subr.mxu0 0.0
        %919 = vmatpush1.msra.mxu0 0.0
        %920 = vmatprep.subr.mxu0 0.0
        %921 = vmatpush1.msra.mxu0 0.0
        %922 = vmatprep.subr.mxu0 0.0
        %923 = vmatpush1.msra.mxu0 0.0
        %924 = vmatprep.subr.mxu0 0.0
        %925 = vmatpush1.msra.mxu0 0.0
        %926 = vmatprep.subr.mxu0 0.0
        %927 = vmatpush1.msra.mxu0 0.0
        %928 = vmatprep.subr.mxu0 0.0
        %929 = vmatpush1.msra.mxu0 0.0
        %930 = vmatprep.subr.mxu0 0.0
        %931 = vmatpush1.msra.mxu0 0.0
        %932 = vmatprep.subr.mxu0 0.0
        %933 = vmatpush1.msra.mxu0 0.0
        %934 = vmatprep.subr.mxu0 0.0
        %935 = vmatpush1.msra.mxu0 0.0
        %936 = vmatprep.subr.mxu0 0.0
        %937 = vmatpush1.msra.mxu0 0.0
        %938 = vmatprep.subr.mxu0 0.0
        %939 = vmatpush1.msra.mxu0 0.0
        %940 = vmatprep.mubr.f32.mxu0 0.0
        %v941 = vand.u32 %v180, 4294901760
        %v942 = vsub.f32 %v180, %v941
        %v943 = vand.u32 %v942, 4294901760
        %v944 = vsub.f32 %v942, %v943
        %v945 = vand.u32 %v944, 4294901760
        %946 = vmatmul.mubr.f32.gmra.mrb[0].mxu0 %v945
        %v947 = vpop.f32.mrb[0].mxu0
        %v948 = vadd.f32 %v857, %v947
        %v949 = vpop.f32.mrb[0].mxu0
        %950 = vdwg.mxu0
        %951 = vmatprep.subr.mxu0 0.0
        %v952 = vand.u32 %v181, 4294901760
        %v953 = vsub.f32 %v181, %v952
        %v954 = vand.u32 %v953, 4294901760
        %v955 = vsub.f32 %v953, %v954
        %v956 = vand.u32 %v955, 4294901760
        %957 = vmatpush1.msra.mxu0 %v956
        %958 = vmatprep.subr.mxu0 0.0
        %v959 = vand.u32 %v182, 4294901760
        %v960 = vsub.f32 %v182, %v959
        %v961 = vand.u32 %v960, 4294901760
        %v962 = vsub.f32 %v960, %v961
        %v963 = vand.u32 %v962, 4294901760
        %964 = vmatpush1.msra.mxu0 %v963
        %965 = vmatprep.subr.mxu0 0.0
        %v966 = vand.u32 %v183, 4294901760
        %v967 = vsub.f32 %v183, %v966
        %v968 = vand.u32 %v967, 4294901760
        %v969 = vsub.f32 %v967, %v968
        %v970 = vand.u32 %v969, 4294901760
        %971 = vmatpush1.msra.mxu0 %v970
        %972 = vmatprep.subr.mxu0 0.0
        %v973 = vand.u32 %v184, 4294901760
        %v974 = vsub.f32 %v184, %v973
        %v975 = vand.u32 %v974, 4294901760
        %v976 = vsub.f32 %v974, %v975
        %v977 = vand.u32 %v976, 4294901760
        %978 = vmatpush1.msra.mxu0 %v977
        %979 = vmatprep.subr.mxu0 0.0
        %v980 = vand.u32 %v185, 4294901760
        %v981 = vsub.f32 %v185, %v980
        %v982 = vand.u32 %v981, 4294901760
        %v983 = vsub.f32 %v981, %v982
        %v984 = vand.u32 %v983, 4294901760
        %985 = vmatpush1.msra.mxu0 %v984
        %986 = vmatprep.subr.mxu0 0.0
        %v987 = vand.u32 %v186, 4294901760
        %v988 = vsub.f32 %v186, %v987
        %v989 = vand.u32 %v988, 4294901760
        %v990 = vsub.f32 %v988, %v989
        %v991 = vand.u32 %v990, 4294901760
        %992 = vmatpush1.msra.mxu0 %v991
        %993 = vmatprep.subr.mxu0 0.0
        %v994 = vand.u32 %v187, 4294901760
        %v995 = vsub.f32 %v187, %v994
        %v996 = vand.u32 %v995, 4294901760
        %v997 = vsub.f32 %v995, %v996
        %v998 = vand.u32 %v997, 4294901760
        %999 = vmatpush1.msra.mxu0 %v998
        %1000 = vmatprep.subr.mxu0 0.0
        %v1001 = vand.u32 %v188, 4294901760
        %v1002 = vsub.f32 %v188, %v1001
        %v1003 = vand.u32 %v1002, 4294901760
        %v1004 = vsub.f32 %v1002, %v1003
        %v1005 = vand.u32 %v1004, 4294901760
        %1006 = vmatpush1.msra.mxu0 %v1005
        %1007 = vmatprep.subr.mxu0 0.0
        %v1008 = vand.u32 %v189, 4294901760
        %v1009 = vsub.f32 %v189, %v1008
        %v1010 = vand.u32 %v1009, 4294901760
        %v1011 = vsub.f32 %v1009, %v1010
        %v1012 = vand.u32 %v1011, 4294901760
        %1013 = vmatpush1.msra.mxu0 %v1012
        %1014 = vmatprep.subr.mxu0 0.0
        %v1015 = vand.u32 %v190, 4294901760
        %v1016 = vsub.f32 %v190, %v1015
        %v1017 = vand.u32 %v1016, 4294901760
        %v1018 = vsub.f32 %v1016, %v1017
        %v1019 = vand.u32 %v1018, 4294901760
        %1020 = vmatpush1.msra.mxu0 %v1019
        %1021 = vmatprep.subr.mxu0 0.0
        %v1022 = vand.u32 %v191, 4294901760
        %v1023 = vsub.f32 %v191, %v1022
        %v1024 = vand.u32 %v1023, 4294901760
        %v1025 = vsub.f32 %v1023, %v1024
        %v1026 = vand.u32 %v1025, 4294901760
        %1027 = vmatpush1.msra.mxu0 %v1026
        %1028 = vmatprep.subr.mxu0 0.0
        %v1029 = vand.u32 %v192, 4294901760
        %v1030 = vsub.f32 %v192, %v1029
        %v1031 = vand.u32 %v1030, 4294901760
        %v1032 = vsub.f32 %v1030, %v1031
        %v1033 = vand.u32 %v1032, 4294901760
        %1034 = vmatpush1.msra.mxu0 %v1033
        %1035 = vmatprep.subr.mxu0 0.0
        %v1036 = vand.u32 %v193, 4294901760
        %v1037 = vsub.f32 %v193, %v1036
        %v1038 = vand.u32 %v1037, 4294901760
        %v1039 = vsub.f32 %v1037, %v1038
        %v1040 = vand.u32 %v1039, 4294901760
        %1041 = vmatpush1.msra.mxu0 %v1040
        %1042 = vmatprep.subr.mxu0 0.0
        %v1043 = vand.u32 %v194, 4294901760
        %v1044 = vsub.f32 %v194, %v1043
        %v1045 = vand.u32 %v1044, 4294901760
        %v1046 = vsub.f32 %v1044, %v1045
        %v1047 = vand.u32 %v1046, 4294901760
        %1048 = vmatpush1.msra.mxu0 %v1047
        %1049 = vmatprep.subr.mxu0 0.0
        %v1050 = vand.u32 %v195, 4294901760
        %v1051 = vsub.f32 %v195, %v1050
        %v1052 = vand.u32 %v1051, 4294901760
        %v1053 = vsub.f32 %v1051, %v1052
        %v1054 = vand.u32 %v1053, 4294901760
        %1055 = vmatpush1.msra.mxu0 %v1054
        %1056 = vmatprep.subr.mxu0 0.0
        %v1057 = vand.u32 %v196, 4294901760
        %v1058 = vsub.f32 %v196, %v1057
        %v1059 = vand.u32 %v1058, 4294901760
        %v1060 = vsub.f32 %v1058, %v1059
        %v1061 = vand.u32 %v1060, 4294901760
        %1062 = vmatpush1.msra.mxu0 %v1061
        %1063 = vmatprep.subr.mxu0 0.0
        %1064 = vmatpush1.msra.mxu0 0.0
        %1065 = vmatprep.subr.mxu0 0.0
        %1066 = vmatpush1.msra.mxu0 0.0
        %1067 = vmatprep.subr.mxu0 0.0
        %1068 = vmatpush1.msra.mxu0 0.0
        %1069 = vmatprep.subr.mxu0 0.0
        %1070 = vmatpush1.msra.mxu0 0.0
        %1071 = vmatprep.subr.mxu0 0.0
        %1072 = vmatpush1.msra.mxu0 0.0
        %1073 = vmatprep.subr.mxu0 0.0
        %1074 = vmatpush1.msra.mxu0 0.0
        %1075 = vmatprep.subr.mxu0 0.0
        %1076 = vmatpush1.msra.mxu0 0.0
        %1077 = vmatprep.subr.mxu0 0.0
        %1078 = vmatpush1.msra.mxu0 0.0
        %1079 = vmatprep.subr.mxu0 0.0
        %1080 = vmatpush1.msra.mxu0 0.0
        %1081 = vmatprep.subr.mxu0 0.0
        %1082 = vmatpush1.msra.mxu0 0.0
        %1083 = vmatprep.subr.mxu0 0.0
        %1084 = vmatpush1.msra.mxu0 0.0
        %1085 = vmatprep.subr.mxu0 0.0
        %1086 = vmatpush1.msra.mxu0 0.0
        %1087 = vmatprep.subr.mxu0 0.0
        %1088 = vmatpush1.msra.mxu0 0.0
        %1089 = vmatprep.subr.mxu0 0.0
        %1090 = vmatpush1.msra.mxu0 0.0
        %1091 = vmatprep.subr.mxu0 0.0
        %1092 = vmatpush1.msra.mxu0 0.0
        %1093 = vmatprep.subr.mxu0 0.0
        %1094 = vmatpush1.msra.mxu0 0.0
        %1095 = vmatprep.mubr.f32.mxu0 0.0
        %v1096 = vand.u32 %v180, 4294901760
        %1097 = vmatmul.mubr.f32.gmra.mrb[0].mxu0 %v1096
        %v1098 = vpop.f32.mrb[0].mxu0
        %v1099 = vadd.f32 %v948, %v1098
        %v1100 = vpop.f32.mrb[0].mxu0
        %1101 = vdwg.mxu0
        %1102 = vmatprep.subr.mxu0 0.0
        %v1103 = vand.u32 %v181, 4294901760
        %v1104 = vsub.f32 %v181, %v1103
        %1105 = vmatpush1.msra.mxu0 %v1104
        %1106 = vmatprep.subr.mxu0 0.0
        %v1107 = vand.u32 %v182, 4294901760
        %v1108 = vsub.f32 %v182, %v1107
        %1109 = vmatpush1.msra.mxu0 %v1108
        %1110 = vmatprep.subr.mxu0 0.0
        %v1111 = vand.u32 %v183, 4294901760
        %v1112 = vsub.f32 %v183, %v1111
        %1113 = vmatpush1.msra.mxu0 %v1112
        %1114 = vmatprep.subr.mxu0 0.0
        %v1115 = vand.u32 %v184, 4294901760
        %v1116 = vsub.f32 %v184, %v1115
        %1117 = vmatpush1.msra.mxu0 %v1116
        %1118 = vmatprep.subr.mxu0 0.0
        %v1119 = vand.u32 %v185, 4294901760
        %v1120 = vsub.f32 %v185, %v1119
        %1121 = vmatpush1.msra.mxu0 %v1120
        %1122 = vmatprep.subr.mxu0 0.0
        %v1123 = vand.u32 %v186, 4294901760
        %v1124 = vsub.f32 %v186, %v1123
        %1125 = vmatpush1.msra.mxu0 %v1124
        %1126 = vmatprep.subr.mxu0 0.0
        %v1127 = vand.u32 %v187, 4294901760
        %v1128 = vsub.f32 %v187, %v1127
        %1129 = vmatpush1.msra.mxu0 %v1128
        %1130 = vmatprep.subr.mxu0 0.0
        %v1131 = vand.u32 %v188, 4294901760
        %v1132 = vsub.f32 %v188, %v1131
        %1133 = vmatpush1.msra.mxu0 %v1132
        %1134 = vmatprep.subr.mxu0 0.0
        %v1135 = vand.u32 %v189, 4294901760
        %v1136 = vsub.f32 %v189, %v1135
        %1137 = vmatpush1.msra.mxu0 %v1136
        %1138 = vmatprep.subr.mxu0 0.0
        %v1139 = vand.u32 %v190, 4294901760
        %v1140 = vsub.f32 %v190, %v1139
        %1141 = vmatpush1.msra.mxu0 %v1140
        %1142 = vmatprep.subr.mxu0 0.0
        %v1143 = vand.u32 %v191, 4294901760
        %v1144 = vsub.f32 %v191, %v1143
        %1145 = vmatpush1.msra.mxu0 %v1144
        %1146 = vmatprep.subr.mxu0 0.0
        %v1147 = vand.u32 %v192, 4294901760
        %v1148 = vsub.f32 %v192, %v1147
        %1149 = vmatpush1.msra.mxu0 %v1148
        %1150 = vmatprep.subr.mxu0 0.0
        %v1151 = vand.u32 %v193, 4294901760
        %v1152 = vsub.f32 %v193, %v1151
        %1153 = vmatpush1.msra.mxu0 %v1152
        %1154 = vmatprep.subr.mxu0 0.0
        %v1155 = vand.u32 %v194, 4294901760
        %v1156 = vsub.f32 %v194, %v1155
        %1157 = vmatpush1.msra.mxu0 %v1156
        %1158 = vmatprep.subr.mxu0 0.0
        %v1159 = vand.u32 %v195, 4294901760
        %v1160 = vsub.f32 %v195, %v1159
        %1161 = vmatpush1.msra.mxu0 %v1160
        %1162 = vmatprep.subr.mxu0 0.0
        %v1163 = vand.u32 %v196, 4294901760
        %v1164 = vsub.f32 %v196, %v1163
        %1165 = vmatpush1.msra.mxu0 %v1164
        %1166 = vmatprep.subr.mxu0 0.0
        %1167 = vmatpush1.msra.mxu0 0.0
        %1168 = vmatprep.subr.mxu0 0.0
        %1169 = vmatpush1.msra.mxu0 0.0
        %1170 = vmatprep.subr.mxu0 0.0
        %1171 = vmatpush1.msra.mxu0 0.0
        %1172 = vmatprep.subr.mxu0 0.0
        %1173 = vmatpush1.msra.mxu0 0.0
        %1174 = vmatprep.subr.mxu0 0.0
        %1175 = vmatpush1.msra.mxu0 0.0
        %1176 = vmatprep.subr.mxu0 0.0
        %1177 = vmatpush1.msra.mxu0 0.0
        %1178 = vmatprep.subr.mxu0 0.0
        %1179 = vmatpush1.msra.mxu0 0.0
        %1180 = vmatprep.subr.mxu0 0.0
        %1181 = vmatpush1.msra.mxu0 0.0
        %1182 = vmatprep.subr.mxu0 0.0
        %1183 = vmatpush1.msra.mxu0 0.0
        %1184 = vmatprep.subr.mxu0 0.0
        %1185 = vmatpush1.msra.mxu0 0.0
        %1186 = vmatprep.subr.mxu0 0.0
        %1187 = vmatpush1.msra.mxu0 0.0
        %1188 = vmatprep.subr.mxu0 0.0
        %1189 = vmatpush1.msra.mxu0 0.0
        %1190 = vmatprep.subr.mxu0 0.0
        %1191 = vmatpush1.msra.mxu0 0.0
        %1192 = vmatprep.subr.mxu0 0.0
        %1193 = vmatpush1.msra.mxu0 0.0
        %1194 = vmatprep.subr.mxu0 0.0
        %1195 = vmatpush1.msra.mxu0 0.0
        %1196 = vmatprep.subr.mxu0 0.0
        %1197 = vmatpush1.msra.mxu0 0.0
        %1198 = vmatprep.mubr.f32.mxu0 0.0
        %v1199 = vand.u32 %v180, 4294901760
        %v1200 = vsub.f32 %v180, %v1199
        %1201 = vmatmul.mubr.f32.gmra.mrb[0].mxu0 %v1200
        %v1202 = vpop.f32.mrb[0].mxu0
        %v1203 = vadd.f32 %v1099, %v1202
        %v1204 = vpop.f32.mrb[0].mxu0
        %1205 = vdwg.mxu0
        %1206 = vmatprep.subr.mxu0 0.0
        %v1207 = vand.u32 %v181, 4294901760
        %1208 = vmatpush1.msra.mxu0 %v1207
        %1209 = vmatprep.subr.mxu0 0.0
        %v1210 = vand.u32 %v182, 4294901760
        %1211 = vmatpush1.msra.mxu0 %v1210
        %1212 = vmatprep.subr.mxu0 0.0
        %v1213 = vand.u32 %v183, 4294901760
        %1214 = vmatpush1.msra.mxu0 %v1213
        %1215 = vmatprep.subr.mxu0 0.0
        %v1216 = vand.u32 %v184, 4294901760
        %1217 = vmatpush1.msra.mxu0 %v1216
        %1218 = vmatprep.subr.mxu0 0.0
        %v1219 = vand.u32 %v185, 4294901760
        %1220 = vmatpush1.msra.mxu0 %v1219
        %1221 = vmatprep.subr.mxu0 0.0
        %v1222 = vand.u32 %v186, 4294901760
        %1223 = vmatpush1.msra.mxu0 %v1222
        %1224 = vmatprep.subr.mxu0 0.0
        %v1225 = vand.u32 %v187, 4294901760
        %1226 = vmatpush1.msra.mxu0 %v1225
        %1227 = vmatprep.subr.mxu0 0.0
        %v1228 = vand.u32 %v188, 4294901760
        %1229 = vmatpush1.msra.mxu0 %v1228
        %1230 = vmatprep.subr.mxu0 0.0
        %v1231 = vand.u32 %v189, 4294901760
        %1232 = vmatpush1.msra.mxu0 %v1231
        %1233 = vmatprep.subr.mxu0 0.0
        %v1234 = vand.u32 %v190, 4294901760
        %1235 = vmatpush1.msra.mxu0 %v1234
        %1236 = vmatprep.subr.mxu0 0.0
        %v1237 = vand.u32 %v191, 4294901760
        %1238 = vmatpush1.msra.mxu0 %v1237
        %1239 = vmatprep.subr.mxu0 0.0
        %v1240 = vand.u32 %v192, 4294901760
        %1241 = vmatpush1.msra.mxu0 %v1240
        %1242 = vmatprep.subr.mxu0 0.0
        %v1243 = vand.u32 %v193, 4294901760
        %1244 = vmatpush1.msra.mxu0 %v1243
        %1245 = vmatprep.subr.mxu0 0.0
        %v1246 = vand.u32 %v194, 4294901760
        %1247 = vmatpush1.msra.mxu0 %v1246
        %1248 = vmatprep.subr.mxu0 0.0
        %v1249 = vand.u32 %v195, 4294901760
        %1250 = vmatpush1.msra.mxu0 %v1249
        %1251 = vmatprep.subr.mxu0 0.0
        %v1252 = vand.u32 %v196, 4294901760
        %1253 = vmatpush1.msra.mxu0 %v1252
        %1254 = vmatprep.subr.mxu0 0.0
        %1255 = vmatpush1.msra.mxu0 0.0
        %1256 = vmatprep.subr.mxu0 0.0
        %1257 = vmatpush1.msra.mxu0 0.0
        %1258 = vmatprep.subr.mxu0 0.0
        %1259 = vmatpush1.msra.mxu0 0.0
        %1260 = vmatprep.subr.mxu0 0.0
        %1261 = vmatpush1.msra.mxu0 0.0
        %1262 = vmatprep.subr.mxu0 0.0
        %1263 = vmatpush1.msra.mxu0 0.0
        %1264 = vmatprep.subr.mxu0 0.0
        %1265 = vmatpush1.msra.mxu0 0.0
        %1266 = vmatprep.subr.mxu0 0.0
        %1267 = vmatpush1.msra.mxu0 0.0
        %1268 = vmatprep.subr.mxu0 0.0
        %1269 = vmatpush1.msra.mxu0 0.0
        %1270 = vmatprep.subr.mxu0 0.0
        %1271 = vmatpush1.msra.mxu0 0.0
        %1272 = vmatprep.subr.mxu0 0.0
        %1273 = vmatpush1.msra.mxu0 0.0
        %1274 = vmatprep.subr.mxu0 0.0
        %1275 = vmatpush1.msra.mxu0 0.0
        %1276 = vmatprep.subr.mxu0 0.0
        %1277 = vmatpush1.msra.mxu0 0.0
        %1278 = vmatprep.subr.mxu0 0.0
        %1279 = vmatpush1.msra.mxu0 0.0
        %1280 = vmatprep.subr.mxu0 0.0
        %1281 = vmatpush1.msra.mxu0 0.0
        %1282 = vmatprep.subr.mxu0 0.0
        %1283 = vmatpush1.msra.mxu0 0.0
        %1284 = vmatprep.subr.mxu0 0.0
        %1285 = vmatpush1.msra.mxu0 0.0
        %1286 = vmatprep.mubr.f32.mxu0 0.0
        %v1287 = vand.u32 %v180, 4294901760
        %v1288 = vsub.f32 %v180, %v1287
        %v1289 = vand.u32 %v1288, 4294901760
        %1290 = vmatmul.mubr.f32.gmra.mrb[0].mxu0 %v1289
        %v1291 = vpop.f32.mrb[0].mxu0
        %v1292 = vadd.f32 %v1203, %v1291
        %v1293 = vpop.f32.mrb[0].mxu0
        %1294 = vdwg.mxu0
        %1295 = vmatprep.subr.mxu0 0.0
        %v1296 = vand.u32 %v181, 4294901760
        %v1297 = vsub.f32 %v181, %v1296
        %v1298 = vand.u32 %v1297, 4294901760
        %1299 = vmatpush1.msra.mxu0 %v1298
        %1300 = vmatprep.subr.mxu0 0.0
        %v1301 = vand.u32 %v182, 4294901760
        %v1302 = vsub.f32 %v182, %v1301
        %v1303 = vand.u32 %v1302, 4294901760
        %1304 = vmatpush1.msra.mxu0 %v1303
        %1305 = vmatprep.subr.mxu0 0.0
        %v1306 = vand.u32 %v183, 4294901760
        %v1307 = vsub.f32 %v183, %v1306
        %v1308 = vand.u32 %v1307, 4294901760
        %1309 = vmatpush1.msra.mxu0 %v1308
        %1310 = vmatprep.subr.mxu0 0.0
        %v1311 = vand.u32 %v184, 4294901760
        %v1312 = vsub.f32 %v184, %v1311
        %v1313 = vand.u32 %v1312, 4294901760
        %1314 = vmatpush1.msra.mxu0 %v1313
        %1315 = vmatprep.subr.mxu0 0.0
        %v1316 = vand.u32 %v185, 4294901760
        %v1317 = vsub.f32 %v185, %v1316
        %v1318 = vand.u32 %v1317, 4294901760
        %1319 = vmatpush1.msra.mxu0 %v1318
        %1320 = vmatprep.subr.mxu0 0.0
        %v1321 = vand.u32 %v186, 4294901760
        %v1322 = vsub.f32 %v186, %v1321
        %v1323 = vand.u32 %v1322, 4294901760
        %1324 = vmatpush1.msra.mxu0 %v1323
        %1325 = vmatprep.subr.mxu0 0.0
        %v1326 = vand.u32 %v187, 4294901760
        %v1327 = vsub.f32 %v187, %v1326
        %v1328 = vand.u32 %v1327, 4294901760
        %1329 = vmatpush1.msra.mxu0 %v1328
        %1330 = vmatprep.subr.mxu0 0.0
        %v1331 = vand.u32 %v188, 4294901760
        %v1332 = vsub.f32 %v188, %v1331
        %v1333 = vand.u32 %v1332, 4294901760
        %1334 = vmatpush1.msra.mxu0 %v1333
        %1335 = vmatprep.subr.mxu0 0.0
        %v1336 = vand.u32 %v189, 4294901760
        %v1337 = vsub.f32 %v189, %v1336
        %v1338 = vand.u32 %v1337, 4294901760
        %1339 = vmatpush1.msra.mxu0 %v1338
        %1340 = vmatprep.subr.mxu0 0.0
        %v1341 = vand.u32 %v190, 4294901760
        %v1342 = vsub.f32 %v190, %v1341
        %v1343 = vand.u32 %v1342, 4294901760
        %1344 = vmatpush1.msra.mxu0 %v1343
        %1345 = vmatprep.subr.mxu0 0.0
        %v1346 = vand.u32 %v191, 4294901760
        %v1347 = vsub.f32 %v191, %v1346
        %v1348 = vand.u32 %v1347, 4294901760
        %1349 = vmatpush1.msra.mxu0 %v1348
        %1350 = vmatprep.subr.mxu0 0.0
        %v1351 = vand.u32 %v192, 4294901760
        %v1352 = vsub.f32 %v192, %v1351
        %v1353 = vand.u32 %v1352, 4294901760
        %1354 = vmatpush1.msra.mxu0 %v1353
        %1355 = vmatprep.subr.mxu0 0.0
        %v1356 = vand.u32 %v193, 4294901760
        %v1357 = vsub.f32 %v193, %v1356
        %v1358 = vand.u32 %v1357, 4294901760
        %1359 = vmatpush1.msra.mxu0 %v1358
        %1360 = vmatprep.subr.mxu0 0.0
        %v1361 = vand.u32 %v194, 4294901760
        %v1362 = vsub.f32 %v194, %v1361
        %v1363 = vand.u32 %v1362, 4294901760
        %1364 = vmatpush1.msra.mxu0 %v1363
        %1365 = vmatprep.subr.mxu0 0.0
        %v1366 = vand.u32 %v195, 4294901760
        %v1367 = vsub.f32 %v195, %v1366
        %v1368 = vand.u32 %v1367, 4294901760
        %1369 = vmatpush1.msra.mxu0 %v1368
        %1370 = vmatprep.subr.mxu0 0.0
        %v1371 = vand.u32 %v196, 4294901760
        %v1372 = vsub.f32 %v196, %v1371
        %v1373 = vand.u32 %v1372, 4294901760
        %1374 = vmatpush1.msra.mxu0 %v1373
        %1375 = vmatprep.subr.mxu0 0.0
        %1376 = vmatpush1.msra.mxu0 0.0
        %1377 = vmatprep.subr.mxu0 0.0
        %1378 = vmatpush1.msra.mxu0 0.0
        %1379 = vmatprep.subr.mxu0 0.0
        %1380 = vmatpush1.msra.mxu0 0.0
        %1381 = vmatprep.subr.mxu0 0.0
        %1382 = vmatpush1.msra.mxu0 0.0
        %1383 = vmatprep.subr.mxu0 0.0
        %1384 = vmatpush1.msra.mxu0 0.0
        %1385 = vmatprep.subr.mxu0 0.0
        %1386 = vmatpush1.msra.mxu0 0.0
        %1387 = vmatprep.subr.mxu0 0.0
        %1388 = vmatpush1.msra.mxu0 0.0
        %1389 = vmatprep.subr.mxu0 0.0
        %1390 = vmatpush1.msra.mxu0 0.0
        %1391 = vmatprep.subr.mxu0 0.0
        %1392 = vmatpush1.msra.mxu0 0.0
        %1393 = vmatprep.subr.mxu0 0.0
        %1394 = vmatpush1.msra.mxu0 0.0
        %1395 = vmatprep.subr.mxu0 0.0
        %1396 = vmatpush1.msra.mxu0 0.0
        %1397 = vmatprep.subr.mxu0 0.0
        %1398 = vmatpush1.msra.mxu0 0.0
        %1399 = vmatprep.subr.mxu0 0.0
        %1400 = vmatpush1.msra.mxu0 0.0
        %1401 = vmatprep.subr.mxu0 0.0
        %1402 = vmatpush1.msra.mxu0 0.0
        %1403 = vmatprep.subr.mxu0 0.0
        %1404 = vmatpush1.msra.mxu0 0.0
        %1405 = vmatprep.subr.mxu0 0.0
        %1406 = vmatpush1.msra.mxu0 0.0
        %1407 = vmatprep.mubr.f32.mxu0 0.0
        %v1408 = vand.u32 %v180, 4294901760
        %1409 = vmatmul.mubr.f32.gmra.mrb[0].mxu0 %v1408
        %v1410 = vpop.f32.mrb[0].mxu0
        %v1411 = vadd.f32 %v1292, %v1410
        %v1412 = vpop.f32.mrb[0].mxu0
        %1413 = vdwg.mxu0
        %1414 = vmatprep.subr.mxu0 0.0
        %v1415 = vand.u32 %v181, 4294901760
        %1416 = vmatpush1.msra.mxu0 %v1415
        %1417 = vmatprep.subr.mxu0 0.0
        %v1418 = vand.u32 %v182, 4294901760
        %1419 = vmatpush1.msra.mxu0 %v1418
        %1420 = vmatprep.subr.mxu0 0.0
        %v1421 = vand.u32 %v183, 4294901760
        %1422 = vmatpush1.msra.mxu0 %v1421
        %1423 = vmatprep.subr.mxu0 0.0
        %v1424 = vand.u32 %v184, 4294901760
        %1425 = vmatpush1.msra.mxu0 %v1424
        %1426 = vmatprep.subr.mxu0 0.0
        %v1427 = vand.u32 %v185, 4294901760
        %1428 = vmatpush1.msra.mxu0 %v1427
        %1429 = vmatprep.subr.mxu0 0.0
        %v1430 = vand.u32 %v186, 4294901760
        %1431 = vmatpush1.msra.mxu0 %v1430
        %1432 = vmatprep.subr.mxu0 0.0
        %v1433 = vand.u32 %v187, 4294901760
        %1434 = vmatpush1.msra.mxu0 %v1433
        %1435 = vmatprep.subr.mxu0 0.0
        %v1436 = vand.u32 %v188, 4294901760
        %1437 = vmatpush1.msra.mxu0 %v1436
        %1438 = vmatprep.subr.mxu0 0.0
        %v1439 = vand.u32 %v189, 4294901760
        %1440 = vmatpush1.msra.mxu0 %v1439
        %1441 = vmatprep.subr.mxu0 0.0
        %v1442 = vand.u32 %v190, 4294901760
        %1443 = vmatpush1.msra.mxu0 %v1442
        %1444 = vmatprep.subr.mxu0 0.0
        %v1445 = vand.u32 %v191, 4294901760
        %1446 = vmatpush1.msra.mxu0 %v1445
        %1447 = vmatprep.subr.mxu0 0.0
        %v1448 = vand.u32 %v192, 4294901760
        %1449 = vmatpush1.msra.mxu0 %v1448
        %1450 = vmatprep.subr.mxu0 0.0
        %v1451 = vand.u32 %v193, 4294901760
        %1452 = vmatpush1.msra.mxu0 %v1451
        %1453 = vmatprep.subr.mxu0 0.0
        %v1454 = vand.u32 %v194, 4294901760
        %1455 = vmatpush1.msra.mxu0 %v1454
        %1456 = vmatprep.subr.mxu0 0.0
        %v1457 = vand.u32 %v195, 4294901760
        %1458 = vmatpush1.msra.mxu0 %v1457
        %1459 = vmatprep.subr.mxu0 0.0
        %v1460 = vand.u32 %v196, 4294901760
        %1461 = vmatpush1.msra.mxu0 %v1460
        %1462 = vmatprep.subr.mxu0 0.0
        %1463 = vmatpush1.msra.mxu0 0.0
        %1464 = vmatprep.subr.mxu0 0.0
        %1465 = vmatpush1.msra.mxu0 0.0
        %1466 = vmatprep.subr.mxu0 0.0
        %1467 = vmatpush1.msra.mxu0 0.0
        %1468 = vmatprep.subr.mxu0 0.0
        %1469 = vmatpush1.msra.mxu0 0.0
        %1470 = vmatprep.subr.mxu0 0.0
        %1471 = vmatpush1.msra.mxu0 0.0
        %1472 = vmatprep.subr.mxu0 0.0
        %1473 = vmatpush1.msra.mxu0 0.0
        %1474 = vmatprep.subr.mxu0 0.0
        %1475 = vmatpush1.msra.mxu0 0.0
        %1476 = vmatprep.subr.mxu0 0.0
        %1477 = vmatpush1.msra.mxu0 0.0
        %1478 = vmatprep.subr.mxu0 0.0
        %1479 = vmatpush1.msra.mxu0 0.0
        %1480 = vmatprep.subr.mxu0 0.0
        %1481 = vmatpush1.msra.mxu0 0.0
        %1482 = vmatprep.subr.mxu0 0.0
        %1483 = vmatpush1.msra.mxu0 0.0
        %1484 = vmatprep.subr.mxu0 0.0
        %1485 = vmatpush1.msra.mxu0 0.0
        %1486 = vmatprep.subr.mxu0 0.0
        %1487 = vmatpush1.msra.mxu0 0.0
        %1488 = vmatprep.subr.mxu0 0.0
        %1489 = vmatpush1.msra.mxu0 0.0
        %1490 = vmatprep.subr.mxu0 0.0
        %1491 = vmatpush1.msra.mxu0 0.0
        %1492 = vmatprep.subr.mxu0 0.0
        %1493 = vmatpush1.msra.mxu0 0.0
        %1494 = vmatprep.mubr.f32.mxu0 0.0
        %v1495 = vand.u32 %v180, 4294901760
        %1496 = vmatmul.mubr.f32.gmra.mrb[0].mxu0 %v1495
        %v1497 = vpop.f32.mrb[0].mxu0
        %v1498 = vadd.f32 %v1411, %v1497
        %v1499 = vpop.f32.mrb[0].mxu0
        %1500 = vdwg.mxu0
        %1501 = vset.pattern.permute.xlu0 5
        %1502 = vperm.xlu0 %1501, %v154
        %v1503 = vpop.permute.xlu0 %1502
        %vm1504 = vcmp.eq.s32.totalorder %v1503, %v156
        %v1505 = vsel %vm1504, 1, 0
        %v1506 = vcvt.s32.f32 %v1505
        %v1507 = vld [vmem:[#allocation2 + $0x100] sm:$0xff]
        %v1508 = vld [vmem:[#allocation2 + $0x108] sm:$0xff]
        %v1509 = vld [vmem:[#allocation2 + $0x110] sm:$0xff]
        %v1510 = vld [vmem:[#allocation2 + $0x118] sm:$0xff]
        %v1511 = vld [vmem:[#allocation2 + $0x120] sm:$0xff]
        %v1512 = vld [vmem:[#allocation2 + $0x128] sm:$0xff]
        %v1513 = vld [vmem:[#allocation2 + $0x130] sm:$0xff]
        %v1514 = vld [vmem:[#allocation2 + $0x138] sm:$0xff]
        %v1515 = vld [vmem:[#allocation2 + $0x140] sm:$0xff]
        %v1516 = vld [vmem:[#allocation2 + $0x148] sm:$0xff]
        %v1517 = vld [vmem:[#allocation2 + $0x150] sm:$0xff]
        %v1518 = vld [vmem:[#allocation2 + $0x158] sm:$0xff]
        %v1519 = vld [vmem:[#allocation2 + $0x160] sm:$0xff]
        %v1520 = vld [vmem:[#allocation2 + $0x168] sm:$0xff]
        %v1521 = vld [vmem:[#allocation2 + $0x170] sm:$0xff]
        %v1522 = vld [vmem:[#allocation2 + $0x178] sm:$0xff]
        %1523 = vmatprep.subr.mxu0 0.0
        %v1524 = vand.u32 %v1507, 4294901760
        %1525 = vmatpush1.msra.mxu0 %v1524
        %1526 = vmatprep.subr.mxu0 0.0
        %v1527 = vand.u32 %v1508, 4294901760
        %1528 = vmatpush1.msra.mxu0 %v1527
        %1529 = vmatprep.subr.mxu0 0.0
        %v1530 = vand.u32 %v1509, 4294901760
        %1531 = vmatpush1.msra.mxu0 %v1530
        %1532 = vmatprep.subr.mxu0 0.0
        %v1533 = vand.u32 %v1510, 4294901760
        %1534 = vmatpush1.msra.mxu0 %v1533
        %1535 = vmatprep.subr.mxu0 0.0
        %v1536 = vand.u32 %v1511, 4294901760
        %1537 = vmatpush1.msra.mxu0 %v1536
        %1538 = vmatprep.subr.mxu0 0.0
        %v1539 = vand.u32 %v1512, 4294901760
        %1540 = vmatpush1.msra.mxu0 %v1539
        %1541 = vmatprep.subr.mxu0 0.0
        %v1542 = vand.u32 %v1513, 4294901760
        %1543 = vmatpush1.msra.mxu0 %v1542
        %1544 = vmatprep.subr.mxu0 0.0
        %v1545 = vand.u32 %v1514, 4294901760
        %1546 = vmatpush1.msra.mxu0 %v1545
        %1547 = vmatprep.subr.mxu0 0.0
        %v1548 = vand.u32 %v1515, 4294901760
        %1549 = vmatpush1.msra.mxu0 %v1548
        %1550 = vmatprep.subr.mxu0 0.0
        %v1551 = vand.u32 %v1516, 4294901760
        %1552 = vmatpush1.msra.mxu0 %v1551
        %1553 = vmatprep.subr.mxu0 0.0
        %v1554 = vand.u32 %v1517, 4294901760
        %1555 = vmatpush1.msra.mxu0 %v1554
        %1556 = vmatprep.subr.mxu0 0.0
        %v1557 = vand.u32 %v1518, 4294901760
        %1558 = vmatpush1.msra.mxu0 %v1557
        %1559 = vmatprep.subr.mxu0 0.0
        %v1560 = vand.u32 %v1519, 4294901760
        %1561 = vmatpush1.msra.mxu0 %v1560
        %1562 = vmatprep.subr.mxu0 0.0
        %v1563 = vand.u32 %v1520, 4294901760
        %1564 = vmatpush1.msra.mxu0 %v1563
        %1565 = vmatprep.subr.mxu0 0.0
        %v1566 = vand.u32 %v1521, 4294901760
        %1567 = vmatpush1.msra.mxu0 %v1566
        %1568 = vmatprep.subr.mxu0 0.0
        %v1569 = vand.u32 %v1522, 4294901760
        %1570 = vmatpush1.msra.mxu0 %v1569
        %1571 = vmatprep.subr.mxu0 0.0
        %1572 = vmatpush1.msra.mxu0 0.0
        %1573 = vmatprep.subr.mxu0 0.0
        %1574 = vmatpush1.msra.mxu0 0.0
        %1575 = vmatprep.subr.mxu0 0.0
        %1576 = vmatpush1.msra.mxu0 0.0
        %1577 = vmatprep.subr.mxu0 0.0
        %1578 = vmatpush1.msra.mxu0 0.0
        %1579 = vmatprep.subr.mxu0 0.0
        %1580 = vmatpush1.msra.mxu0 0.0
        %1581 = vmatprep.subr.mxu0 0.0
        %1582 = vmatpush1.msra.mxu0 0.0
        %1583 = vmatprep.subr.mxu0 0.0
        %1584 = vmatpush1.msra.mxu0 0.0
        %1585 = vmatprep.subr.mxu0 0.0
        %1586 = vmatpush1.msra.mxu0 0.0
        %1587 = vmatprep.subr.mxu0 0.0
        %1588 = vmatpush1.msra.mxu0 0.0
        %1589 = vmatprep.subr.mxu0 0.0
        %1590 = vmatpush1.msra.mxu0 0.0
        %1591 = vmatprep.subr.mxu0 0.0
        %1592 = vmatpush1.msra.mxu0 0.0
        %1593 = vmatprep.subr.mxu0 0.0
        %1594 = vmatpush1.msra.mxu0 0.0
        %1595 = vmatprep.subr.mxu0 0.0
        %1596 = vmatpush1.msra.mxu0 0.0
        %1597 = vmatprep.subr.mxu0 0.0
        %1598 = vmatpush1.msra.mxu0 0.0
        %1599 = vmatprep.subr.mxu0 0.0
        %1600 = vmatpush1.msra.mxu0 0.0
        %1601 = vmatprep.subr.mxu0 0.0
        %1602 = vmatpush1.msra.mxu0 0.0
        %1603 = vmatprep.mubr.f32.mxu0 0.0
        %v1604 = vand.u32 %v1506, 4294901760
        %v1605 = vsub.f32 %v1506, %v1604
        %v1606 = vand.u32 %v1605, 4294901760
        %v1607 = vsub.f32 %v1605, %v1606
        %v1608 = vand.u32 %v1607, 4294901760
        %1609 = vmatmul.mubr.f32.gmra.mrb[0].mxu0 %v1608
        %v1610 = vpop.f32.mrb[0].mxu0
        %v1611 = vadd.f32 0.0, %v1610
        %v1612 = vpop.f32.mrb[0].mxu0
        %1613 = vdwg.mxu0
        %1614 = vmatprep.subr.mxu0 0.0
        %v1615 = vand.u32 %v1507, 4294901760
        %v1616 = vsub.f32 %v1507, %v1615
        %v1617 = vand.u32 %v1616, 4294901760
        %v1618 = vsub.f32 %v1616, %v1617
        %v1619 = vand.u32 %v1618, 4294901760
        %1620 = vmatpush1.msra.mxu0 %v1619
        %1621 = vmatprep.subr.mxu0 0.0
        %v1622 = vand.u32 %v1508, 4294901760
        %v1623 = vsub.f32 %v1508, %v1622
        %v1624 = vand.u32 %v1623, 4294901760
        %v1625 = vsub.f32 %v1623, %v1624
        %v1626 = vand.u32 %v1625, 4294901760
        %1627 = vmatpush1.msra.mxu0 %v1626
        %1628 = vmatprep.subr.mxu0 0.0
        %v1629 = vand.u32 %v1509, 4294901760
        %v1630 = vsub.f32 %v1509, %v1629
        %v1631 = vand.u32 %v1630, 4294901760
        %v1632 = vsub.f32 %v1630, %v1631
        %v1633 = vand.u32 %v1632, 4294901760
        %1634 = vmatpush1.msra.mxu0 %v1633
        %1635 = vmatprep.subr.mxu0 0.0
        %v1636 = vand.u32 %v1510, 4294901760
        %v1637 = vsub.f32 %v1510, %v1636
        %v1638 = vand.u32 %v1637, 4294901760
        %v1639 = vsub.f32 %v1637, %v1638
        %v1640 = vand.u32 %v1639, 4294901760
        %1641 = vmatpush1.msra.mxu0 %v1640
        %1642 = vmatprep.subr.mxu0 0.0
        %v1643 = vand.u32 %v1511, 4294901760
        %v1644 = vsub.f32 %v1511, %v1643
        %v1645 = vand.u32 %v1644, 4294901760
        %v1646 = vsub.f32 %v1644, %v1645
        %v1647 = vand.u32 %v1646, 4294901760
        %1648 = vmatpush1.msra.mxu0 %v1647
        %1649 = vmatprep.subr.mxu0 0.0
        %v1650 = vand.u32 %v1512, 4294901760
        %v1651 = vsub.f32 %v1512, %v1650
        %v1652 = vand.u32 %v1651, 4294901760
        %v1653 = vsub.f32 %v1651, %v1652
        %v1654 = vand.u32 %v1653, 4294901760
        %1655 = vmatpush1.msra.mxu0 %v1654
        %1656 = vmatprep.subr.mxu0 0.0
        %v1657 = vand.u32 %v1513, 4294901760
        %v1658 = vsub.f32 %v1513, %v1657
        %v1659 = vand.u32 %v1658, 4294901760
        %v1660 = vsub.f32 %v1658, %v1659
        %v1661 = vand.u32 %v1660, 4294901760
        %1662 = vmatpush1.msra.mxu0 %v1661
        %1663 = vmatprep.subr.mxu0 0.0
        %v1664 = vand.u32 %v1514, 4294901760
        %v1665 = vsub.f32 %v1514, %v1664
        %v1666 = vand.u32 %v1665, 4294901760
        %v1667 = vsub.f32 %v1665, %v1666
        %v1668 = vand.u32 %v1667, 4294901760
        %1669 = vmatpush1.msra.mxu0 %v1668
        %1670 = vmatprep.subr.mxu0 0.0
        %v1671 = vand.u32 %v1515, 4294901760
        %v1672 = vsub.f32 %v1515, %v1671
        %v1673 = vand.u32 %v1672, 4294901760
        %v1674 = vsub.f32 %v1672, %v1673
        %v1675 = vand.u32 %v1674, 4294901760
        %1676 = vmatpush1.msra.mxu0 %v1675
        %1677 = vmatprep.subr.mxu0 0.0
        %v1678 = vand.u32 %v1516, 4294901760
        %v1679 = vsub.f32 %v1516, %v1678
        %v1680 = vand.u32 %v1679, 4294901760
        %v1681 = vsub.f32 %v1679, %v1680
        %v1682 = vand.u32 %v1681, 4294901760
        %1683 = vmatpush1.msra.mxu0 %v1682
        %1684 = vmatprep.subr.mxu0 0.0
        %v1685 = vand.u32 %v1517, 4294901760
        %v1686 = vsub.f32 %v1517, %v1685
        %v1687 = vand.u32 %v1686, 4294901760
        %v1688 = vsub.f32 %v1686, %v1687
        %v1689 = vand.u32 %v1688, 4294901760
        %1690 = vmatpush1.msra.mxu0 %v1689
        %1691 = vmatprep.subr.mxu0 0.0
        %v1692 = vand.u32 %v1518, 4294901760
        %v1693 = vsub.f32 %v1518, %v1692
        %v1694 = vand.u32 %v1693, 4294901760
        %v1695 = vsub.f32 %v1693, %v1694
        %v1696 = vand.u32 %v1695, 4294901760
        %1697 = vmatpush1.msra.mxu0 %v1696
        %1698 = vmatprep.subr.mxu0 0.0
        %v1699 = vand.u32 %v1519, 4294901760
        %v1700 = vsub.f32 %v1519, %v1699
        %v1701 = vand.u32 %v1700, 4294901760
        %v1702 = vsub.f32 %v1700, %v1701
        %v1703 = vand.u32 %v1702, 4294901760
        %1704 = vmatpush1.msra.mxu0 %v1703
        %1705 = vmatprep.subr.mxu0 0.0
        %v1706 = vand.u32 %v1520, 4294901760
        %v1707 = vsub.f32 %v1520, %v1706
        %v1708 = vand.u32 %v1707, 4294901760
        %v1709 = vsub.f32 %v1707, %v1708
        %v1710 = vand.u32 %v1709, 4294901760
        %1711 = vmatpush1.msra.mxu0 %v1710
        %1712 = vmatprep.subr.mxu0 0.0
        %v1713 = vand.u32 %v1521, 4294901760
        %v1714 = vsub.f32 %v1521, %v1713
        %v1715 = vand.u32 %v1714, 4294901760
        %v1716 = vsub.f32 %v1714, %v1715
        %v1717 = vand.u32 %v1716, 4294901760
        %1718 = vmatpush1.msra.mxu0 %v1717
        %1719 = vmatprep.subr.mxu0 0.0
        %v1720 = vand.u32 %v1522, 4294901760
        %v1721 = vsub.f32 %v1522, %v1720
        %v1722 = vand.u32 %v1721, 4294901760
        %v1723 = vsub.f32 %v1721, %v1722
        %v1724 = vand.u32 %v1723, 4294901760
        %1725 = vmatpush1.msra.mxu0 %v1724
        %1726 = vmatprep.subr.mxu0 0.0
        %1727 = vmatpush1.msra.mxu0 0.0
        %1728 = vmatprep.subr.mxu0 0.0
        %1729 = vmatpush1.msra.mxu0 0.0
        %1730 = vmatprep.subr.mxu0 0.0
        %1731 = vmatpush1.msra.mxu0 0.0
        %1732 = vmatprep.subr.mxu0 0.0
        %1733 = vmatpush1.msra.mxu0 0.0
        %1734 = vmatprep.subr.mxu0 0.0
        %1735 = vmatpush1.msra.mxu0 0.0
        %1736 = vmatprep.subr.mxu0 0.0
        %1737 = vmatpush1.msra.mxu0 0.0
        %1738 = vmatprep.subr.mxu0 0.0
        %1739 = vmatpush1.msra.mxu0 0.0
        %1740 = vmatprep.subr.mxu0 0.0
        %1741 = vmatpush1.msra.mxu0 0.0
        %1742 = vmatprep.subr.mxu0 0.0
        %1743 = vmatpush1.msra.mxu0 0.0
        %1744 = vmatprep.subr.mxu0 0.0
        %1745 = vmatpush1.msra.mxu0 0.0
        %1746 = vmatprep.subr.mxu0 0.0
        %1747 = vmatpush1.msra.mxu0 0.0
        %1748 = vmatprep.subr.mxu0 0.0
        %1749 = vmatpush1.msra.mxu0 0.0
        %1750 = vmatprep.subr.mxu0 0.0
        %1751 = vmatpush1.msra.mxu0 0.0
        %1752 = vmatprep.subr.mxu0 0.0
        %1753 = vmatpush1.msra.mxu0 0.0
        %1754 = vmatprep.subr.mxu0 0.0
        %1755 = vmatpush1.msra.mxu0 0.0
        %1756 = vmatprep.subr.mxu0 0.0
        %1757 = vmatpush1.msra.mxu0 0.0
        %1758 = vmatprep.mubr.f32.mxu0 0.0
        %v1759 = vand.u32 %v1506, 4294901760
        %1760 = vmatmul.mubr.f32.gmra.mrb[0].mxu0 %v1759
        %v1761 = vpop.f32.mrb[0].mxu0
        %v1762 = vadd.f32 %v1611, %v1761
        %v1763 = vpop.f32.mrb[0].mxu0
        %1764 = vdwg.mxu0
        %1765 = vmatprep.subr.mxu0 0.0
        %v1766 = vand.u32 %v1507, 4294901760
        %v1767 = vsub.f32 %v1507, %v1766
        %1768 = vmatpush1.msra.mxu0 %v1767
        %1769 = vmatprep.subr.mxu0 0.0
        %v1770 = vand.u32 %v1508, 4294901760
        %v1771 = vsub.f32 %v1508, %v1770
        %1772 = vmatpush1.msra.mxu0 %v1771
        %1773 = vmatprep.subr.mxu0 0.0
        %v1774 = vand.u32 %v1509, 4294901760
        %v1775 = vsub.f32 %v1509, %v1774
        %1776 = vmatpush1.msra.mxu0 %v1775
        %1777 = vmatprep.subr.mxu0 0.0
        %v1778 = vand.u32 %v1510, 4294901760
        %v1779 = vsub.f32 %v1510, %v1778
        %1780 = vmatpush1.msra.mxu0 %v1779
        %1781 = vmatprep.subr.mxu0 0.0
        %v1782 = vand.u32 %v1511, 4294901760
        %v1783 = vsub.f32 %v1511, %v1782
        %1784 = vmatpush1.msra.mxu0 %v1783
        %1785 = vmatprep.subr.mxu0 0.0
        %v1786 = vand.u32 %v1512, 4294901760
        %v1787 = vsub.f32 %v1512, %v1786
        %1788 = vmatpush1.msra.mxu0 %v1787
        %1789 = vmatprep.subr.mxu0 0.0
        %v1790 = vand.u32 %v1513, 4294901760
        %v1791 = vsub.f32 %v1513, %v1790
        %1792 = vmatpush1.msra.mxu0 %v1791
        %1793 = vmatprep.subr.mxu0 0.0
        %v1794 = vand.u32 %v1514, 4294901760
        %v1795 = vsub.f32 %v1514, %v1794
        %1796 = vmatpush1.msra.mxu0 %v1795
        %1797 = vmatprep.subr.mxu0 0.0
        %v1798 = vand.u32 %v1515, 4294901760
        %v1799 = vsub.f32 %v1515, %v1798
        %1800 = vmatpush1.msra.mxu0 %v1799
        %1801 = vmatprep.subr.mxu0 0.0
        %v1802 = vand.u32 %v1516, 4294901760
        %v1803 = vsub.f32 %v1516, %v1802
        %1804 = vmatpush1.msra.mxu0 %v1803
        %1805 = vmatprep.subr.mxu0 0.0
        %v1806 = vand.u32 %v1517, 4294901760
        %v1807 = vsub.f32 %v1517, %v1806
        %1808 = vmatpush1.msra.mxu0 %v1807
        %1809 = vmatprep.subr.mxu0 0.0
        %v1810 = vand.u32 %v1518, 4294901760
        %v1811 = vsub.f32 %v1518, %v1810
        %1812 = vmatpush1.msra.mxu0 %v1811
        %1813 = vmatprep.subr.mxu0 0.0
        %v1814 = vand.u32 %v1519, 4294901760
        %v1815 = vsub.f32 %v1519, %v1814
        %1816 = vmatpush1.msra.mxu0 %v1815
        %1817 = vmatprep.subr.mxu0 0.0
        %v1818 = vand.u32 %v1520, 4294901760
        %v1819 = vsub.f32 %v1520, %v1818
        %1820 = vmatpush1.msra.mxu0 %v1819
        %1821 = vmatprep.subr.mxu0 0.0
        %v1822 = vand.u32 %v1521, 4294901760
        %v1823 = vsub.f32 %v1521, %v1822
        %1824 = vmatpush1.msra.mxu0 %v1823
        %1825 = vmatprep.subr.mxu0 0.0
        %v1826 = vand.u32 %v1522, 4294901760
        %v1827 = vsub.f32 %v1522, %v1826
        %1828 = vmatpush1.msra.mxu0 %v1827
        %1829 = vmatprep.subr.mxu0 0.0
        %1830 = vmatpush1.msra.mxu0 0.0
        %1831 = vmatprep.subr.mxu0 0.0
        %1832 = vmatpush1.msra.mxu0 0.0
        %1833 = vmatprep.subr.mxu0 0.0
        %1834 = vmatpush1.msra.mxu0 0.0
        %1835 = vmatprep.subr.mxu0 0.0
        %1836 = vmatpush1.msra.mxu0 0.0
        %1837 = vmatprep.subr.mxu0 0.0
        %1838 = vmatpush1.msra.mxu0 0.0
        %1839 = vmatprep.subr.mxu0 0.0
        %1840 = vmatpush1.msra.mxu0 0.0
        %1841 = vmatprep.subr.mxu0 0.0
        %1842 = vmatpush1.msra.mxu0 0.0
        %1843 = vmatprep.subr.mxu0 0.0
        %1844 = vmatpush1.msra.mxu0 0.0
        %1845 = vmatprep.subr.mxu0 0.0
        %1846 = vmatpush1.msra.mxu0 0.0
        %1847 = vmatprep.subr.mxu0 0.0
        %1848 = vmatpush1.msra.mxu0 0.0
        %1849 = vmatprep.subr.mxu0 0.0
        %1850 = vmatpush1.msra.mxu0 0.0
        %1851 = vmatprep.subr.mxu0 0.0
        %1852 = vmatpush1.msra.mxu0 0.0
        %1853 = vmatprep.subr.mxu0 0.0
        %1854 = vmatpush1.msra.mxu0 0.0
        %1855 = vmatprep.subr.mxu0 0.0
        %1856 = vmatpush1.msra.mxu0 0.0
        %1857 = vmatprep.subr.mxu0 0.0
        %1858 = vmatpush1.msra.mxu0 0.0
        %1859 = vmatprep.subr.mxu0 0.0
        %1860 = vmatpush1.msra.mxu0 0.0
        %1861 = vmatprep.mubr.f32.mxu0 0.0
        %v1862 = vand.u32 %v1506, 4294901760
        %v1863 = vsub.f32 %v1506, %v1862
        %1864 = vmatmul.mubr.f32.gmra.mrb[0].mxu0 %v1863
        %v1865 = vpop.f32.mrb[0].mxu0
        %v1866 = vadd.f32 %v1762, %v1865
        %v1867 = vpop.f32.mrb[0].mxu0
        %1868 = vdwg.mxu0
        %1869 = vmatprep.subr.mxu0 0.0
        %v1870 = vand.u32 %v1507, 4294901760
        %1871 = vmatpush1.msra.mxu0 %v1870
        %1872 = vmatprep.subr.mxu0 0.0
        %v1873 = vand.u32 %v1508, 4294901760
        %1874 = vmatpush1.msra.mxu0 %v1873
        %1875 = vmatprep.subr.mxu0 0.0
        %v1876 = vand.u32 %v1509, 4294901760
        %1877 = vmatpush1.msra.mxu0 %v1876
        %1878 = vmatprep.subr.mxu0 0.0
        %v1879 = vand.u32 %v1510, 4294901760
        %1880 = vmatpush1.msra.mxu0 %v1879
        %1881 = vmatprep.subr.mxu0 0.0
        %v1882 = vand.u32 %v1511, 4294901760
        %1883 = vmatpush1.msra.mxu0 %v1882
        %1884 = vmatprep.subr.mxu0 0.0
        %v1885 = vand.u32 %v1512, 4294901760
        %1886 = vmatpush1.msra.mxu0 %v1885
        %1887 = vmatprep.subr.mxu0 0.0
        %v1888 = vand.u32 %v1513, 4294901760
        %1889 = vmatpush1.msra.mxu0 %v1888
        %1890 = vmatprep.subr.mxu0 0.0
        %v1891 = vand.u32 %v1514, 4294901760
        %1892 = vmatpush1.msra.mxu0 %v1891
        %1893 = vmatprep.subr.mxu0 0.0
        %v1894 = vand.u32 %v1515, 4294901760
        %1895 = vmatpush1.msra.mxu0 %v1894
        %1896 = vmatprep.subr.mxu0 0.0
        %v1897 = vand.u32 %v1516, 4294901760
        %1898 = vmatpush1.msra.mxu0 %v1897
        %1899 = vmatprep.subr.mxu0 0.0
        %v1900 = vand.u32 %v1517, 4294901760
        %1901 = vmatpush1.msra.mxu0 %v1900
        %1902 = vmatprep.subr.mxu0 0.0
        %v1903 = vand.u32 %v1518, 4294901760
        %1904 = vmatpush1.msra.mxu0 %v1903
        %1905 = vmatprep.subr.mxu0 0.0
        %v1906 = vand.u32 %v1519, 4294901760
        %1907 = vmatpush1.msra.mxu0 %v1906
        %1908 = vmatprep.subr.mxu0 0.0
        %v1909 = vand.u32 %v1520, 4294901760
        %1910 = vmatpush1.msra.mxu0 %v1909
        %1911 = vmatprep.subr.mxu0 0.0
        %v1912 = vand.u32 %v1521, 4294901760
        %1913 = vmatpush1.msra.mxu0 %v1912
        %1914 = vmatprep.subr.mxu0 0.0
        %v1915 = vand.u32 %v1522, 4294901760
        %1916 = vmatpush1.msra.mxu0 %v1915
        %1917 = vmatprep.subr.mxu0 0.0
        %1918 = vmatpush1.msra.mxu0 0.0
        %1919 = vmatprep.subr.mxu0 0.0
        %1920 = vmatpush1.msra.mxu0 0.0
        %1921 = vmatprep.subr.mxu0 0.0
        %1922 = vmatpush1.msra.mxu0 0.0
        %1923 = vmatprep.subr.mxu0 0.0
        %1924 = vmatpush1.msra.mxu0 0.0
        %1925 = vmatprep.subr.mxu0 0.0
        %1926 = vmatpush1.msra.mxu0 0.0
        %1927 = vmatprep.subr.mxu0 0.0
        %1928 = vmatpush1.msra.mxu0 0.0
        %1929 = vmatprep.subr.mxu0 0.0
        %1930 = vmatpush1.msra.mxu0 0.0
        %1931 = vmatprep.subr.mxu0 0.0
        %1932 = vmatpush1.msra.mxu0 0.0
        %1933 = vmatprep.subr.mxu0 0.0
        %1934 = vmatpush1.msra.mxu0 0.0
        %1935 = vmatprep.subr.mxu0 0.0
        %1936 = vmatpush1.msra.mxu0 0.0
        %1937 = vmatprep.subr.mxu0 0.0
        %1938 = vmatpush1.msra.mxu0 0.0
        %1939 = vmatprep.subr.mxu0 0.0
        %1940 = vmatpush1.msra.mxu0 0.0
        %1941 = vmatprep.subr.mxu0 0.0
        %1942 = vmatpush1.msra.mxu0 0.0
        %1943 = vmatprep.subr.mxu0 0.0
        %1944 = vmatpush1.msra.mxu0 0.0
        %1945 = vmatprep.subr.mxu0 0.0
        %1946 = vmatpush1.msra.mxu0 0.0
        %1947 = vmatprep.subr.mxu0 0.0
        %1948 = vmatpush1.msra.mxu0 0.0
        %1949 = vmatprep.mubr.f32.mxu0 0.0
        %v1950 = vand.u32 %v1506, 4294901760
        %v1951 = vsub.f32 %v1506, %v1950
        %v1952 = vand.u32 %v1951, 4294901760
        %1953 = vmatmul.mubr.f32.gmra.mrb[0].mxu0 %v1952
        %v1954 = vpop.f32.mrb[0].mxu0
        %v1955 = vadd.f32 %v1866, %v1954
        %v1956 = vpop.f32.mrb[0].mxu0
        %1957 = vdwg.mxu0
        %1958 = vmatprep.subr.mxu0 0.0
        %v1959 = vand.u32 %v1507, 4294901760
        %v1960 = vsub.f32 %v1507, %v1959
        %v1961 = vand.u32 %v1960, 4294901760
        %1962 = vmatpush1.msra.mxu0 %v1961
        %1963 = vmatprep.subr.mxu0 0.0
        %v1964 = vand.u32 %v1508, 4294901760
        %v1965 = vsub.f32 %v1508, %v1964
        %v1966 = vand.u32 %v1965, 4294901760
        %1967 = vmatpush1.msra.mxu0 %v1966
        %1968 = vmatprep.subr.mxu0 0.0
        %v1969 = vand.u32 %v1509, 4294901760
        %v1970 = vsub.f32 %v1509, %v1969
        %v1971 = vand.u32 %v1970, 4294901760
        %1972 = vmatpush1.msra.mxu0 %v1971
        %1973 = vmatprep.subr.mxu0 0.0
        %v1974 = vand.u32 %v1510, 4294901760
        %v1975 = vsub.f32 %v1510, %v1974
        %v1976 = vand.u32 %v1975, 4294901760
        %1977 = vmatpush1.msra.mxu0 %v1976
        %1978 = vmatprep.subr.mxu0 0.0
        %v1979 = vand.u32 %v1511, 4294901760
        %v1980 = vsub.f32 %v1511, %v1979
        %v1981 = vand.u32 %v1980, 4294901760
        %1982 = vmatpush1.msra.mxu0 %v1981
        %1983 = vmatprep.subr.mxu0 0.0
        %v1984 = vand.u32 %v1512, 4294901760
        %v1985 = vsub.f32 %v1512, %v1984
        %v1986 = vand.u32 %v1985, 4294901760
        %1987 = vmatpush1.msra.mxu0 %v1986
        %1988 = vmatprep.subr.mxu0 0.0
        %v1989 = vand.u32 %v1513, 4294901760
        %v1990 = vsub.f32 %v1513, %v1989
        %v1991 = vand.u32 %v1990, 4294901760
        %1992 = vmatpush1.msra.mxu0 %v1991
        %1993 = vmatprep.subr.mxu0 0.0
        %v1994 = vand.u32 %v1514, 4294901760
        %v1995 = vsub.f32 %v1514, %v1994
        %v1996 = vand.u32 %v1995, 4294901760
        %1997 = vmatpush1.msra.mxu0 %v1996
        %1998 = vmatprep.subr.mxu0 0.0
        %v1999 = vand.u32 %v1515, 4294901760
        %v2000 = vsub.f32 %v1515, %v1999
        %v2001 = vand.u32 %v2000, 4294901760
        %2002 = vmatpush1.msra.mxu0 %v2001
        %2003 = vmatprep.subr.mxu0 0.0
        %v2004 = vand.u32 %v1516, 4294901760
        %v2005 = vsub.f32 %v1516, %v2004
        %v2006 = vand.u32 %v2005, 4294901760
        %2007 = vmatpush1.msra.mxu0 %v2006
        %2008 = vmatprep.subr.mxu0 0.0
        %v2009 = vand.u32 %v1517, 4294901760
        %v2010 = vsub.f32 %v1517, %v2009
        %v2011 = vand.u32 %v2010, 4294901760
        %2012 = vmatpush1.msra.mxu0 %v2011
        %2013 = vmatprep.subr.mxu0 0.0
        %v2014 = vand.u32 %v1518, 4294901760
        %v2015 = vsub.f32 %v1518, %v2014
        %v2016 = vand.u32 %v2015, 4294901760
        %2017 = vmatpush1.msra.mxu0 %v2016
        %2018 = vmatprep.subr.mxu0 0.0
        %v2019 = vand.u32 %v1519, 4294901760
        %v2020 = vsub.f32 %v1519, %v2019
        %v2021 = vand.u32 %v2020, 4294901760
        %2022 = vmatpush1.msra.mxu0 %v2021
        %2023 = vmatprep.subr.mxu0 0.0
        %v2024 = vand.u32 %v1520, 4294901760
        %v2025 = vsub.f32 %v1520, %v2024
        %v2026 = vand.u32 %v2025, 4294901760
        %2027 = vmatpush1.msra.mxu0 %v2026
        %2028 = vmatprep.subr.mxu0 0.0
        %v2029 = vand.u32 %v1521, 4294901760
        %v2030 = vsub.f32 %v1521, %v2029
        %v2031 = vand.u32 %v2030, 4294901760
        %2032 = vmatpush1.msra.mxu0 %v2031
        %2033 = vmatprep.subr.mxu0 0.0
        %v2034 = vand.u32 %v1522, 4294901760
        %v2035 = vsub.f32 %v1522, %v2034
        %v2036 = vand.u32 %v2035, 4294901760
        %2037 = vmatpush1.msra.mxu0 %v2036
        %2038 = vmatprep.subr.mxu0 0.0
        %2039 = vmatpush1.msra.mxu0 0.0
        %2040 = vmatprep.subr.mxu0 0.0
        %2041 = vmatpush1.msra.mxu0 0.0
        %2042 = vmatprep.subr.mxu0 0.0
        %2043 = vmatpush1.msra.mxu0 0.0
        %2044 = vmatprep.subr.mxu0 0.0
        %2045 = vmatpush1.msra.mxu0 0.0
        %2046 = vmatprep.subr.mxu0 0.0
        %2047 = vmatpush1.msra.mxu0 0.0
        %2048 = vmatprep.subr.mxu0 0.0
        %2049 = vmatpush1.msra.mxu0 0.0
        %2050 = vmatprep.subr.mxu0 0.0
        %2051 = vmatpush1.msra.mxu0 0.0
        %2052 = vmatprep.subr.mxu0 0.0
        %2053 = vmatpush1.msra.mxu0 0.0
        %2054 = vmatprep.subr.mxu0 0.0
        %2055 = vmatpush1.msra.mxu0 0.0
        %2056 = vmatprep.subr.mxu0 0.0
        %2057 = vmatpush1.msra.mxu0 0.0
        %2058 = vmatprep.subr.mxu0 0.0
        %2059 = vmatpush1.msra.mxu0 0.0
        %2060 = vmatprep.subr.mxu0 0.0
        %2061 = vmatpush1.msra.mxu0 0.0
        %2062 = vmatprep.subr.mxu0 0.0
        %2063 = vmatpush1.msra.mxu0 0.0
        %2064 = vmatprep.subr.mxu0 0.0
        %2065 = vmatpush1.msra.mxu0 0.0
        %2066 = vmatprep.subr.mxu0 0.0
        %2067 = vmatpush1.msra.mxu0 0.0
        %2068 = vmatprep.subr.mxu0 0.0
        %2069 = vmatpush1.msra.mxu0 0.0
        %2070 = vmatprep.mubr.f32.mxu0 0.0
        %v2071 = vand.u32 %v1506, 4294901760
        %2072 = vmatmul.mubr.f32.gmra.mrb[0].mxu0 %v2071
        %v2073 = vpop.f32.mrb[0].mxu0
        %v2074 = vadd.f32 %v1955, %v2073
        %v2075 = vpop.f32.mrb[0].mxu0
        %2076 = vdwg.mxu0
        %2077 = vmatprep.subr.mxu0 0.0
        %v2078 = vand.u32 %v1507, 4294901760
        %2079 = vmatpush1.msra.mxu0 %v2078
        %2080 = vmatprep.subr.mxu0 0.0
        %v2081 = vand.u32 %v1508, 4294901760
        %2082 = vmatpush1.msra.mxu0 %v2081
        %2083 = vmatprep.subr.mxu0 0.0
        %v2084 = vand.u32 %v1509, 4294901760
        %2085 = vmatpush1.msra.mxu0 %v2084
        %2086 = vmatprep.subr.mxu0 0.0
        %v2087 = vand.u32 %v1510, 4294901760
        %2088 = vmatpush1.msra.mxu0 %v2087
        %2089 = vmatprep.subr.mxu0 0.0
        %v2090 = vand.u32 %v1511, 4294901760
        %2091 = vmatpush1.msra.mxu0 %v2090
        %2092 = vmatprep.subr.mxu0 0.0
        %v2093 = vand.u32 %v1512, 4294901760
        %2094 = vmatpush1.msra.mxu0 %v2093
        %2095 = vmatprep.subr.mxu0 0.0
        %v2096 = vand.u32 %v1513, 4294901760
        %2097 = vmatpush1.msra.mxu0 %v2096
        %2098 = vmatprep.subr.mxu0 0.0
        %v2099 = vand.u32 %v1514, 4294901760
        %2100 = vmatpush1.msra.mxu0 %v2099
        %2101 = vmatprep.subr.mxu0 0.0
        %v2102 = vand.u32 %v1515, 4294901760
        %2103 = vmatpush1.msra.mxu0 %v2102
        %2104 = vmatprep.subr.mxu0 0.0
        %v2105 = vand.u32 %v1516, 4294901760
        %2106 = vmatpush1.msra.mxu0 %v2105
        %2107 = vmatprep.subr.mxu0 0.0
        %v2108 = vand.u32 %v1517, 4294901760
        %2109 = vmatpush1.msra.mxu0 %v2108
        %2110 = vmatprep.subr.mxu0 0.0
        %v2111 = vand.u32 %v1518, 4294901760
        %2112 = vmatpush1.msra.mxu0 %v2111
        %2113 = vmatprep.subr.mxu0 0.0
        %v2114 = vand.u32 %v1519, 4294901760
        %2115 = vmatpush1.msra.mxu0 %v2114
        %2116 = vmatprep.subr.mxu0 0.0
        %v2117 = vand.u32 %v1520, 4294901760
        %2118 = vmatpush1.msra.mxu0 %v2117
        %2119 = vmatprep.subr.mxu0 0.0
        %v2120 = vand.u32 %v1521, 4294901760
        %2121 = vmatpush1.msra.mxu0 %v2120
        %2122 = vmatprep.subr.mxu0 0.0
        %v2123 = vand.u32 %v1522, 4294901760
        %2124 = vmatpush1.msra.mxu0 %v2123
        %2125 = vmatprep.subr.mxu0 0.0
        %2126 = vmatpush1.msra.mxu0 0.0
        %2127 = vmatprep.subr.mxu0 0.0
        %2128 = vmatpush1.msra.mxu0 0.0
        %2129 = vmatprep.subr.mxu0 0.0
        %2130 = vmatpush1.msra.mxu0 0.0
        %2131 = vmatprep.subr.mxu0 0.0
        %2132 = vmatpush1.msra.mxu0 0.0
        %2133 = vmatprep.subr.mxu0 0.0
        %2134 = vmatpush1.msra.mxu0 0.0
        %2135 = vmatprep.subr.mxu0 0.0
        %2136 = vmatpush1.msra.mxu0 0.0
        %2137 = vmatprep.subr.mxu0 0.0
        %2138 = vmatpush1.msra.mxu0 0.0
        %2139 = vmatprep.subr.mxu0 0.0
        %2140 = vmatpush1.msra.mxu0 0.0
        %2141 = vmatprep.subr.mxu0 0.0
        %2142 = vmatpush1.msra.mxu0 0.0
        %2143 = vmatprep.subr.mxu0 0.0
        %2144 = vmatpush1.msra.mxu0 0.0
        %2145 = vmatprep.subr.mxu0 0.0
        %2146 = vmatpush1.msra.mxu0 0.0
        %2147 = vmatprep.subr.mxu0 0.0
        %2148 = vmatpush1.msra.mxu0 0.0
        %2149 = vmatprep.subr.mxu0 0.0
        %2150 = vmatpush1.msra.mxu0 0.0
        %2151 = vmatprep.subr.mxu0 0.0
        %2152 = vmatpush1.msra.mxu0 0.0
        %2153 = vmatprep.subr.mxu0 0.0
        %2154 = vmatpush1.msra.mxu0 0.0
        %2155 = vmatprep.subr.mxu0 0.0
        %2156 = vmatpush1.msra.mxu0 0.0
        %2157 = vmatprep.mubr.f32.mxu0 0.0
        %v2158 = vand.u32 %v1506, 4294901760
        %2159 = vmatmul.mubr.f32.gmra.mrb[0].mxu0 %v2158
        %v2160 = vpop.f32.mrb[0].mxu0
        %v2161 = vadd.f32 %v2074, %v2160
        %v2162 = vpop.f32.mrb[0].mxu0
        %2163 = vdwg.mxu0
        %v2164 = vadd.f32 %v1498, %v2161
        %2165 = vst [vmem:[%s149] sm:$0xff] %v2164
        %s2166 = sand.u32 %s72, 1
        %s2167 = scalar_lea.sflag [#allocation4], %s2166
        %s2168 = sand.u32 %s72, 1
        %s2169 = smul.addr %s2168, 8
        %s2170 = scalar_lea.vmem [#allocation5], %s2169
        // Predicated region
        $region33: #{tpu_custom_call.1} parent=27 // pred_check
          %p2171 = pneg %p82
        $region34: #{tpu_custom_call.1} parent=27 // pred_check_branch
          %2173 = sbr.rel (%p2171) target = $region36
        $region35: #{tpu_custom_call.1} parent=27 // pred_region
          %s2175 = ssub.s32 128, 128
          %2176 = vsyncadd %s2167, %s2175
          %s2177 = smul.addr %s17, 128
          %s2178 = scalar_lea.hbm %s2, %s2177
          %s2180 = sshll.u32 %s2170, 4
          %s2181 = int_to_ptr.vmem [resolvable:$true] %s2180
          %2183 = dma.vmem_to_hbm [thread:$0]  %s2181, 128, %s2178, %s2167
        $region36: #{tpu_custom_call.1} parent=27 // pred_fallthru
          _
      $region28: #{tpu_custom_call.1} parent=5 // pred_fallthru
        _
      %p2184 = scmp.le.s32.totalorder 2, %s12
      // Predicated region
      $region37: #{tpu_custom_call.1} parent=5 // pred_check
        %p2185 = pneg %p2184
      $region38: #{tpu_custom_call.1} parent=5 // pred_check_branch
        %2187 = sbr.rel (%p2185) target = $region40
      $region39: #{tpu_custom_call.1} parent=5 // pred_region
        %s2188 = ssub.s32 %s12, 2
        // Predicated region
        $region41: #{tpu_custom_call.1} parent=39 // pred_check
          %p2189 = pneg %p88
        $region42: #{tpu_custom_call.1} parent=39 // pred_check_branch
          %2191 = sbr.rel (%p2189) target = $region44
        $region43: #{tpu_custom_call.1} parent=39 // pred_region
          %s2192 = sand.u32 %s73, 1
          %s2193 = scalar_lea.sflag [#allocation4], %s2192
          %s2194 = sand.u32 %s73, 1
          %s2195 = smul.addr %s2194, 8
          %s2196 = scalar_lea.vmem [#allocation5], %s2195
          %2197 = dma.done %s2193, 128
        $region44: #{tpu_custom_call.1} parent=39 // pred_fallthru
          _
      $region40: #{tpu_custom_call.1} parent=5 // pred_fallthru
        _
    $region6: #{tpu_custom_call.1} parent=1 // loop_footer
      %s16 = sadd.s32 1, %s12
    $region7: #{tpu_custom_call.1} parent=1 // loop_footer_branch
      %11 = sbr.rel target = $region3
    $region8: #{tpu_custom_call.1} parent=1 // loop_exit
      _
    %2198 = vsyncpa [#allocation3], 1
    %s2199 = scalar_lea.sflag [#allocation3], 1
    %2200 = vsyncpa %s2199, 1
    %2201 = vsyncpa [#allocation4], 1
    %s2202 = scalar_lea.sflag [#allocation4], 1
    %2203 = vsyncpa %s2202, 1

</llo_original>
